<compile_context>
chip_gen: v7x
topology: tpu7x:2x2x1
jax: 0.10.0
libtpu: 0.0.40
codegen_flags: <defaults>
</compile_context>

<pallas_src>
import jax
import jax.numpy as jnp
import numpy as np
from jax.experimental import pallas as pl
from jax.experimental.pallas import tpu as pltpu

OBS_DIM = 16
ACTION_DIM = 8
LATENT_DIM = 4
HIDDEN = 750
BATCH = 2

OUT_WIDTH = ACTION_DIM + 2 * LATENT_DIM  # packed [u | mean | std]


def _round_up(x, m):
    return ((x + m - 1) // m) * m


H_PAD = _round_up(HIDDEN, 128)  # 768


def _vae_kernel(
    state_ref, action_ref, eps_ref,
    we1s_ref, we1a_ref, be1_ref,
    we2_ref, be2_ref,
    wml_ref, bml_ref,
    wd1s_ref, wd1z_ref, bd1_ref,
    wd2_ref, bd2_ref,
    wd3_ref, bd3_ref,
    out_ref,
):
    f32 = jnp.float32
    bf16 = jnp.bfloat16

    state = state_ref[...]
    action = action_ref[...]
    eps = eps_ref[...]

    # ----- encoder -----
    # h1 = relu(e1(cat([state, action], 1)))   (cat split into two matmuls)
    h1 = (
        jnp.dot(state.astype(bf16), we1s_ref[...], preferred_element_type=f32)
        + jnp.dot(action.astype(bf16), we1a_ref[...], preferred_element_type=f32)
        + be1_ref[...]
    )
    h1 = jnp.maximum(h1, 0.0)

    # h2 = relu(e2(h1))
    h2 = jnp.dot(h1.astype(bf16), we2_ref[...], preferred_element_type=f32) + be2_ref[...]
    h2 = jnp.maximum(h2, 0.0)
    h2b = h2.astype(bf16)

    # fused mean / log_std head: one K=768 matmul, split along lanes
    ml = jnp.dot(h2b, wml_ref[...], preferred_element_type=f32) + bml_ref[...]
    mean = ml[:, :LATENT_DIM]
    log_std = jnp.clip(ml[:, LATENT_DIM:], -4.0, 15.0)
    std = jnp.exp(log_std)

    # reparameterize: z = mean + std * eps
    z = mean + std * eps

    # ----- decoder -----
    # a1 = relu(d1(cat([state, z], 1)))
    a1 = (
        jnp.dot(state.astype(bf16), wd1s_ref[...], preferred_element_type=f32)
        + jnp.dot(z.astype(bf16), wd1z_ref[...], preferred_element_type=f32)
        + bd1_ref[...]
    )
    a1 = jnp.maximum(a1, 0.0)

    # a2 = relu(d2(a1))
    a2 = jnp.dot(a1.astype(bf16), wd2_ref[...], preferred_element_type=f32) + bd2_ref[...]
    a2 = jnp.maximum(a2, 0.0)

    # u = tanh(d3(a2))
    u = jnp.tanh(
        jnp.dot(a2.astype(bf16), wd3_ref[...], preferred_element_type=f32) + bd3_ref[...]
    )

    # single lane-contiguous output slab: [u | mean | std]
    out_ref[...] = jnp.concatenate([u, mean, std], axis=-1)


def vae_policy_forward(state, action, eps, params):
    """Fused VAEPolicy forward.

    state:  (B, obs_dim)  f32
    action: (B, act_dim)  f32
    eps:    (B, latent)   f32  -- standard-normal noise (reparameterization)
    Returns (u, mean, std) each f32.
    """
    B = state.shape[0]
    # Batch tile: at least one sublane group (8); stream 128-row tiles for
    # large batches while weights stay resident across grid steps.
    TB = 128 if B >= 128 else _round_up(B, 8)
    B_pad = _round_up(B, TB)

    def pad_rows(x):
        if x.shape[0] == B_pad:
            return x
        return jnp.pad(x, ((0, B_pad - x.shape[0]), (0, 0)))

    state_p = pad_rows(state)
    action_p = pad_rows(action)
    eps_p = pad_rows(eps)

    grid = (B_pad // TB,)

    def row_spec(width):
        return pl.BlockSpec((TB, width), lambda i: (i, 0))

    def const_spec(arr):
        # Weight block is the full array; constant index_map -> stays resident
        # in VMEM across all grid steps (no per-tile re-DMA).
        return pl.BlockSpec(arr.shape, lambda i: (0, 0))

    weight_order = (
        "we1s", "we1a", "be1",
        "we2", "be2",
        "wml", "bml",
        "wd1s", "wd1z", "bd1",
        "wd2", "bd2",
        "wd3", "bd3",
    )
    weight_args = tuple(params[k] for k in weight_order)

    in_specs = [row_spec(OBS_DIM), row_spec(ACTION_DIM), row_spec(LATENT_DIM)]
    in_specs += [const_spec(w) for w in weight_args]

    out_spec = pl.BlockSpec((TB, OUT_WIDTH), lambda i: (i, 0))
    out_shape = jax.ShapeDtypeStruct((B_pad, OUT_WIDTH), jnp.float32)

    packed = pl.pallas_call(
        _vae_kernel,
        out_shape=out_shape,
        grid=grid,
        in_specs=in_specs,
        out_specs=out_spec,
        compiler_params=pltpu.CompilerParams(
            dimension_semantics=("parallel",),
            vmem_limit_bytes=32 << 20,
        ),
    )(state_p, action_p, eps_p, *weight_args)

    u = packed[:B, :ACTION_DIM]
    mean = packed[:B, ACTION_DIM:ACTION_DIM + LATENT_DIM]
    std = packed[:B, ACTION_DIM + LATENT_DIM:]
    return u, mean, std


def init_params(key):
    """Init mimicking PyTorch Linear default (uniform +-1/sqrt(fan_in)), then
    packed for the kernel:
      * weights transposed to (in, out) so the kernel does x @ W,
      * cat-weights split (e1 -> we1s/we1a, d1 -> wd1s/wd1z),
      * mean/log_std heads fused into wml/bml,
      * hidden axis zero-padded 750 -> 768,
      * weights cast to bfloat16, biases kept float32.
    The zero padding is exact: padded hidden units have zero weight/bias on
    both sides, so results are identical to the 750-wide model.
    """
    def lin(key, fan_in, fan_out):
        kw, kb = jax.random.split(key)
        bound = 1.0 / np.sqrt(fan_in)
        w = jax.random.uniform(kw, (fan_in, fan_out), jnp.float32, -bound, bound)
        b = jax.random.uniform(kb, (1, fan_out), jnp.float32, -bound, bound)
        return w, b

    keys = jax.random.split(key, 7)
    we1, be1 = lin(keys[0], OBS_DIM + ACTION_DIM, HIDDEN)
    we2, be2 = lin(keys[1], HIDDEN, HIDDEN)
    wm, bm = lin(keys[2], HIDDEN, LATENT_DIM)
    wls, bls = lin(keys[3], HIDDEN, LATENT_DIM)
    wd1, bd1 = lin(keys[4], OBS_DIM + LATENT_DIM, HIDDEN)
    wd2, bd2 = lin(keys[5], HIDDEN, HIDDEN)
    wd3, bd3 = lin(keys[6], HIDDEN, ACTION_DIM)

    def padw(w, rows, cols):
        return jnp.pad(w, ((0, rows - w.shape[0]), (0, cols - w.shape[1])))

    bf16 = jnp.bfloat16
    wml = jnp.concatenate([wm, wls], axis=1)   # (750, 2*latent)
    bml = jnp.concatenate([bm, bls], axis=1)   # (1, 2*latent)

    return {
        "we1s": padw(we1[:OBS_DIM], OBS_DIM, H_PAD).astype(bf16),
        "we1a": padw(we1[OBS_DIM:], ACTION_DIM, H_PAD).astype(bf16),
        "be1":  padw(be1, 1, H_PAD),
        "we2":  padw(we2, H_PAD, H_PAD).astype(bf16),
        "be2":  padw(be2, 1, H_PAD),
        "wml":  padw(wml, H_PAD, 2 * LATENT_DIM).astype(bf16),
        "bml":  bml,
        "wd1s": padw(wd1[:OBS_DIM], OBS_DIM, H_PAD).astype(bf16),
        "wd1z": padw(wd1[OBS_DIM:], LATENT_DIM, H_PAD).astype(bf16),
        "bd1":  padw(bd1, 1, H_PAD),
        "wd2":  padw(wd2, H_PAD, H_PAD).astype(bf16),
        "bd2":  padw(bd2, 1, H_PAD),
        "wd3":  padw(wd3, H_PAD, ACTION_DIM).astype(bf16),
        "bd3":  bd3,
    }


def reference_forward(state, action, eps, p):
    """Plain-JAX reference following the same bf16-weight / f32-accumulate
    numerics as the kernel (for a tight correctness check)."""
    bf16 = jnp.bfloat16
    f32 = jnp.float32

    def dot(a, w):
        return jnp.dot(a.astype(bf16), w, preferred_element_type=f32)

    h1 = jax.nn.relu(dot(state, p["we1s"]) + dot(action, p["we1a"]) + p["be1"])
    h2 = jax.nn.relu(dot(h1, p["we2"]) + p["be2"])
    ml = dot(h2, p["wml"]) + p["bml"]
    mean = ml[:, :LATENT_DIM]
    log_std = jnp.clip(ml[:, LATENT_DIM:], -4.0, 15.0)
    std = jnp.exp(log_std)
    z = mean + std * eps
    a1 = jax.nn.relu(dot(state, p["wd1s"]) + dot(z, p["wd1z"]) + p["bd1"])
    a2 = jax.nn.relu(dot(a1, p["wd2"]) + p["bd2"])
    u = jnp.tanh(dot(a2, p["wd3"]) + p["bd3"])
    return u, mean, std


if __name__ == "__main__":
    key = jax.random.PRNGKey(0)
    k_param, k_state, k_action, k_eps = jax.random.split(key, 4)

    params = init_params(k_param)
    state = jax.random.normal(k_state, (BATCH, OBS_DIM), jnp.float32)
    action = jax.random.normal(k_action, (BATCH, ACTION_DIM), jnp.float32)
    # torch version draws np.random.normal at forward time; here the noise is
    # an explicit deterministic input.
    eps = jax.random.normal(k_eps, (BATCH, LATENT_DIM), jnp.float32)

    u, mean, std = vae_policy_forward(state, action, eps, params)
    jax.block_until_ready((u, mean, std))

    u_ref, mean_ref, std_ref = reference_forward(state, action, eps, params)
    np.testing.assert_allclose(np.asarray(u), np.asarray(u_ref), rtol=1e-2, atol=1e-2)
    np.testing.assert_allclose(np.asarray(mean), np.asarray(mean_ref), rtol=1e-2, atol=1e-2)
    np.testing.assert_allclose(np.asarray(std), np.asarray(std_ref), rtol=1e-2, atol=1e-2)

    print("KERNEL_OK")
</pallas_src>

<mosaic_0001>
module attributes {stable_mosaic.version = 11 : i64} {
  func.func @_vae_kernel(%arg0: i32, %arg1: memref<8x16xf32, #tpu.memory_space<vmem>>, %arg2: memref<8x8xf32, #tpu.memory_space<vmem>>, %arg3: memref<8x4xf32, #tpu.memory_space<vmem>>, %arg4: memref<16x768xbf16, #tpu.memory_space<vmem>>, %arg5: memref<8x768xbf16, #tpu.memory_space<vmem>>, %arg6: memref<1x768xf32, #tpu.memory_space<vmem>>, %arg7: memref<768x768xbf16, #tpu.memory_space<vmem>>, %arg8: memref<1x768xf32, #tpu.memory_space<vmem>>, %arg9: memref<768x8xbf16, #tpu.memory_space<vmem>>, %arg10: memref<1x8xf32, #tpu.memory_space<vmem>>, %arg11: memref<16x768xbf16, #tpu.memory_space<vmem>>, %arg12: memref<4x768xbf16, #tpu.memory_space<vmem>>, %arg13: memref<1x768xf32, #tpu.memory_space<vmem>>, %arg14: memref<768x768xbf16, #tpu.memory_space<vmem>>, %arg15: memref<1x768xf32, #tpu.memory_space<vmem>>, %arg16: memref<768x8xbf16, #tpu.memory_space<vmem>>, %arg17: memref<1x8xf32, #tpu.memory_space<vmem>>, %arg18: memref<8x16xf32, #tpu.memory_space<vmem>>) attributes {dimension_semantics = [#tpu.dimension_semantics<parallel>], iteration_bounds = array<i64: 1>, scalar_prefetch = 0 : i64, scratch_operands = 0 : i64, tpu.core_type = #tpu.core_type<tc>, window_params = [{transform_indices = @transform_0, window_bounds = array<i64: 8, 16>}, {transform_indices = @transform_1, window_bounds = array<i64: 8, 8>}, {transform_indices = @transform_2, window_bounds = array<i64: 8, 4>}, {pipeline_mode = #tpu.pipeline_mode<synchronous>, transform_indices = @transform_3, window_bounds = array<i64: 16, 768>}, {pipeline_mode = #tpu.pipeline_mode<synchronous>, transform_indices = @transform_4, window_bounds = array<i64: 8, 768>}, {pipeline_mode = #tpu.pipeline_mode<synchronous>, transform_indices = @transform_5, window_bounds = array<i64: 1, 768>}, {pipeline_mode = #tpu.pipeline_mode<synchronous>, transform_indices = @transform_6, window_bounds = array<i64: 768, 768>}, {pipeline_mode = #tpu.pipeline_mode<synchronous>, transform_indices = @transform_7, window_bounds = array<i64: 1, 768>}, {pipeline_mode = #tpu.pipeline_mode<synchronous>, transform_indices = @transform_8, window_bounds = array<i64: 768, 8>}, {pipeline_mode = #tpu.pipeline_mode<synchronous>, transform_indices = @transform_9, window_bounds = array<i64: 1, 8>}, {pipeline_mode = #tpu.pipeline_mode<synchronous>, transform_indices = @transform_10, window_bounds = array<i64: 16, 768>}, {pipeline_mode = #tpu.pipeline_mode<synchronous>, transform_indices = @transform_11, window_bounds = array<i64: 4, 768>}, {pipeline_mode = #tpu.pipeline_mode<synchronous>, transform_indices = @transform_12, window_bounds = array<i64: 1, 768>}, {pipeline_mode = #tpu.pipeline_mode<synchronous>, transform_indices = @transform_13, window_bounds = array<i64: 768, 768>}, {pipeline_mode = #tpu.pipeline_mode<synchronous>, transform_indices = @transform_14, window_bounds = array<i64: 1, 768>}, {pipeline_mode = #tpu.pipeline_mode<synchronous>, transform_indices = @transform_15, window_bounds = array<i64: 768, 8>}, {pipeline_mode = #tpu.pipeline_mode<synchronous>, transform_indices = @transform_16, window_bounds = array<i64: 1, 8>}, {transform_indices = @transform_17, window_bounds = array<i64: 8, 16>}]} {
    %c0 = arith.constant 0 : index
    %c0_0 = arith.constant 0 : index
    %0 = vector.load %arg1[%c0, %c0_0] : memref<8x16xf32, #tpu.memory_space<vmem>>, vector<8x16xf32>
    %c0_1 = arith.constant 0 : index
    %c0_2 = arith.constant 0 : index
    %1 = vector.load %arg2[%c0_1, %c0_2] : memref<8x8xf32, #tpu.memory_space<vmem>>, vector<8x8xf32>
    %c0_3 = arith.constant 0 : index
    %c0_4 = arith.constant 0 : index
    %2 = vector.load %arg3[%c0_3, %c0_4] : memref<8x4xf32, #tpu.memory_space<vmem>>, vector<8x4xf32>
    %3 = arith.truncf %0 : vector<8x16xf32> to vector<8x16xbf16>
    %c0_5 = arith.constant 0 : index
    %c0_6 = arith.constant 0 : index
    %4 = vector.load %arg4[%c0_5, %c0_6] : memref<16x768xbf16, #tpu.memory_space<vmem>>, vector<16x768xbf16>
    %cst = arith.constant dense<0.000000e+00> : vector<8x768xf32>
    %5 = tpu.matmul %3, %4, %cst {dimension_numbers = #tpu.dot_dimension_numbers<[1], [0], [0], [1], [0, 0, 1, 1], [], []>} : vector<8x16xbf16>, vector<16x768xbf16>, vector<8x768xf32> -> vector<8x768xf32>
    %6 = arith.truncf %1 : vector<8x8xf32> to vector<8x8xbf16>
    %c0_7 = arith.constant 0 : index
    %c0_8 = arith.constant 0 : index
    %7 = vector.load %arg5[%c0_7, %c0_8] : memref<8x768xbf16, #tpu.memory_space<vmem>>, vector<8x768xbf16>
    %cst_9 = arith.constant dense<0.000000e+00> : vector<8x768xf32>
    %8 = tpu.matmul %6, %7, %cst_9 {dimension_numbers = #tpu.dot_dimension_numbers<[1], [0], [0], [1], [0, 0, 1, 1], [], []>} : vector<8x8xbf16>, vector<8x768xbf16>, vector<8x768xf32> -> vector<8x768xf32>
    %9 = arith.addf %5, %8 : vector<8x768xf32>
    %c0_10 = arith.constant 0 : index
    %c0_11 = arith.constant 0 : index
    %10 = vector.load %arg6[%c0_10, %c0_11] : memref<1x768xf32, #tpu.memory_space<vmem>>, vector<1x768xf32>
    %11 = vector.broadcast %10 : vector<1x768xf32> to vector<8x768xf32>
    %12 = arith.addf %9, %11 : vector<8x768xf32>
    %cst_12 = arith.constant 0.000000e+00 : f32
    %13 = vector.broadcast %cst_12 : f32 to vector<8x768xf32>
    %14 = arith.maximumf %12, %13 : vector<8x768xf32>
    %15 = arith.truncf %14 : vector<8x768xf32> to vector<8x768xbf16>
    %c0_13 = arith.constant 0 : index
    %c0_14 = arith.constant 0 : index
    %16 = vector.load %arg7[%c0_13, %c0_14] : memref<768x768xbf16, #tpu.memory_space<vmem>>, vector<768x768xbf16>
    %cst_15 = arith.constant dense<0.000000e+00> : vector<8x768xf32>
    %17 = tpu.matmul %15, %16, %cst_15 {dimension_numbers = #tpu.dot_dimension_numbers<[1], [0], [0], [1], [0, 0, 1, 1], [], []>} : vector<8x768xbf16>, vector<768x768xbf16>, vector<8x768xf32> -> vector<8x768xf32>
    %c0_16 = arith.constant 0 : index
    %c0_17 = arith.constant 0 : index
    %18 = vector.load %arg8[%c0_16, %c0_17] : memref<1x768xf32, #tpu.memory_space<vmem>>, vector<1x768xf32>
    %19 = vector.broadcast %18 : vector<1x768xf32> to vector<8x768xf32>
    %20 = arith.addf %17, %19 : vector<8x768xf32>
    %cst_18 = arith.constant 0.000000e+00 : f32
    %21 = vector.broadcast %cst_18 : f32 to vector<8x768xf32>
    %22 = arith.maximumf %20, %21 : vector<8x768xf32>
    %23 = arith.truncf %22 : vector<8x768xf32> to vector<8x768xbf16>
    %c0_19 = arith.constant 0 : index
    %c0_20 = arith.constant 0 : index
    %24 = vector.load %arg9[%c0_19, %c0_20] : memref<768x8xbf16, #tpu.memory_space<vmem>>, vector<768x8xbf16>
    %cst_21 = arith.constant dense<0.000000e+00> : vector<8x8xf32>
    %25 = tpu.matmul %23, %24, %cst_21 {dimension_numbers = #tpu.dot_dimension_numbers<[1], [0], [0], [1], [0, 0, 1, 1], [], []>} : vector<8x768xbf16>, vector<768x8xbf16>, vector<8x8xf32> -> vector<8x8xf32>
    %c0_22 = arith.constant 0 : index
    %c0_23 = arith.constant 0 : index
    %26 = vector.load %arg10[%c0_22, %c0_23] : memref<1x8xf32, #tpu.memory_space<vmem>>, vector<1x8xf32>
    %27 = vector.broadcast %26 : vector<1x8xf32> to vector<8x8xf32>
    %28 = arith.addf %25, %27 : vector<8x8xf32>
    %29 = vector.extract_strided_slice %28 {offsets = [0, 0], sizes = [8, 4], strides = [1, 1]} : vector<8x8xf32> to vector<8x4xf32>
    %30 = vector.extract_strided_slice %28 {offsets = [0, 4], sizes = [8, 4], strides = [1, 1]} : vector<8x8xf32> to vector<8x4xf32>
    %cst_24 = arith.constant -4.000000e+00 : f32
    %cst_25 = arith.constant 1.500000e+01 : f32
    %31 = vector.broadcast %cst_24 : f32 to vector<8x4xf32>
    %32 = arith.maximumf %31, %30 : vector<8x4xf32>
    %33 = vector.broadcast %cst_25 : f32 to vector<8x4xf32>
    %34 = arith.minimumf %33, %32 : vector<8x4xf32>
    %35 = math.exp %34 : vector<8x4xf32>
    %36 = arith.mulf %35, %2 : vector<8x4xf32>
    %37 = arith.addf %29, %36 : vector<8x4xf32>
    %38 = arith.truncf %0 : vector<8x16xf32> to vector<8x16xbf16>
    %c0_26 = arith.constant 0 : index
    %c0_27 = arith.constant 0 : index
    %39 = vector.load %arg11[%c0_26, %c0_27] : memref<16x768xbf16, #tpu.memory_space<vmem>>, vector<16x768xbf16>
    %cst_28 = arith.constant dense<0.000000e+00> : vector<8x768xf32>
    %40 = tpu.matmul %38, %39, %cst_28 {dimension_numbers = #tpu.dot_dimension_numbers<[1], [0], [0], [1], [0, 0, 1, 1], [], []>} : vector<8x16xbf16>, vector<16x768xbf16>, vector<8x768xf32> -> vector<8x768xf32>
    %41 = arith.truncf %37 : vector<8x4xf32> to vector<8x4xbf16>
    %c0_29 = arith.constant 0 : index
    %c0_30 = arith.constant 0 : index
    %42 = vector.load %arg12[%c0_29, %c0_30] : memref<4x768xbf16, #tpu.memory_space<vmem>>, vector<4x768xbf16>
    %cst_31 = arith.constant dense<0.000000e+00> : vector<8x768xf32>
    %43 = tpu.matmul %41, %42, %cst_31 {dimension_numbers = #tpu.dot_dimension_numbers<[1], [0], [0], [1], [0, 0, 1, 1], [], []>} : vector<8x4xbf16>, vector<4x768xbf16>, vector<8x768xf32> -> vector<8x768xf32>
    %44 = arith.addf %40, %43 : vector<8x768xf32>
    %c0_32 = arith.constant 0 : index
    %c0_33 = arith.constant 0 : index
    %45 = vector.load %arg13[%c0_32, %c0_33] : memref<1x768xf32, #tpu.memory_space<vmem>>, vector<1x768xf32>
    %46 = vector.broadcast %45 : vector<1x768xf32> to vector<8x768xf32>
    %47 = arith.addf %44, %46 : vector<8x768xf32>
    %cst_34 = arith.constant 0.000000e+00 : f32
    %48 = vector.broadcast %cst_34 : f32 to vector<8x768xf32>
    %49 = arith.maximumf %47, %48 : vector<8x768xf32>
    %50 = arith.truncf %49 : vector<8x768xf32> to vector<8x768xbf16>
    %c0_35 = arith.constant 0 : index
    %c0_36 = arith.constant 0 : index
    %51 = vector.load %arg14[%c0_35, %c0_36] : memref<768x768xbf16, #tpu.memory_space<vmem>>, vector<768x768xbf16>
    %cst_37 = arith.constant dense<0.000000e+00> : vector<8x768xf32>
    %52 = tpu.matmul %50, %51, %cst_37 {dimension_numbers = #tpu.dot_dimension_numbers<[1], [0], [0], [1], [0, 0, 1, 1], [], []>} : vector<8x768xbf16>, vector<768x768xbf16>, vector<8x768xf32> -> vector<8x768xf32>
    %c0_38 = arith.constant 0 : index
    %c0_39 = arith.constant 0 : index
    %53 = vector.load %arg15[%c0_38, %c0_39] : memref<1x768xf32, #tpu.memory_space<vmem>>, vector<1x768xf32>
    %54 = vector.broadcast %53 : vector<1x768xf32> to vector<8x768xf32>
    %55 = arith.addf %52, %54 : vector<8x768xf32>
    %cst_40 = arith.constant 0.000000e+00 : f32
    %56 = vector.broadcast %cst_40 : f32 to vector<8x768xf32>
    %57 = arith.maximumf %55, %56 : vector<8x768xf32>
    %58 = arith.truncf %57 : vector<8x768xf32> to vector<8x768xbf16>
    %c0_41 = arith.constant 0 : index
    %c0_42 = arith.constant 0 : index
    %59 = vector.load %arg16[%c0_41, %c0_42] : memref<768x8xbf16, #tpu.memory_space<vmem>>, vector<768x8xbf16>
    %cst_43 = arith.constant dense<0.000000e+00> : vector<8x8xf32>
    %60 = tpu.matmul %58, %59, %cst_43 {dimension_numbers = #tpu.dot_dimension_numbers<[1], [0], [0], [1], [0, 0, 1, 1], [], []>} : vector<8x768xbf16>, vector<768x8xbf16>, vector<8x8xf32> -> vector<8x8xf32>
    %c0_44 = arith.constant 0 : index
    %c0_45 = arith.constant 0 : index
    %61 = vector.load %arg17[%c0_44, %c0_45] : memref<1x8xf32, #tpu.memory_space<vmem>>, vector<1x8xf32>
    %62 = vector.broadcast %61 : vector<1x8xf32> to vector<8x8xf32>
    %63 = arith.addf %60, %62 : vector<8x8xf32>
    %64 = math.tanh %63 : vector<8x8xf32>
    %65 = tpu.concatenate %64, %29, %35 in 1 : vector<8x8xf32>, vector<8x4xf32>, vector<8x4xf32> -> vector<8x16xf32>
    %c0_46 = arith.constant 0 : index
    %c0_47 = arith.constant 0 : index
    %66 = vector.load %arg18[%c0_46, %c0_47] : memref<8x16xf32, #tpu.memory_space<vmem>>, vector<8x16xf32>
    tpu.vector_store %arg18[%c0_46, %c0_47], %65 {strides = array<i32>} : memref<8x16xf32, #tpu.memory_space<vmem>>, vector<8x16xf32>,
    return
  }
  func.func @transform_0(%arg0: i32) -> (i32, i32) {
    %c0_i32 = arith.constant 0 : i32
    %c0_i32_0 = arith.constant 0 : i32
    return %arg0, %c0_i32 : i32, i32
  }
  func.func @transform_1(%arg0: i32) -> (i32, i32) {
    %c0_i32 = arith.constant 0 : i32
    %c0_i32_0 = arith.constant 0 : i32
    return %arg0, %c0_i32 : i32, i32
  }
  func.func @transform_2(%arg0: i32) -> (i32, i32) {
    %c0_i32 = arith.constant 0 : i32
    %c0_i32_0 = arith.constant 0 : i32
    return %arg0, %c0_i32 : i32, i32
  }
  func.func @transform_3(%arg0: i32) -> (i32, i32) {
    %c0_i32 = arith.constant 0 : i32
    %c0_i32_0 = arith.constant 0 : i32
    %c0_i32_1 = arith.constant 0 : i32
    return %c0_i32, %c0_i32_0 : i32, i32
  }
  func.func @transform_4(%arg0: i32) -> (i32, i32) {
    %c0_i32 = arith.constant 0 : i32
    %c0_i32_0 = arith.constant 0 : i32
    %c0_i32_1 = arith.constant 0 : i32
    return %c0_i32, %c0_i32_0 : i32, i32
  }
  func.func @transform_5(%arg0: i32) -> (i32, i32) {
    %c0_i32 = arith.constant 0 : i32
    %c0_i32_0 = arith.constant 0 : i32
    %c0_i32_1 = arith.constant 0 : i32
    return %c0_i32, %c0_i32_0 : i32, i32
  }
  func.func @transform_6(%arg0: i32) -> (i32, i32) {
    %c0_i32 = arith.constant 0 : i32
    %c0_i32_0 = arith.constant 0 : i32
    %c0_i32_1 = arith.constant 0 : i32
    return %c0_i32, %c0_i32_0 : i32, i32
  }
  func.func @transform_7(%arg0: i32) -> (i32, i32) {
    %c0_i32 = arith.constant 0 : i32
    %c0_i32_0 = arith.constant 0 : i32
    %c0_i32_1 = arith.constant 0 : i32
    return %c0_i32, %c0_i32_0 : i32, i32
  }
  func.func @transform_8(%arg0: i32) -> (i32, i32) {
    %c0_i32 = arith.constant 0 : i32
    %c0_i32_0 = arith.constant 0 : i32
    %c0_i32_1 = arith.constant 0 : i32
    return %c0_i32, %c0_i32_0 : i32, i32
  }
  func.func @transform_9(%arg0: i32) -> (i32, i32) {
    %c0_i32 = arith.constant 0 : i32
    %c0_i32_0 = arith.constant 0 : i32
    %c0_i32_1 = arith.constant 0 : i32
    return %c0_i32, %c0_i32_0 : i32, i32
  }
  func.func @transform_10(%arg0: i32) -> (i32, i32) {
    %c0_i32 = arith.constant 0 : i32
    %c0_i32_0 = arith.constant 0 : i32
    %c0_i32_1 = arith.constant 0 : i32
    return %c0_i32, %c0_i32_0 : i32, i32
  }
  func.func @transform_11(%arg0: i32) -> (i32, i32) {
    %c0_i32 = arith.constant 0 : i32
    %c0_i32_0 = arith.constant 0 : i32
    %c0_i32_1 = arith.constant 0 : i32
    return %c0_i32, %c0_i32_0 : i32, i32
  }
  func.func @transform_12(%arg0: i32) -> (i32, i32) {
    %c0_i32 = arith.constant 0 : i32
    %c0_i32_0 = arith.constant 0 : i32
    %c0_i32_1 = arith.constant 0 : i32
    return %c0_i32, %c0_i32_0 : i32, i32
  }
  func.func @transform_13(%arg0: i32) -> (i32, i32) {
    %c0_i32 = arith.constant 0 : i32
    %c0_i32_0 = arith.constant 0 : i32
    %c0_i32_1 = arith.constant 0 : i32
    return %c0_i32, %c0_i32_0 : i32, i32
  }
  func.func @transform_14(%arg0: i32) -> (i32, i32) {
    %c0_i32 = arith.constant 0 : i32
    %c0_i32_0 = arith.constant 0 : i32
    %c0_i32_1 = arith.constant 0 : i32
    return %c0_i32, %c0_i32_0 : i32, i32
  }
  func.func @transform_15(%arg0: i32) -> (i32, i32) {
    %c0_i32 = arith.constant 0 : i32
    %c0_i32_0 = arith.constant 0 : i32
    %c0_i32_1 = arith.constant 0 : i32
    return %c0_i32, %c0_i32_0 : i32, i32
  }
  func.func @transform_16(%arg0: i32) -> (i32, i32) {
    %c0_i32 = arith.constant 0 : i32
    %c0_i32_0 = arith.constant 0 : i32
    %c0_i32_1 = arith.constant 0 : i32
    return %c0_i32, %c0_i32_0 : i32, i32
  }
  func.func @transform_17(%arg0: i32) -> (i32, i32) {
    %c0_i32 = arith.constant 0 : i32
    %c0_i32_0 = arith.constant 0 : i32
    return %arg0, %c0_i32 : i32, i32
  }
}

</mosaic_0001>

<llo_original>
// kernel: tpu_custom_call.1
$region0: #{tpu_custom_call.1}
  #allocation0 [shape = 'u32[]', space=smem, size = 0x4, offset = 0x4, fixed_abs, tag = 'smem constant byte address 0x4 - core index']
  #allocation1 [shape = 'u32[144,128]{1,0:T(1,128)}', space=vmem, size = 0x12000, scoped, tag = 'internal scratch']
  %s0 = inlined_call_operand.hbm [shape: f32[8,16], index: 0, kind: input, shape index: {}]
  %s1 = inlined_call_operand.hbm [shape: f32[8,8], index: 1, kind: input, shape index: {}]
  %s2 = inlined_call_operand.vmem [shape: f32[8,4], index: 2, kind: input, shape index: {}]
  %s3 = inlined_call_operand.hbm [shape: bf16[16,768], index: 3, kind: input, shape index: {}]
  %s4 = inlined_call_operand.hbm [shape: bf16[8,768], index: 4, kind: input, shape index: {}]
  %s5 = inlined_call_operand.hbm [shape: f32[1,768], index: 5, kind: input, shape index: {}]
  %s6 = inlined_call_operand.hbm [shape: bf16[768,768], index: 6, kind: input, shape index: {}]
  %s7 = inlined_call_operand.hbm [shape: f32[1,768], index: 7, kind: input, shape index: {}]
  %s8 = inlined_call_operand.vmem [shape: bf16[768,8], index: 8, kind: input, shape index: {}]
  %s9 = inlined_call_operand.hbm [shape: f32[1,8], index: 9, kind: input, shape index: {}]
  %s10 = inlined_call_operand.hbm [shape: bf16[16,768], index: 10, kind: input, shape index: {}]
  %s11 = inlined_call_operand.hbm [shape: bf16[4,768], index: 11, kind: input, shape index: {}]
  %s12 = inlined_call_operand.hbm [shape: f32[1,768], index: 12, kind: input, shape index: {}]
  %s13 = inlined_call_operand.hbm [shape: bf16[768,768], index: 13, kind: input, shape index: {}]
  %s14 = inlined_call_operand.hbm [shape: f32[1,768], index: 14, kind: input, shape index: {}]
  %s15 = inlined_call_operand.vmem [shape: bf16[768,8], index: 15, kind: input, shape index: {}]
  %s16 = inlined_call_operand.hbm [shape: f32[1,8], index: 16, kind: input, shape index: {}]
  %s17 = inlined_call_operand.hbm [shape: f32[8,16], index: 17, kind: output, shape index: {}]
  %s18 = sld [smem:[#allocation0]]
  $region134: #{tpu_custom_call.1} parent=0
    _
  %s20 = ssub.s32 1, %s18
  %s21 = scalar_select 0, %s20, %s18
  $region1: #{tpu_custom_call.1} parent=0
    #allocation2 [shape = 'u8[4096]{0}', space=vmem, size = 0x1000, scoped, tag = 'input window, operand 0, single buffered']
    #allocation3 [shape = 's32[1]{0}', space=sflag, size = 0x4, scoped, tag = 'scoped memory for tpu_custom_call.1']
    #allocation4 [shape = 's32[1]{0}', space=sflag, size = 0x4, scoped, tag = 'scoped memory for tpu_custom_call.1']
    #allocation5 [shape = 'u8[4096]{0}', space=vmem, size = 0x1000, scoped, tag = 'input window, operand 1, single buffered']
    #allocation6 [shape = 's32[1]{0}', space=sflag, size = 0x4, scoped, tag = 'scoped memory for tpu_custom_call.1']
    #allocation7 [shape = 'u8[24576]{0}', space=vmem, size = 0x6000, scoped, tag = 'input window, operand 3, single buffered']
    #allocation8 [shape = 'u8[12288]{0}', space=vmem, size = 0x3000, scoped, tag = 'input window, operand 4, single buffered']
    #allocation9 [shape = 's32[1]{0}', space=sflag, size = 0x4, scoped, tag = 'scoped memory for tpu_custom_call.1']
    #allocation10 [shape = 'u8[3072]{0}', space=vmem, size = 0xc00, scoped, tag = 'input window, operand 5, single buffered']
    #allocation11 [shape = 'u8[1179648]{0}', space=vmem, size = 0x120000, scoped, tag = 'input window, operand 6, single buffered']
    #allocation12 [shape = 's32[1]{0}', space=sflag, size = 0x4, scoped, tag = 'scoped memory for tpu_custom_call.1']
    #allocation13 [shape = 'u8[3072]{0}', space=vmem, size = 0xc00, scoped, tag = 'input window, operand 7, single buffered']
    #allocation14 [shape = 'u8[512]{0}', space=vmem, size = 0x400, scoped, tag = 'input window, operand 9, single buffered']
    #allocation15 [shape = 's32[1]{0}', space=sflag, size = 0x4, scoped, tag = 'scoped memory for tpu_custom_call.1']
    #allocation16 [shape = 'u8[24576]{0}', space=vmem, size = 0x6000, scoped, tag = 'input window, operand 10, single buffered']
    #allocation17 [shape = 'u8[6144]{0}', space=vmem, size = 0x1800, scoped, tag = 'input window, operand 11, single buffered']
    #allocation18 [shape = 's32[1]{0}', space=sflag, size = 0x4, scoped, tag = 'scoped memory for tpu_custom_call.1']
    #allocation19 [shape = 'u8[3072]{0}', space=vmem, size = 0xc00, scoped, tag = 'input window, operand 12, single buffered']
    #allocation20 [shape = 'u8[1179648]{0}', space=vmem, size = 0x120000, scoped, tag = 'input window, operand 13, single buffered']
    #allocation21 [shape = 's32[1]{0}', space=sflag, size = 0x4, scoped, tag = 'scoped memory for tpu_custom_call.1']
    #allocation22 [shape = 'u8[3072]{0}', space=vmem, size = 0xc00, scoped, tag = 'input window, operand 14, single buffered']
    #allocation23 [shape = 'u8[512]{0}', space=vmem, size = 0x400, scoped, tag = 'input window, operand 16, single buffered']
    #allocation24 [shape = 's32[1]{0}', space=sflag, size = 0x4, scoped, tag = 'scoped memory for tpu_custom_call.1']
    #allocation25 [shape = 'u8[4096]{0}', space=vmem, size = 0x1000, scoped, tag = 'output window, operand 0, single buffered']
    %22 = vsyncpa [#allocation3], 0
    %23 = vsyncpa [#allocation6], 0
    %24 = vsyncpa [#allocation9], 0
    %25 = vsyncpa [#allocation12], 0
    %26 = vsyncpa [#allocation15], 0
    %27 = vsyncpa [#allocation18], 0
    %28 = vsyncpa [#allocation21], 0
    %29 = vsyncpa [#allocation24], 0
    %30 = vsyncpa [#allocation4], 0
    // Predicated region
    $region2: #{tpu_custom_call.1} parent=1 // pred_check
      _
    $region3: #{tpu_custom_call.1} parent=1 // pred_check_branch
      %32 = sbr.rel (0) target = $region5
    $region4: #{tpu_custom_call.1} parent=1 // pred_region
      %s34 = ssub.s32 128, 128
      %35 = vsyncadd [#allocation3], %s34
      %s37 = sshll.u32 [#allocation2], 4
      %s38 = int_to_ptr.vmem [resolvable:$true] %s37
      %40 = dma.hbm_to_vmem [thread:$0]  %s0, 128, %s38, [#allocation3]
    $region5: #{tpu_custom_call.1} parent=1 // pred_fallthru
      _
    // Predicated region
    $region6: #{tpu_custom_call.1} parent=1 // pred_check
      _
    $region7: #{tpu_custom_call.1} parent=1 // pred_check_branch
      %42 = sbr.rel (0) target = $region9
    $region8: #{tpu_custom_call.1} parent=1 // pred_region
      %s44 = ssub.s32 128, 128
      %45 = vsyncadd [#allocation6], %s44
      %s47 = sshll.u32 [#allocation5], 4
      %s48 = int_to_ptr.vmem [resolvable:$true] %s47
      %50 = dma.hbm_to_vmem [thread:$0]  %s1, 128, %s48, [#allocation6]
    $region9: #{tpu_custom_call.1} parent=1 // pred_fallthru
      _
    // Predicated region
    $region10: #{tpu_custom_call.1} parent=1 // pred_check
      _
    $region11: #{tpu_custom_call.1} parent=1 // pred_check_branch
      %52 = sbr.rel (0) target = $region13
    $region12: #{tpu_custom_call.1} parent=1 // pred_region
      _
    $region13: #{tpu_custom_call.1} parent=1 // pred_fallthru
      _
    // Predicated region
    $region14: #{tpu_custom_call.1} parent=1 // pred_check
      _
    $region15: #{tpu_custom_call.1} parent=1 // pred_check_branch
      %54 = sbr.rel (0) target = $region17
    $region16: #{tpu_custom_call.1} parent=1 // pred_region
      %s56 = ssub.s32 768, 768
      %57 = vsyncadd [#allocation6], %s56
      %s58 = sshll.u32 [#allocation7], 4
      %s59 = int_to_ptr.vmem [resolvable:$true] %s58
      %64 = dma.hbm_to_vmem [thread:$0]  %s3, 768, %s59, [#allocation6], 384, 384, 24
    $region17: #{tpu_custom_call.1} parent=1 // pred_fallthru
      _
    // Predicated region
    $region18: #{tpu_custom_call.1} parent=1 // pred_check
      _
    $region19: #{tpu_custom_call.1} parent=1 // pred_check_branch
      %66 = sbr.rel (0) target = $region21
    $region20: #{tpu_custom_call.1} parent=1 // pred_region
      %s68 = ssub.s32 384, 384
      %69 = vsyncadd [#allocation9], %s68
      %s71 = sshll.u32 [#allocation8], 4
      %s72 = int_to_ptr.vmem [resolvable:$true] %s71
      %74 = dma.hbm_to_vmem [thread:$0]  %s4, 384, %s72, [#allocation9]
    $region21: #{tpu_custom_call.1} parent=1 // pred_fallthru
      _
    // Predicated region
    $region22: #{tpu_custom_call.1} parent=1 // pred_check
      _
    $region23: #{tpu_custom_call.1} parent=1 // pred_check_branch
      %76 = sbr.rel (0) target = $region25
    $region24: #{tpu_custom_call.1} parent=1 // pred_region
      %s78 = ssub.s32 96, 96
      %79 = vsyncadd [#allocation9], %s78
      %s81 = sshll.u32 [#allocation10], 4
      %s82 = int_to_ptr.vmem [resolvable:$true] %s81
      %84 = dma.hbm_to_vmem [thread:$0]  %s5, 96, %s82, [#allocation9]
    $region25: #{tpu_custom_call.1} parent=1 // pred_fallthru
      _
    // Predicated region
    $region26: #{tpu_custom_call.1} parent=1 // pred_check
      _
    $region27: #{tpu_custom_call.1} parent=1 // pred_check_branch
      %86 = sbr.rel (0) target = $region29
    $region28: #{tpu_custom_call.1} parent=1 // pred_region
      %s88 = ssub.s32 36864, 36864
      %89 = vsyncadd [#allocation12], %s88
      %s90 = sshll.u32 [#allocation11], 4
      %s91 = int_to_ptr.vmem [resolvable:$true] %s90
      %96 = dma.hbm_to_vmem [thread:$0]  %s6, 36864, %s91, [#allocation12], 384, 384, 24
    $region29: #{tpu_custom_call.1} parent=1 // pred_fallthru
      _
    // Predicated region
    $region30: #{tpu_custom_call.1} parent=1 // pred_check
      _
    $region31: #{tpu_custom_call.1} parent=1 // pred_check_branch
      %98 = sbr.rel (0) target = $region33
    $region32: #{tpu_custom_call.1} parent=1 // pred_region
      %s100 = ssub.s32 96, 96
      %101 = vsyncadd [#allocation12], %s100
      %s103 = sshll.u32 [#allocation13], 4
      %s104 = int_to_ptr.vmem [resolvable:$true] %s103
      %106 = dma.hbm_to_vmem [thread:$0]  %s7, 96, %s104, [#allocation12]
    $region33: #{tpu_custom_call.1} parent=1 // pred_fallthru
      _
    // Predicated region
    $region34: #{tpu_custom_call.1} parent=1 // pred_check
      _
    $region35: #{tpu_custom_call.1} parent=1 // pred_check_branch
      %108 = sbr.rel (0) target = $region37
    $region36: #{tpu_custom_call.1} parent=1 // pred_region
      _
    $region37: #{tpu_custom_call.1} parent=1 // pred_fallthru
      _
    // Predicated region
    $region38: #{tpu_custom_call.1} parent=1 // pred_check
      _
    $region39: #{tpu_custom_call.1} parent=1 // pred_check_branch
      %110 = sbr.rel (0) target = $region41
    $region40: #{tpu_custom_call.1} parent=1 // pred_region
      %s112 = ssub.s32 16, 16
      %113 = vsyncadd [#allocation15], %s112
      %s115 = sshll.u32 [#allocation14], 4
      %s116 = int_to_ptr.vmem [resolvable:$true] %s115
      %118 = dma.hbm_to_vmem [thread:$0]  %s9, 16, %s116, [#allocation15]
    $region41: #{tpu_custom_call.1} parent=1 // pred_fallthru
      _
    // Predicated region
    $region42: #{tpu_custom_call.1} parent=1 // pred_check
      _
    $region43: #{tpu_custom_call.1} parent=1 // pred_check_branch
      %120 = sbr.rel (0) target = $region45
    $region44: #{tpu_custom_call.1} parent=1 // pred_region
      %s122 = ssub.s32 768, 768
      %123 = vsyncadd [#allocation15], %s122
      %s124 = sshll.u32 [#allocation16], 4
      %s125 = int_to_ptr.vmem [resolvable:$true] %s124
      %130 = dma.hbm_to_vmem [thread:$0]  %s10, 768, %s125, [#allocation15], 384, 384, 24
    $region45: #{tpu_custom_call.1} parent=1 // pred_fallthru
      _
    // Predicated region
    $region46: #{tpu_custom_call.1} parent=1 // pred_check
      _
    $region47: #{tpu_custom_call.1} parent=1 // pred_check_branch
      %132 = sbr.rel (0) target = $region49
    $region48: #{tpu_custom_call.1} parent=1 // pred_region
      %s134 = ssub.s32 192, 192
      %135 = vsyncadd [#allocation18], %s134
      %s137 = sshll.u32 [#allocation17], 4
      %s138 = int_to_ptr.vmem [resolvable:$true] %s137
      %140 = dma.hbm_to_vmem [thread:$0]  %s11, 192, %s138, [#allocation18]
    $region49: #{tpu_custom_call.1} parent=1 // pred_fallthru
      _
    // Predicated region
    $region50: #{tpu_custom_call.1} parent=1 // pred_check
      _
    $region51: #{tpu_custom_call.1} parent=1 // pred_check_branch
      %142 = sbr.rel (0) target = $region53
    $region52: #{tpu_custom_call.1} parent=1 // pred_region
      %s144 = ssub.s32 96, 96
      %145 = vsyncadd [#allocation18], %s144
      %s147 = sshll.u32 [#allocation19], 4
      %s148 = int_to_ptr.vmem [resolvable:$true] %s147
      %150 = dma.hbm_to_vmem [thread:$0]  %s12, 96, %s148, [#allocation18]
    $region53: #{tpu_custom_call.1} parent=1 // pred_fallthru
      _
    // Predicated region
    $region54: #{tpu_custom_call.1} parent=1 // pred_check
      _
    $region55: #{tpu_custom_call.1} parent=1 // pred_check_branch
      %152 = sbr.rel (0) target = $region57
    $region56: #{tpu_custom_call.1} parent=1 // pred_region
      %s154 = ssub.s32 36864, 36864
      %155 = vsyncadd [#allocation21], %s154
      %s156 = sshll.u32 [#allocation20], 4
      %s157 = int_to_ptr.vmem [resolvable:$true] %s156
      %162 = dma.hbm_to_vmem [thread:$0]  %s13, 36864, %s157, [#allocation21], 384, 384, 24
    $region57: #{tpu_custom_call.1} parent=1 // pred_fallthru
      _
    // Predicated region
    $region58: #{tpu_custom_call.1} parent=1 // pred_check
      _
    $region59: #{tpu_custom_call.1} parent=1 // pred_check_branch
      %164 = sbr.rel (0) target = $region61
    $region60: #{tpu_custom_call.1} parent=1 // pred_region
      %s166 = ssub.s32 96, 96
      %167 = vsyncadd [#allocation21], %s166
      %s169 = sshll.u32 [#allocation22], 4
      %s170 = int_to_ptr.vmem [resolvable:$true] %s169
      %172 = dma.hbm_to_vmem [thread:$0]  %s14, 96, %s170, [#allocation21]
    $region61: #{tpu_custom_call.1} parent=1 // pred_fallthru
      _
    // Predicated region
    $region62: #{tpu_custom_call.1} parent=1 // pred_check
      _
    $region63: #{tpu_custom_call.1} parent=1 // pred_check_branch
      %174 = sbr.rel (0) target = $region65
    $region64: #{tpu_custom_call.1} parent=1 // pred_region
      _
    $region65: #{tpu_custom_call.1} parent=1 // pred_fallthru
      _
    // Predicated region
    $region66: #{tpu_custom_call.1} parent=1 // pred_check
      _
    $region67: #{tpu_custom_call.1} parent=1 // pred_check_branch
      %176 = sbr.rel (0) target = $region69
    $region68: #{tpu_custom_call.1} parent=1 // pred_region
      %s178 = ssub.s32 16, 16
      %179 = vsyncadd [#allocation24], %s178
      %s181 = sshll.u32 [#allocation23], 4
      %s182 = int_to_ptr.vmem [resolvable:$true] %s181
      %184 = dma.hbm_to_vmem [thread:$0]  %s16, 16, %s182, [#allocation24]
    $region69: #{tpu_custom_call.1} parent=1 // pred_fallthru
      _
    // Predicated region
    $region70: #{tpu_custom_call.1} parent=1 // pred_check
      _
    $region71: #{tpu_custom_call.1} parent=1 // pred_check_branch
      %186 = sbr.rel (0) target = $region73
    $region72: #{tpu_custom_call.1} parent=1 // pred_region
      %187 = dma.done [#allocation3], 128
    $region73: #{tpu_custom_call.1} parent=1 // pred_fallthru
      _
    // Predicated region
    $region74: #{tpu_custom_call.1} parent=1 // pred_check
      _
    $region75: #{tpu_custom_call.1} parent=1 // pred_check_branch
      %189 = sbr.rel (0) target = $region77
    $region76: #{tpu_custom_call.1} parent=1 // pred_region
      %190 = dma.done [#allocation6], 128
    $region77: #{tpu_custom_call.1} parent=1 // pred_fallthru
      _
    // Predicated region
    $region78: #{tpu_custom_call.1} parent=1 // pred_check
      _
    $region79: #{tpu_custom_call.1} parent=1 // pred_check_branch
      %192 = sbr.rel (0) target = $region81
    $region80: #{tpu_custom_call.1} parent=1 // pred_region
      %193 = dma.done [#allocation6], 768
    $region81: #{tpu_custom_call.1} parent=1 // pred_fallthru
      _
    // Predicated region
    $region82: #{tpu_custom_call.1} parent=1 // pred_check
      _
    $region83: #{tpu_custom_call.1} parent=1 // pred_check_branch
      %195 = sbr.rel (0) target = $region85
    $region84: #{tpu_custom_call.1} parent=1 // pred_region
      %196 = dma.done [#allocation9], 384
    $region85: #{tpu_custom_call.1} parent=1 // pred_fallthru
      _
    // Predicated region
    $region86: #{tpu_custom_call.1} parent=1 // pred_check
      _
    $region87: #{tpu_custom_call.1} parent=1 // pred_check_branch
      %198 = sbr.rel (0) target = $region89
    $region88: #{tpu_custom_call.1} parent=1 // pred_region
      %199 = dma.done [#allocation9], 96
    $region89: #{tpu_custom_call.1} parent=1 // pred_fallthru
      _
    // Predicated region
    $region90: #{tpu_custom_call.1} parent=1 // pred_check
      _
    $region91: #{tpu_custom_call.1} parent=1 // pred_check_branch
      %201 = sbr.rel (0) target = $region93
    $region92: #{tpu_custom_call.1} parent=1 // pred_region
      %202 = dma.done [#allocation12], 36864
    $region93: #{tpu_custom_call.1} parent=1 // pred_fallthru
      _
    // Predicated region
    $region94: #{tpu_custom_call.1} parent=1 // pred_check
      _
    $region95: #{tpu_custom_call.1} parent=1 // pred_check_branch
      %204 = sbr.rel (0) target = $region97
    $region96: #{tpu_custom_call.1} parent=1 // pred_region
      %205 = dma.done [#allocation12], 96
    $region97: #{tpu_custom_call.1} parent=1 // pred_fallthru
      _
    // Predicated region
    $region98: #{tpu_custom_call.1} parent=1 // pred_check
      _
    $region99: #{tpu_custom_call.1} parent=1 // pred_check_branch
      %207 = sbr.rel (0) target = $region101
    $region100: #{tpu_custom_call.1} parent=1 // pred_region
      %208 = dma.done [#allocation15], 16
    $region101: #{tpu_custom_call.1} parent=1 // pred_fallthru
      _
    // Predicated region
    $region102: #{tpu_custom_call.1} parent=1 // pred_check
      _
    $region103: #{tpu_custom_call.1} parent=1 // pred_check_branch
      %210 = sbr.rel (0) target = $region105
    $region104: #{tpu_custom_call.1} parent=1 // pred_region
      %211 = dma.done [#allocation15], 768
    $region105: #{tpu_custom_call.1} parent=1 // pred_fallthru
      _
    // Predicated region
    $region106: #{tpu_custom_call.1} parent=1 // pred_check
      _
    $region107: #{tpu_custom_call.1} parent=1 // pred_check_branch
      %213 = sbr.rel (0) target = $region109
    $region108: #{tpu_custom_call.1} parent=1 // pred_region
      %214 = dma.done [#allocation18], 192
    $region109: #{tpu_custom_call.1} parent=1 // pred_fallthru
      _
    // Predicated region
    $region110: #{tpu_custom_call.1} parent=1 // pred_check
      _
    $region111: #{tpu_custom_call.1} parent=1 // pred_check_branch
      %216 = sbr.rel (0) target = $region113
    $region112: #{tpu_custom_call.1} parent=1 // pred_region
      %217 = dma.done [#allocation18], 96
    $region113: #{tpu_custom_call.1} parent=1 // pred_fallthru
      _
    // Predicated region
    $region114: #{tpu_custom_call.1} parent=1 // pred_check
      _
    $region115: #{tpu_custom_call.1} parent=1 // pred_check_branch
      %219 = sbr.rel (0) target = $region117
    $region116: #{tpu_custom_call.1} parent=1 // pred_region
      %220 = dma.done [#allocation21], 36864
    $region117: #{tpu_custom_call.1} parent=1 // pred_fallthru
      _
    // Predicated region
    $region118: #{tpu_custom_call.1} parent=1 // pred_check
      _
    $region119: #{tpu_custom_call.1} parent=1 // pred_check_branch
      %222 = sbr.rel (0) target = $region121
    $region120: #{tpu_custom_call.1} parent=1 // pred_region
      %223 = dma.done [#allocation21], 96
    $region121: #{tpu_custom_call.1} parent=1 // pred_fallthru
      _
    // Predicated region
    $region122: #{tpu_custom_call.1} parent=1 // pred_check
      _
    $region123: #{tpu_custom_call.1} parent=1 // pred_check_branch
      %225 = sbr.rel (0) target = $region125
    $region124: #{tpu_custom_call.1} parent=1 // pred_region
      %226 = dma.done [#allocation24], 16
    $region125: #{tpu_custom_call.1} parent=1 // pred_fallthru
      _
    %v228 = vld [vmem:[#allocation2] sm:$0xff]
    %v229 = vld [vmem:[#allocation5] sm:$0xff]
    %v230 = vld [vmem:[%s2] sm:$0xff]
    %v231 = vpack.c.bf16 %v228, %v228
    %v232 = vld [vmem:[#allocation7] sm:$0xff]
    %v233 = vld [vmem:[#allocation7 + $0x8] sm:$0xff]
    %v234 = vld [vmem:[#allocation7 + $0x10] sm:$0xff]
    %v235 = vld [vmem:[#allocation7 + $0x18] sm:$0xff]
    %v236 = vld [vmem:[#allocation7 + $0x20] sm:$0xff]
    %v237 = vld [vmem:[#allocation7 + $0x28] sm:$0xff]
    %v238 = vpack.c.bf16 %v229, %v229
    %v239 = vld [vmem:[#allocation8] sm:$0xff]
    %v240 = vld [vmem:[#allocation8 + $0x8] sm:$0xff]
    %v241 = vld [vmem:[#allocation8 + $0x10] sm:$0xff]
    %v245 = vunpack.c.l.b16 %v239
    %v246 = vunpack.c.h.b16 %v239
    %v247 = vunpack.c.l.b16 %v240
    %v248 = vunpack.c.h.b16 %v240
    %v249 = vunpack.c.l.b16 %v241
    %v250 = vunpack.c.h.b16 %v241
    %v251 = vpack.c.b16 %v245, %v245
    %v252 = vpack.c.b16 %v246, %v246
    %v253 = vpack.c.b16 %v247, %v247
    %v254 = vpack.c.b16 %v248, %v248
    %v255 = vpack.c.b16 %v249, %v249
    %v256 = vpack.c.b16 %v250, %v250
    %vm257 = vcmask 64512
    %v259 = vsel %vm257, %v238, 0
    %vm261 = vcmask 1043456
    %v263 = vsel %vm261, %v251, 0
    %v266 = vsel %vm261, %v252, 0
    %v269 = vsel %vm261, %v253, 0
    %v272 = vsel %vm261, %v254, 0
    %v275 = vsel %vm261, %v255, 0
    %v278 = vsel %vm261, %v256, 0
    %280 = vmatprep.subr.bf16.mxu0 %v266
    %281 = vmatpush1.bf16.msra.mxu0 %v263
    %282 = vmatprep.subr.bf16.mxu0 0
    %283 = vmatpush1.bf16.msra.mxu0 0
    %284 = vmatprep.subr.bf16.mxu0 0
    %285 = vmatpush1.bf16.msra.mxu0 0
    %286 = vmatprep.subr.bf16.mxu0 0
    %287 = vmatpush1.bf16.msra.mxu0 0
    %288 = vmatprep.subr.bf16.mxu0 0
    %289 = vmatpush1.bf16.msra.mxu0 0
    %290 = vmatprep.subr.bf16.mxu0 0
    %291 = vmatpush1.bf16.msra.mxu0 0
    %292 = vmatprep.subr.bf16.mxu0 0
    %293 = vmatpush1.bf16.msra.mxu0 0
    %294 = vmatprep.subr.bf16.mxu0 0
    %295 = vmatpush1.bf16.msra.mxu0 0
    %296 = vmatprep.subr.bf16.mxu0 0
    %297 = vmatpush1.bf16.msra.mxu0 0
    %298 = vmatprep.subr.bf16.mxu0 0
    %299 = vmatpush1.bf16.msra.mxu0 0
    %300 = vmatprep.subr.bf16.mxu0 0
    %301 = vmatpush1.bf16.msra.mxu0 0
    %302 = vmatprep.subr.bf16.mxu0 0
    %303 = vmatpush1.bf16.msra.mxu0 0
    %304 = vmatprep.subr.bf16.mxu0 0
    %305 = vmatpush1.bf16.msra.mxu0 0
    %306 = vmatprep.subr.bf16.mxu0 0
    %307 = vmatpush1.bf16.msra.mxu0 0
    %308 = vmatprep.subr.bf16.mxu0 0
    %309 = vmatpush1.bf16.msra.mxu0 0
    %310 = vmatprep.subr.bf16.mxu0 0
    %311 = vmatpush1.bf16.msra.mxu0 0
    %312 = vmatprep.mubr.bf16.mxu0 0
    %313 = vmatmul.mubr.bf16.gmra.mrb[0].mxu0 %v259
    %v314 = vpop.f32.mrb[0].mxu0
    %v315 = vadd.f32 0.0, %v314
    %v316 = vpop.f32.mrb[0].mxu0
    %v317 = vadd.f32 0.0, %v316
    %v318 = vpop.f32.mrb[0].mxu0
    %v319 = vpop.f32.mrb[0].mxu0
    %320 = vdwg.mxu0
    %321 = vmatprep.subr.bf16.mxu0 %v272
    %322 = vmatpush1.bf16.msra.mxu0 %v269
    %323 = vmatprep.subr.bf16.mxu0 0
    %324 = vmatpush1.bf16.msra.mxu0 0
    %325 = vmatprep.subr.bf16.mxu0 0
    %326 = vmatpush1.bf16.msra.mxu0 0
    %327 = vmatprep.subr.bf16.mxu0 0
    %328 = vmatpush1.bf16.msra.mxu0 0
    %329 = vmatprep.subr.bf16.mxu0 0
    %330 = vmatpush1.bf16.msra.mxu0 0
    %331 = vmatprep.subr.bf16.mxu0 0
    %332 = vmatpush1.bf16.msra.mxu0 0
    %333 = vmatprep.subr.bf16.mxu0 0
    %334 = vmatpush1.bf16.msra.mxu0 0
    %335 = vmatprep.subr.bf16.mxu0 0
    %336 = vmatpush1.bf16.msra.mxu0 0
    %337 = vmatprep.subr.bf16.mxu0 0
    %338 = vmatpush1.bf16.msra.mxu0 0
    %339 = vmatprep.subr.bf16.mxu0 0
    %340 = vmatpush1.bf16.msra.mxu0 0
    %341 = vmatprep.subr.bf16.mxu0 0
    %342 = vmatpush1.bf16.msra.mxu0 0
    %343 = vmatprep.subr.bf16.mxu0 0
    %344 = vmatpush1.bf16.msra.mxu0 0
    %345 = vmatprep.subr.bf16.mxu0 0
    %346 = vmatpush1.bf16.msra.mxu0 0
    %347 = vmatprep.subr.bf16.mxu0 0
    %348 = vmatpush1.bf16.msra.mxu0 0
    %349 = vmatprep.subr.bf16.mxu0 0
    %350 = vmatpush1.bf16.msra.mxu0 0
    %351 = vmatprep.subr.bf16.mxu0 0
    %352 = vmatpush1.bf16.msra.mxu0 0
    %353 = vmatprep.mubr.bf16.mxu0 0
    %354 = vmatmul.mubr.bf16.gmra.mrb[0].mxu0 %v259
    %v355 = vpop.f32.mrb[0].mxu0
    %v356 = vadd.f32 0.0, %v355
    %v357 = vpop.f32.mrb[0].mxu0
    %v358 = vadd.f32 0.0, %v357
    %v359 = vpop.f32.mrb[0].mxu0
    %v360 = vpop.f32.mrb[0].mxu0
    %361 = vdwg.mxu0
    %362 = vmatprep.subr.bf16.mxu0 %v278
    %363 = vmatpush1.bf16.msra.mxu0 %v275
    %364 = vmatprep.subr.bf16.mxu0 0
    %365 = vmatpush1.bf16.msra.mxu0 0
    %366 = vmatprep.subr.bf16.mxu0 0
    %367 = vmatpush1.bf16.msra.mxu0 0
    %368 = vmatprep.subr.bf16.mxu0 0
    %369 = vmatpush1.bf16.msra.mxu0 0
    %370 = vmatprep.subr.bf16.mxu0 0
    %371 = vmatpush1.bf16.msra.mxu0 0
    %372 = vmatprep.subr.bf16.mxu0 0
    %373 = vmatpush1.bf16.msra.mxu0 0
    %374 = vmatprep.subr.bf16.mxu0 0
    %375 = vmatpush1.bf16.msra.mxu0 0
    %376 = vmatprep.subr.bf16.mxu0 0
    %377 = vmatpush1.bf16.msra.mxu0 0
    %378 = vmatprep.subr.bf16.mxu0 0
    %379 = vmatpush1.bf16.msra.mxu0 0
    %380 = vmatprep.subr.bf16.mxu0 0
    %381 = vmatpush1.bf16.msra.mxu0 0
    %382 = vmatprep.subr.bf16.mxu0 0
    %383 = vmatpush1.bf16.msra.mxu0 0
    %384 = vmatprep.subr.bf16.mxu0 0
    %385 = vmatpush1.bf16.msra.mxu0 0
    %386 = vmatprep.subr.bf16.mxu0 0
    %387 = vmatpush1.bf16.msra.mxu0 0
    %388 = vmatprep.subr.bf16.mxu0 0
    %389 = vmatpush1.bf16.msra.mxu0 0
    %390 = vmatprep.subr.bf16.mxu0 0
    %391 = vmatpush1.bf16.msra.mxu0 0
    %392 = vmatprep.subr.bf16.mxu0 0
    %393 = vmatpush1.bf16.msra.mxu0 0
    %394 = vmatprep.mubr.bf16.mxu0 0
    %395 = vmatmul.mubr.bf16.gmra.mrb[0].mxu0 %v259
    %v396 = vpop.f32.mrb[0].mxu0
    %v397 = vadd.f32 0.0, %v396
    %v398 = vpop.f32.mrb[0].mxu0
    %v399 = vadd.f32 0.0, %v398
    %v400 = vpop.f32.mrb[0].mxu0
    %v401 = vpop.f32.mrb[0].mxu0
    %402 = vdwg.mxu0
    %v409 = vunpack.c.l.b16 %v232
    %v410 = vunpack.c.h.b16 %v232
    %v411 = vunpack.c.l.b16 %v233
    %v412 = vunpack.c.h.b16 %v233
    %v413 = vunpack.c.l.b16 %v234
    %v414 = vunpack.c.h.b16 %v234
    %v415 = vunpack.c.l.b16 %v235
    %v416 = vunpack.c.h.b16 %v235
    %v417 = vunpack.c.l.b16 %v236
    %v418 = vunpack.c.h.b16 %v236
    %v419 = vunpack.c.l.b16 %v237
    %v420 = vunpack.c.h.b16 %v237
    %v421 = vpack.c.b16 %v415, %v409
    %v422 = vpack.c.b16 %v416, %v410
    %v423 = vpack.c.b16 %v417, %v411
    %v424 = vpack.c.b16 %v418, %v412
    %v425 = vpack.c.b16 %v419, %v413
    %v426 = vpack.c.b16 %v420, %v414
    %vm433 = vcmask 130048
    %v435 = vsel %vm433, %v231, 0
    %437 = vmatprep.subr.bf16.mxu0 %v422
    %438 = vmatpush1.bf16.msra.mxu0 %v421
    %439 = vmatprep.subr.bf16.mxu0 0
    %440 = vmatpush1.bf16.msra.mxu0 0
    %441 = vmatprep.subr.bf16.mxu0 0
    %442 = vmatpush1.bf16.msra.mxu0 0
    %443 = vmatprep.subr.bf16.mxu0 0
    %444 = vmatpush1.bf16.msra.mxu0 0
    %445 = vmatprep.subr.bf16.mxu0 0
    %446 = vmatpush1.bf16.msra.mxu0 0
    %447 = vmatprep.subr.bf16.mxu0 0
    %448 = vmatpush1.bf16.msra.mxu0 0
    %449 = vmatprep.subr.bf16.mxu0 0
    %450 = vmatpush1.bf16.msra.mxu0 0
    %451 = vmatprep.subr.bf16.mxu0 0
    %452 = vmatpush1.bf16.msra.mxu0 0
    %453 = vmatprep.subr.bf16.mxu0 0
    %454 = vmatpush1.bf16.msra.mxu0 0
    %455 = vmatprep.subr.bf16.mxu0 0
    %456 = vmatpush1.bf16.msra.mxu0 0
    %457 = vmatprep.subr.bf16.mxu0 0
    %458 = vmatpush1.bf16.msra.mxu0 0
    %459 = vmatprep.subr.bf16.mxu0 0
    %460 = vmatpush1.bf16.msra.mxu0 0
    %461 = vmatprep.subr.bf16.mxu0 0
    %462 = vmatpush1.bf16.msra.mxu0 0
    %463 = vmatprep.subr.bf16.mxu0 0
    %464 = vmatpush1.bf16.msra.mxu0 0
    %465 = vmatprep.subr.bf16.mxu0 0
    %466 = vmatpush1.bf16.msra.mxu0 0
    %467 = vmatprep.subr.bf16.mxu0 0
    %468 = vmatpush1.bf16.msra.mxu0 0
    %469 = vmatprep.mubr.bf16.mxu0 0
    %470 = vmatmul.mubr.bf16.gmra.mrb[0].mxu0 %v435
    %v471 = vpop.f32.mrb[0].mxu0
    %v472 = vadd.f32 %v315, %v471
    %v473 = vpop.f32.mrb[0].mxu0
    %v474 = vadd.f32 %v317, %v473
    %v475 = vpop.f32.mrb[0].mxu0
    %v476 = vpop.f32.mrb[0].mxu0
    %477 = vdwg.mxu0
    %478 = vmatprep.subr.bf16.mxu0 %v424
    %479 = vmatpush1.bf16.msra.mxu0 %v423
    %480 = vmatprep.subr.bf16.mxu0 0
    %481 = vmatpush1.bf16.msra.mxu0 0
    %482 = vmatprep.subr.bf16.mxu0 0
    %483 = vmatpush1.bf16.msra.mxu0 0
    %484 = vmatprep.subr.bf16.mxu0 0
    %485 = vmatpush1.bf16.msra.mxu0 0
    %486 = vmatprep.subr.bf16.mxu0 0
    %487 = vmatpush1.bf16.msra.mxu0 0
    %488 = vmatprep.subr.bf16.mxu0 0
    %489 = vmatpush1.bf16.msra.mxu0 0
    %490 = vmatprep.subr.bf16.mxu0 0
    %491 = vmatpush1.bf16.msra.mxu0 0
    %492 = vmatprep.subr.bf16.mxu0 0
    %493 = vmatpush1.bf16.msra.mxu0 0
    %494 = vmatprep.subr.bf16.mxu0 0
    %495 = vmatpush1.bf16.msra.mxu0 0
    %496 = vmatprep.subr.bf16.mxu0 0
    %497 = vmatpush1.bf16.msra.mxu0 0
    %498 = vmatprep.subr.bf16.mxu0 0
    %499 = vmatpush1.bf16.msra.mxu0 0
    %500 = vmatprep.subr.bf16.mxu0 0
    %501 = vmatpush1.bf16.msra.mxu0 0
    %502 = vmatprep.subr.bf16.mxu0 0
    %503 = vmatpush1.bf16.msra.mxu0 0
    %504 = vmatprep.subr.bf16.mxu0 0
    %505 = vmatpush1.bf16.msra.mxu0 0
    %506 = vmatprep.subr.bf16.mxu0 0
    %507 = vmatpush1.bf16.msra.mxu0 0
    %508 = vmatprep.subr.bf16.mxu0 0
    %509 = vmatpush1.bf16.msra.mxu0 0
    %510 = vmatprep.mubr.bf16.mxu0 0
    %511 = vmatmul.mubr.bf16.gmra.mrb[0].mxu0 %v435
    %v512 = vpop.f32.mrb[0].mxu0
    %v513 = vadd.f32 %v356, %v512
    %v514 = vpop.f32.mrb[0].mxu0
    %v515 = vadd.f32 %v358, %v514
    %v516 = vpop.f32.mrb[0].mxu0
    %v517 = vpop.f32.mrb[0].mxu0
    %518 = vdwg.mxu0
    %519 = vmatprep.subr.bf16.mxu0 %v426
    %520 = vmatpush1.bf16.msra.mxu0 %v425
    %521 = vmatprep.subr.bf16.mxu0 0
    %522 = vmatpush1.bf16.msra.mxu0 0
    %523 = vmatprep.subr.bf16.mxu0 0
    %524 = vmatpush1.bf16.msra.mxu0 0
    %525 = vmatprep.subr.bf16.mxu0 0
    %526 = vmatpush1.bf16.msra.mxu0 0
    %527 = vmatprep.subr.bf16.mxu0 0
    %528 = vmatpush1.bf16.msra.mxu0 0
    %529 = vmatprep.subr.bf16.mxu0 0
    %530 = vmatpush1.bf16.msra.mxu0 0
    %531 = vmatprep.subr.bf16.mxu0 0
    %532 = vmatpush1.bf16.msra.mxu0 0
    %533 = vmatprep.subr.bf16.mxu0 0
    %534 = vmatpush1.bf16.msra.mxu0 0
    %535 = vmatprep.subr.bf16.mxu0 0
    %536 = vmatpush1.bf16.msra.mxu0 0
    %537 = vmatprep.subr.bf16.mxu0 0
    %538 = vmatpush1.bf16.msra.mxu0 0
    %539 = vmatprep.subr.bf16.mxu0 0
    %540 = vmatpush1.bf16.msra.mxu0 0
    %541 = vmatprep.subr.bf16.mxu0 0
    %542 = vmatpush1.bf16.msra.mxu0 0
    %543 = vmatprep.subr.bf16.mxu0 0
    %544 = vmatpush1.bf16.msra.mxu0 0
    %545 = vmatprep.subr.bf16.mxu0 0
    %546 = vmatpush1.bf16.msra.mxu0 0
    %547 = vmatprep.subr.bf16.mxu0 0
    %548 = vmatpush1.bf16.msra.mxu0 0
    %549 = vmatprep.subr.bf16.mxu0 0
    %550 = vmatpush1.bf16.msra.mxu0 0
    %551 = vmatprep.mubr.bf16.mxu0 0
    %552 = vmatmul.mubr.bf16.gmra.mrb[0].mxu0 %v435
    %v553 = vpop.f32.mrb[0].mxu0
    %v554 = vadd.f32 %v397, %v553
    %v555 = vpop.f32.mrb[0].mxu0
    %v556 = vadd.f32 %v399, %v555
    %v557 = vpop.f32.mrb[0].mxu0
    %v558 = vpop.f32.mrb[0].mxu0
    %559 = vdwg.mxu0
    %v560 = vld [vmem:[#allocation10] sm:$0x3f]
    %v562 = vlaneseq
    %v563 = vshrl.u32 %v562, 7
    %v564 = vsub.s32 0, %v563
    %v565 = vrot.slane %v560, %v564
    %v566 = vlaneseq
    %v567 = vshrl.u32 %v566, 7
    %v568 = vsub.s32 1, %v567
    %v569 = vrot.slane %v560, %v568
    %v570 = vlaneseq
    %v571 = vshrl.u32 %v570, 7
    %v572 = vsub.s32 2, %v571
    %v573 = vrot.slane %v560, %v572
    %v574 = vlaneseq
    %v575 = vshrl.u32 %v574, 7
    %v576 = vsub.s32 3, %v575
    %v577 = vrot.slane %v560, %v576
    %v578 = vlaneseq
    %v579 = vshrl.u32 %v578, 7
    %v580 = vsub.s32 4, %v579
    %v581 = vrot.slane %v560, %v580
    %v582 = vlaneseq
    %v583 = vshrl.u32 %v582, 7
    %v584 = vsub.s32 5, %v583
    %v585 = vrot.slane %v560, %v584
    %v592 = vadd.f32 %v472, %v565
    %v593 = vadd.f32 %v474, %v569
    %v594 = vadd.f32 %v513, %v573
    %v595 = vadd.f32 %v515, %v577
    %v596 = vadd.f32 %v554, %v581
    %v597 = vadd.f32 %v556, %v585
    %v598 = vmax.f32 %v592, 0.0
    %v599 = vmax.f32 %v593, 0.0
    %v600 = vmax.f32 %v594, 0.0
    %v601 = vmax.f32 %v595, 0.0
    %v602 = vmax.f32 %v596, 0.0
    %v603 = vmax.f32 %v597, 0.0
    %v604 = vpack.c.bf16 %v598, %v598
    %v605 = vpack.c.bf16 %v599, %v599
    %v606 = vpack.c.bf16 %v600, %v600
    %v607 = vpack.c.bf16 %v601, %v601
    %v608 = vpack.c.bf16 %v602, %v602
    %v609 = vpack.c.bf16 %v603, %v603
    %v610 = vld [vmem:[#allocation11] sm:$0xff]
    %v611 = vld [vmem:[#allocation11 + $0x8] sm:$0xff]
    %v612 = vld [vmem:[#allocation11 + $0x10] sm:$0xff]
    %v613 = vld [vmem:[#allocation11 + $0x18] sm:$0xff]
    %v614 = vld [vmem:[#allocation11 + $0x20] sm:$0xff]
    %v615 = vld [vmem:[#allocation11 + $0x28] sm:$0xff]
    %v616 = vld [vmem:[#allocation11 + $0x30] sm:$0xff]
    %v617 = vld [vmem:[#allocation11 + $0x38] sm:$0xff]
    %v618 = vld [vmem:[#allocation11 + $0x40] sm:$0xff]
    %v619 = vld [vmem:[#allocation11 + $0x48] sm:$0xff]
    %v620 = vld [vmem:[#allocation11 + $0x50] sm:$0xff]
    %v621 = vld [vmem:[#allocation11 + $0x58] sm:$0xff]
    %v622 = vld [vmem:[#allocation11 + $0x60] sm:$0xff]
    %v623 = vld [vmem:[#allocation11 + $0x68] sm:$0xff]
    %v624 = vld [vmem:[#allocation11 + $0x70] sm:$0xff]
    %v625 = vld [vmem:[#allocation11 + $0x78] sm:$0xff]
    %v626 = vld [vmem:[#allocation11 + $0x80] sm:$0xff]
    %v627 = vld [vmem:[#allocation11 + $0x88] sm:$0xff]
    %v628 = vld [vmem:[#allocation11 + $0x90] sm:$0xff]
    %v629 = vld [vmem:[#allocation11 + $0x98] sm:$0xff]
    %v630 = vld [vmem:[#allocation11 + $0xa0] sm:$0xff]
    %v631 = vld [vmem:[#allocation11 + $0xa8] sm:$0xff]
    %v632 = vld [vmem:[#allocation11 + $0xb0] sm:$0xff]
    %v633 = vld [vmem:[#allocation11 + $0xb8] sm:$0xff]
    %v634 = vld [vmem:[#allocation11 + $0xc0] sm:$0xff]
    %v635 = vld [vmem:[#allocation11 + $0xc8] sm:$0xff]
    %v636 = vld [vmem:[#allocation11 + $0xd0] sm:$0xff]
    %v637 = vld [vmem:[#allocation11 + $0xd8] sm:$0xff]
    %v638 = vld [vmem:[#allocation11 + $0xe0] sm:$0xff]
    %v639 = vld [vmem:[#allocation11 + $0xe8] sm:$0xff]
    %v640 = vld [vmem:[#allocation11 + $0xf0] sm:$0xff]
    %v641 = vld [vmem:[#allocation11 + $0xf8] sm:$0xff]
    %v642 = vld [vmem:[#allocation11 + $0x100] sm:$0xff]
    %v643 = vld [vmem:[#allocation11 + $0x108] sm:$0xff]
    %v644 = vld [vmem:[#allocation11 + $0x110] sm:$0xff]
    %v645 = vld [vmem:[#allocation11 + $0x118] sm:$0xff]
    %v646 = vld [vmem:[#allocation11 + $0x120] sm:$0xff]
    %v647 = vld [vmem:[#allocation11 + $0x128] sm:$0xff]
    %v648 = vld [vmem:[#allocation11 + $0x130] sm:$0xff]
    %v649 = vld [vmem:[#allocation11 + $0x138] sm:$0xff]
    %v650 = vld [vmem:[#allocation11 + $0x140] sm:$0xff]
    %v651 = vld [vmem:[#allocation11 + $0x148] sm:$0xff]
    %v652 = vld [vmem:[#allocation11 + $0x150] sm:$0xff]
    %v653 = vld [vmem:[#allocation11 + $0x158] sm:$0xff]
    %v654 = vld [vmem:[#allocation11 + $0x160] sm:$0xff]
    %v655 = vld [vmem:[#allocation11 + $0x168] sm:$0xff]
    %v656 = vld [vmem:[#allocation11 + $0x170] sm:$0xff]
    %v657 = vld [vmem:[#allocation11 + $0x178] sm:$0xff]
    %v658 = vld [vmem:[#allocation11 + $0x180] sm:$0xff]
    %v659 = vld [vmem:[#allocation11 + $0x188] sm:$0xff]
    %v660 = vld [vmem:[#allocation11 + $0x190] sm:$0xff]
    %v661 = vld [vmem:[#allocation11 + $0x198] sm:$0xff]
    %v662 = vld [vmem:[#allocation11 + $0x1a0] sm:$0xff]
    %v663 = vld [vmem:[#allocation11 + $0x1a8] sm:$0xff]
    %v664 = vld [vmem:[#allocation11 + $0x1b0] sm:$0xff]
    %v665 = vld [vmem:[#allocation11 + $0x1b8] sm:$0xff]
    %v666 = vld [vmem:[#allocation11 + $0x1c0] sm:$0xff]
    %v667 = vld [vmem:[#allocation11 + $0x1c8] sm:$0xff]
    %v668 = vld [vmem:[#allocation11 + $0x1d0] sm:$0xff]
    %v669 = vld [vmem:[#allocation11 + $0x1d8] sm:$0xff]
    %v670 = vld [vmem:[#allocation11 + $0x1e0] sm:$0xff]
    %v671 = vld [vmem:[#allocation11 + $0x1e8] sm:$0xff]
    %v672 = vld [vmem:[#allocation11 + $0x1f0] sm:$0xff]
    %v673 = vld [vmem:[#allocation11 + $0x1f8] sm:$0xff]
    %v674 = vld [vmem:[#allocation11 + $0x200] sm:$0xff]
    %v675 = vld [vmem:[#allocation11 + $0x208] sm:$0xff]
    %v676 = vld [vmem:[#allocation11 + $0x210] sm:$0xff]
    %v677 = vld [vmem:[#allocation11 + $0x218] sm:$0xff]
    %v678 = vld [vmem:[#allocation11 + $0x220] sm:$0xff]
    %v679 = vld [vmem:[#allocation11 + $0x228] sm:$0xff]
    %v680 = vld [vmem:[#allocation11 + $0x230] sm:$0xff]
    %v681 = vld [vmem:[#allocation11 + $0x238] sm:$0xff]
    %v682 = vld [vmem:[#allocation11 + $0x240] sm:$0xff]
    %v683 = vld [vmem:[#allocation11 + $0x248] sm:$0xff]
    %v684 = vld [vmem:[#allocation11 + $0x250] sm:$0xff]
    %v685 = vld [vmem:[#allocation11 + $0x258] sm:$0xff]
    %v686 = vld [vmem:[#allocation11 + $0x260] sm:$0xff]
    %v687 = vld [vmem:[#allocation11 + $0x268] sm:$0xff]
    %v688 = vld [vmem:[#allocation11 + $0x270] sm:$0xff]
    %v689 = vld [vmem:[#allocation11 + $0x278] sm:$0xff]
    %v690 = vld [vmem:[#allocation11 + $0x280] sm:$0xff]
    %v691 = vld [vmem:[#allocation11 + $0x288] sm:$0xff]
    %v692 = vld [vmem:[#allocation11 + $0x290] sm:$0xff]
    %v693 = vld [vmem:[#allocation11 + $0x298] sm:$0xff]
    %v694 = vld [vmem:[#allocation11 + $0x2a0] sm:$0xff]
    %v695 = vld [vmem:[#allocation11 + $0x2a8] sm:$0xff]
    %v696 = vld [vmem:[#allocation11 + $0x2b0] sm:$0xff]
    %v697 = vld [vmem:[#allocation11 + $0x2b8] sm:$0xff]
    %v698 = vld [vmem:[#allocation11 + $0x2c0] sm:$0xff]
    %v699 = vld [vmem:[#allocation11 + $0x2c8] sm:$0xff]
    %v700 = vld [vmem:[#allocation11 + $0x2d0] sm:$0xff]
    %v701 = vld [vmem:[#allocation11 + $0x2d8] sm:$0xff]
    %v702 = vld [vmem:[#allocation11 + $0x2e0] sm:$0xff]
    %v703 = vld [vmem:[#allocation11 + $0x2e8] sm:$0xff]
    %v704 = vld [vmem:[#allocation11 + $0x2f0] sm:$0xff]
    %v705 = vld [vmem:[#allocation11 + $0x2f8] sm:$0xff]
    %v706 = vld [vmem:[#allocation11 + $0x300] sm:$0xff]
    %v707 = vld [vmem:[#allocation11 + $0x308] sm:$0xff]
    %v708 = vld [vmem:[#allocation11 + $0x310] sm:$0xff]
    %v709 = vld [vmem:[#allocation11 + $0x318] sm:$0xff]
    %v710 = vld [vmem:[#allocation11 + $0x320] sm:$0xff]
    %v711 = vld [vmem:[#allocation11 + $0x328] sm:$0xff]
    %v712 = vld [vmem:[#allocation11 + $0x330] sm:$0xff]
    %v713 = vld [vmem:[#allocation11 + $0x338] sm:$0xff]
    %v714 = vld [vmem:[#allocation11 + $0x340] sm:$0xff]
    %v715 = vld [vmem:[#allocation11 + $0x348] sm:$0xff]
    %v716 = vld [vmem:[#allocation11 + $0x350] sm:$0xff]
    %v717 = vld [vmem:[#allocation11 + $0x358] sm:$0xff]
    %v718 = vld [vmem:[#allocation11 + $0x360] sm:$0xff]
    %v719 = vld [vmem:[#allocation11 + $0x368] sm:$0xff]
    %v720 = vld [vmem:[#allocation11 + $0x370] sm:$0xff]
    %v721 = vld [vmem:[#allocation11 + $0x378] sm:$0xff]
    %v722 = vld [vmem:[#allocation11 + $0x380] sm:$0xff]
    %v723 = vld [vmem:[#allocation11 + $0x388] sm:$0xff]
    %v724 = vld [vmem:[#allocation11 + $0x390] sm:$0xff]
    %v725 = vld [vmem:[#allocation11 + $0x398] sm:$0xff]
    %v726 = vld [vmem:[#allocation11 + $0x3a0] sm:$0xff]
    %v727 = vld [vmem:[#allocation11 + $0x3a8] sm:$0xff]
    %v728 = vld [vmem:[#allocation11 + $0x3b0] sm:$0xff]
    %v729 = vld [vmem:[#allocation11 + $0x3b8] sm:$0xff]
    %v730 = vld [vmem:[#allocation11 + $0x3c0] sm:$0xff]
    %v731 = vld [vmem:[#allocation11 + $0x3c8] sm:$0xff]
    %v732 = vld [vmem:[#allocation11 + $0x3d0] sm:$0xff]
    %v733 = vld [vmem:[#allocation11 + $0x3d8] sm:$0xff]
    %v734 = vld [vmem:[#allocation11 + $0x3e0] sm:$0xff]
    %v735 = vld [vmem:[#allocation11 + $0x3e8] sm:$0xff]
    %v736 = vld [vmem:[#allocation11 + $0x3f0] sm:$0xff]
    %v737 = vld [vmem:[#allocation11 + $0x3f8] sm:$0xff]
    %v738 = vld [vmem:[#allocation11 + $0x400] sm:$0xff]
    %v739 = vld [vmem:[#allocation11 + $0x408] sm:$0xff]
    %v740 = vld [vmem:[#allocation11 + $0x410] sm:$0xff]
    %v741 = vld [vmem:[#allocation11 + $0x418] sm:$0xff]
    %v742 = vld [vmem:[#allocation11 + $0x420] sm:$0xff]
    %v743 = vld [vmem:[#allocation11 + $0x428] sm:$0xff]
    %v744 = vld [vmem:[#allocation11 + $0x430] sm:$0xff]
    %v745 = vld [vmem:[#allocation11 + $0x438] sm:$0xff]
    %v746 = vld [vmem:[#allocation11 + $0x440] sm:$0xff]
    %v747 = vld [vmem:[#allocation11 + $0x448] sm:$0xff]
    %v748 = vld [vmem:[#allocation11 + $0x450] sm:$0xff]
    %v749 = vld [vmem:[#allocation11 + $0x458] sm:$0xff]
    %v750 = vld [vmem:[#allocation11 + $0x460] sm:$0xff]
    %v751 = vld [vmem:[#allocation11 + $0x468] sm:$0xff]
    %v752 = vld [vmem:[#allocation11 + $0x470] sm:$0xff]
    %v753 = vld [vmem:[#allocation11 + $0x478] sm:$0xff]
    %v754 = vld [vmem:[#allocation11 + $0x480] sm:$0xff]
    %v755 = vld [vmem:[#allocation11 + $0x488] sm:$0xff]
    %v756 = vld [vmem:[#allocation11 + $0x490] sm:$0xff]
    %v757 = vld [vmem:[#allocation11 + $0x498] sm:$0xff]
    %v758 = vld [vmem:[#allocation11 + $0x4a0] sm:$0xff]
    %v759 = vld [vmem:[#allocation11 + $0x4a8] sm:$0xff]
    %v760 = vld [vmem:[#allocation11 + $0x4b0] sm:$0xff]
    %v761 = vld [vmem:[#allocation11 + $0x4b8] sm:$0xff]
    %v762 = vld [vmem:[#allocation11 + $0x4c0] sm:$0xff]
    %v763 = vld [vmem:[#allocation11 + $0x4c8] sm:$0xff]
    %v764 = vld [vmem:[#allocation11 + $0x4d0] sm:$0xff]
    %v765 = vld [vmem:[#allocation11 + $0x4d8] sm:$0xff]
    %v766 = vld [vmem:[#allocation11 + $0x4e0] sm:$0xff]
    %v767 = vld [vmem:[#allocation11 + $0x4e8] sm:$0xff]
    %v768 = vld [vmem:[#allocation11 + $0x4f0] sm:$0xff]
    %v769 = vld [vmem:[#allocation11 + $0x4f8] sm:$0xff]
    %v770 = vld [vmem:[#allocation11 + $0x500] sm:$0xff]
    %v771 = vld [vmem:[#allocation11 + $0x508] sm:$0xff]
    %v772 = vld [vmem:[#allocation11 + $0x510] sm:$0xff]
    %v773 = vld [vmem:[#allocation11 + $0x518] sm:$0xff]
    %v774 = vld [vmem:[#allocation11 + $0x520] sm:$0xff]
    %v775 = vld [vmem:[#allocation11 + $0x528] sm:$0xff]
    %v776 = vld [vmem:[#allocation11 + $0x530] sm:$0xff]
    %v777 = vld [vmem:[#allocation11 + $0x538] sm:$0xff]
    %v778 = vld [vmem:[#allocation11 + $0x540] sm:$0xff]
    %v779 = vld [vmem:[#allocation11 + $0x548] sm:$0xff]
    %v780 = vld [vmem:[#allocation11 + $0x550] sm:$0xff]
    %v781 = vld [vmem:[#allocation11 + $0x558] sm:$0xff]
    %v782 = vld [vmem:[#allocation11 + $0x560] sm:$0xff]
    %v783 = vld [vmem:[#allocation11 + $0x568] sm:$0xff]
    %v784 = vld [vmem:[#allocation11 + $0x570] sm:$0xff]
    %v785 = vld [vmem:[#allocation11 + $0x578] sm:$0xff]
    %v786 = vld [vmem:[#allocation11 + $0x580] sm:$0xff]
    %v787 = vld [vmem:[#allocation11 + $0x588] sm:$0xff]
    %v788 = vld [vmem:[#allocation11 + $0x590] sm:$0xff]
    %v789 = vld [vmem:[#allocation11 + $0x598] sm:$0xff]
    %v790 = vld [vmem:[#allocation11 + $0x5a0] sm:$0xff]
    %v791 = vld [vmem:[#allocation11 + $0x5a8] sm:$0xff]
    %v792 = vld [vmem:[#allocation11 + $0x5b0] sm:$0xff]
    %v793 = vld [vmem:[#allocation11 + $0x5b8] sm:$0xff]
    %v794 = vld [vmem:[#allocation11 + $0x5c0] sm:$0xff]
    %v795 = vld [vmem:[#allocation11 + $0x5c8] sm:$0xff]
    %v796 = vld [vmem:[#allocation11 + $0x5d0] sm:$0xff]
    %v797 = vld [vmem:[#allocation11 + $0x5d8] sm:$0xff]
    %v798 = vld [vmem:[#allocation11 + $0x5e0] sm:$0xff]
    %v799 = vld [vmem:[#allocation11 + $0x5e8] sm:$0xff]
    %v800 = vld [vmem:[#allocation11 + $0x5f0] sm:$0xff]
    %v801 = vld [vmem:[#allocation11 + $0x5f8] sm:$0xff]
    %v802 = vld [vmem:[#allocation11 + $0x600] sm:$0xff]
    %v803 = vld [vmem:[#allocation11 + $0x608] sm:$0xff]
    %v804 = vld [vmem:[#allocation11 + $0x610] sm:$0xff]
    %v805 = vld [vmem:[#allocation11 + $0x618] sm:$0xff]
    %v806 = vld [vmem:[#allocation11 + $0x620] sm:$0xff]
    %v807 = vld [vmem:[#allocation11 + $0x628] sm:$0xff]
    %v808 = vld [vmem:[#allocation11 + $0x630] sm:$0xff]
    %v809 = vld [vmem:[#allocation11 + $0x638] sm:$0xff]
    %v810 = vld [vmem:[#allocation11 + $0x640] sm:$0xff]
    %v811 = vld [vmem:[#allocation11 + $0x648] sm:$0xff]
    %v812 = vld [vmem:[#allocation11 + $0x650] sm:$0xff]
    %v813 = vld [vmem:[#allocation11 + $0x658] sm:$0xff]
    %v814 = vld [vmem:[#allocation11 + $0x660] sm:$0xff]
    %v815 = vld [vmem:[#allocation11 + $0x668] sm:$0xff]
    %v816 = vld [vmem:[#allocation11 + $0x670] sm:$0xff]
    %v817 = vld [vmem:[#allocation11 + $0x678] sm:$0xff]
    %v818 = vld [vmem:[#allocation11 + $0x680] sm:$0xff]
    %v819 = vld [vmem:[#allocation11 + $0x688] sm:$0xff]
    %v820 = vld [vmem:[#allocation11 + $0x690] sm:$0xff]
    %v821 = vld [vmem:[#allocation11 + $0x698] sm:$0xff]
    %v822 = vld [vmem:[#allocation11 + $0x6a0] sm:$0xff]
    %v823 = vld [vmem:[#allocation11 + $0x6a8] sm:$0xff]
    %v824 = vld [vmem:[#allocation11 + $0x6b0] sm:$0xff]
    %v825 = vld [vmem:[#allocation11 + $0x6b8] sm:$0xff]
    %v826 = vld [vmem:[#allocation11 + $0x6c0] sm:$0xff]
    %v827 = vld [vmem:[#allocation11 + $0x6c8] sm:$0xff]
    %v828 = vld [vmem:[#allocation11 + $0x6d0] sm:$0xff]
    %v829 = vld [vmem:[#allocation11 + $0x6d8] sm:$0xff]
    %v830 = vld [vmem:[#allocation11 + $0x6e0] sm:$0xff]
    %v831 = vld [vmem:[#allocation11 + $0x6e8] sm:$0xff]
    %v832 = vld [vmem:[#allocation11 + $0x6f0] sm:$0xff]
    %v833 = vld [vmem:[#allocation11 + $0x6f8] sm:$0xff]
    %v834 = vld [vmem:[#allocation11 + $0x700] sm:$0xff]
    %v835 = vld [vmem:[#allocation11 + $0x708] sm:$0xff]
    %v836 = vld [vmem:[#allocation11 + $0x710] sm:$0xff]
    %v837 = vld [vmem:[#allocation11 + $0x718] sm:$0xff]
    %v838 = vld [vmem:[#allocation11 + $0x720] sm:$0xff]
    %v839 = vld [vmem:[#allocation11 + $0x728] sm:$0xff]
    %v840 = vld [vmem:[#allocation11 + $0x730] sm:$0xff]
    %v841 = vld [vmem:[#allocation11 + $0x738] sm:$0xff]
    %v842 = vld [vmem:[#allocation11 + $0x740] sm:$0xff]
    %v843 = vld [vmem:[#allocation11 + $0x748] sm:$0xff]
    %v844 = vld [vmem:[#allocation11 + $0x750] sm:$0xff]
    %v845 = vld [vmem:[#allocation11 + $0x758] sm:$0xff]
    %v846 = vld [vmem:[#allocation11 + $0x760] sm:$0xff]
    %v847 = vld [vmem:[#allocation11 + $0x768] sm:$0xff]
    %v848 = vld [vmem:[#allocation11 + $0x770] sm:$0xff]
    %v849 = vld [vmem:[#allocation11 + $0x778] sm:$0xff]
    %v850 = vld [vmem:[#allocation11 + $0x780] sm:$0xff]
    %v851 = vld [vmem:[#allocation11 + $0x788] sm:$0xff]
    %v852 = vld [vmem:[#allocation11 + $0x790] sm:$0xff]
    %v853 = vld [vmem:[#allocation11 + $0x798] sm:$0xff]
    %v854 = vld [vmem:[#allocation11 + $0x7a0] sm:$0xff]
    %v855 = vld [vmem:[#allocation11 + $0x7a8] sm:$0xff]
    %v856 = vld [vmem:[#allocation11 + $0x7b0] sm:$0xff]
    %v857 = vld [vmem:[#allocation11 + $0x7b8] sm:$0xff]
    %v858 = vld [vmem:[#allocation11 + $0x7c0] sm:$0xff]
    %v859 = vld [vmem:[#allocation11 + $0x7c8] sm:$0xff]
    %v860 = vld [vmem:[#allocation11 + $0x7d0] sm:$0xff]
    %v861 = vld [vmem:[#allocation11 + $0x7d8] sm:$0xff]
    %v862 = vld [vmem:[#allocation11 + $0x7e0] sm:$0xff]
    %v863 = vld [vmem:[#allocation11 + $0x7e8] sm:$0xff]
    %v864 = vld [vmem:[#allocation11 + $0x7f0] sm:$0xff]
    %v865 = vld [vmem:[#allocation11 + $0x7f8] sm:$0xff]
    %v866 = vld [vmem:[#allocation11 + $0x800] sm:$0xff]
    %v867 = vld [vmem:[#allocation11 + $0x808] sm:$0xff]
    %v868 = vld [vmem:[#allocation11 + $0x810] sm:$0xff]
    %v869 = vld [vmem:[#allocation11 + $0x818] sm:$0xff]
    %v870 = vld [vmem:[#allocation11 + $0x820] sm:$0xff]
    %v871 = vld [vmem:[#allocation11 + $0x828] sm:$0xff]
    %v872 = vld [vmem:[#allocation11 + $0x830] sm:$0xff]
    %v873 = vld [vmem:[#allocation11 + $0x838] sm:$0xff]
    %v874 = vld [vmem:[#allocation11 + $0x840] sm:$0xff]
    %v875 = vld [vmem:[#allocation11 + $0x848] sm:$0xff]
    %v876 = vld [vmem:[#allocation11 + $0x850] sm:$0xff]
    %v877 = vld [vmem:[#allocation11 + $0x858] sm:$0xff]
    %v878 = vld [vmem:[#allocation11 + $0x860] sm:$0xff]
    %v879 = vld [vmem:[#allocation11 + $0x868] sm:$0xff]
    %v880 = vld [vmem:[#allocation11 + $0x870] sm:$0xff]
    %v881 = vld [vmem:[#allocation11 + $0x878] sm:$0xff]
    %v882 = vld [vmem:[#allocation11 + $0x880] sm:$0xff]
    %v883 = vld [vmem:[#allocation11 + $0x888] sm:$0xff]
    %v884 = vld [vmem:[#allocation11 + $0x890] sm:$0xff]
    %v885 = vld [vmem:[#allocation11 + $0x898] sm:$0xff]
    %v886 = vld [vmem:[#allocation11 + $0x8a0] sm:$0xff]
    %v887 = vld [vmem:[#allocation11 + $0x8a8] sm:$0xff]
    %v888 = vld [vmem:[#allocation11 + $0x8b0] sm:$0xff]
    %v889 = vld [vmem:[#allocation11 + $0x8b8] sm:$0xff]
    %v890 = vld [vmem:[#allocation11 + $0x8c0] sm:$0xff]
    %v891 = vld [vmem:[#allocation11 + $0x8c8] sm:$0xff]
    %v892 = vld [vmem:[#allocation11 + $0x8d0] sm:$0xff]
    %v893 = vld [vmem:[#allocation11 + $0x8d8] sm:$0xff]
    %v894 = vld [vmem:[#allocation11 + $0x8e0] sm:$0xff]
    %v895 = vld [vmem:[#allocation11 + $0x8e8] sm:$0xff]
    %v896 = vld [vmem:[#allocation11 + $0x8f0] sm:$0xff]
    %v897 = vld [vmem:[#allocation11 + $0x8f8] sm:$0xff]
    %v898 = vld [vmem:[#allocation13] sm:$0x3f]
    %v900 = vlaneseq
    %v901 = vshrl.u32 %v900, 7
    %v902 = vsub.s32 0, %v901
    %v903 = vrot.slane %v898, %v902
    %v904 = vlaneseq
    %v905 = vshrl.u32 %v904, 7
    %v906 = vsub.s32 1, %v905
    %v907 = vrot.slane %v898, %v906
    %v908 = vlaneseq
    %v909 = vshrl.u32 %v908, 7
    %v910 = vsub.s32 2, %v909
    %v911 = vrot.slane %v898, %v910
    %v912 = vlaneseq
    %v913 = vshrl.u32 %v912, 7
    %v914 = vsub.s32 3, %v913
    %v915 = vrot.slane %v898, %v914
    %v916 = vlaneseq
    %v917 = vshrl.u32 %v916, 7
    %v918 = vsub.s32 4, %v917
    %v919 = vrot.slane %v898, %v918
    %v920 = vlaneseq
    %v921 = vshrl.u32 %v920, 7
    %v922 = vsub.s32 5, %v921
    %v923 = vrot.slane %v898, %v922
    %v1218 = vunpack.c.l.b16 %v610
    %v1219 = vunpack.c.h.b16 %v610
    %v1220 = vunpack.c.l.b16 %v611
    %v1221 = vunpack.c.h.b16 %v611
    %v1222 = vunpack.c.l.b16 %v612
    %v1223 = vunpack.c.h.b16 %v612
    %v1224 = vunpack.c.l.b16 %v613
    %v1225 = vunpack.c.h.b16 %v613
    %v1226 = vunpack.c.l.b16 %v614
    %v1227 = vunpack.c.h.b16 %v614
    %v1228 = vunpack.c.l.b16 %v615
    %v1229 = vunpack.c.h.b16 %v615
    %v1230 = vunpack.c.l.b16 %v616
    %v1231 = vunpack.c.h.b16 %v616
    %v1232 = vunpack.c.l.b16 %v617
    %v1233 = vunpack.c.h.b16 %v617
    %v1234 = vunpack.c.l.b16 %v618
    %v1235 = vunpack.c.h.b16 %v618
    %v1236 = vunpack.c.l.b16 %v619
    %v1237 = vunpack.c.h.b16 %v619
    %v1238 = vunpack.c.l.b16 %v620
    %v1239 = vunpack.c.h.b16 %v620
    %v1240 = vunpack.c.l.b16 %v621
    %v1241 = vunpack.c.h.b16 %v621
    %v1242 = vunpack.c.l.b16 %v622
    %v1243 = vunpack.c.h.b16 %v622
    %v1244 = vunpack.c.l.b16 %v623
    %v1245 = vunpack.c.h.b16 %v623
    %v1246 = vunpack.c.l.b16 %v624
    %v1247 = vunpack.c.h.b16 %v624
    %v1248 = vunpack.c.l.b16 %v625
    %v1249 = vunpack.c.h.b16 %v625
    %v1250 = vunpack.c.l.b16 %v626
    %v1251 = vunpack.c.h.b16 %v626
    %v1252 = vunpack.c.l.b16 %v627
    %v1253 = vunpack.c.h.b16 %v627
    %v1254 = vunpack.c.l.b16 %v628
    %v1255 = vunpack.c.h.b16 %v628
    %v1256 = vunpack.c.l.b16 %v629
    %v1257 = vunpack.c.h.b16 %v629
    %v1258 = vunpack.c.l.b16 %v630
    %v1259 = vunpack.c.h.b16 %v630
    %v1260 = vunpack.c.l.b16 %v631
    %v1261 = vunpack.c.h.b16 %v631
    %v1262 = vunpack.c.l.b16 %v632
    %v1263 = vunpack.c.h.b16 %v632
    %v1264 = vunpack.c.l.b16 %v633
    %v1265 = vunpack.c.h.b16 %v633
    %v1266 = vunpack.c.l.b16 %v634
    %v1267 = vunpack.c.h.b16 %v634
    %v1268 = vunpack.c.l.b16 %v635
    %v1269 = vunpack.c.h.b16 %v635
    %v1270 = vunpack.c.l.b16 %v636
    %v1271 = vunpack.c.h.b16 %v636
    %v1272 = vunpack.c.l.b16 %v637
    %v1273 = vunpack.c.h.b16 %v637
    %v1274 = vunpack.c.l.b16 %v638
    %v1275 = vunpack.c.h.b16 %v638
    %v1276 = vunpack.c.l.b16 %v639
    %v1277 = vunpack.c.h.b16 %v639
    %v1278 = vunpack.c.l.b16 %v640
    %v1279 = vunpack.c.h.b16 %v640
    %v1280 = vunpack.c.l.b16 %v641
    %v1281 = vunpack.c.h.b16 %v641
    %v1282 = vunpack.c.l.b16 %v642
    %v1283 = vunpack.c.h.b16 %v642
    %v1284 = vunpack.c.l.b16 %v643
    %v1285 = vunpack.c.h.b16 %v643
    %v1286 = vunpack.c.l.b16 %v644
    %v1287 = vunpack.c.h.b16 %v644
    %v1288 = vunpack.c.l.b16 %v645
    %v1289 = vunpack.c.h.b16 %v645
    %v1290 = vunpack.c.l.b16 %v646
    %v1291 = vunpack.c.h.b16 %v646
    %v1292 = vunpack.c.l.b16 %v647
    %v1293 = vunpack.c.h.b16 %v647
    %v1294 = vunpack.c.l.b16 %v648
    %v1295 = vunpack.c.h.b16 %v648
    %v1296 = vunpack.c.l.b16 %v649
    %v1297 = vunpack.c.h.b16 %v649
    %v1298 = vunpack.c.l.b16 %v650
    %v1299 = vunpack.c.h.b16 %v650
    %v1300 = vunpack.c.l.b16 %v651
    %v1301 = vunpack.c.h.b16 %v651
    %v1302 = vunpack.c.l.b16 %v652
    %v1303 = vunpack.c.h.b16 %v652
    %v1304 = vunpack.c.l.b16 %v653
    %v1305 = vunpack.c.h.b16 %v653
    %v1306 = vunpack.c.l.b16 %v654
    %v1307 = vunpack.c.h.b16 %v654
    %v1308 = vunpack.c.l.b16 %v655
    %v1309 = vunpack.c.h.b16 %v655
    %v1310 = vunpack.c.l.b16 %v656
    %v1311 = vunpack.c.h.b16 %v656
    %v1312 = vunpack.c.l.b16 %v657
    %v1313 = vunpack.c.h.b16 %v657
    %v1314 = vunpack.c.l.b16 %v658
    %v1315 = vunpack.c.h.b16 %v658
    %v1316 = vunpack.c.l.b16 %v659
    %v1317 = vunpack.c.h.b16 %v659
    %v1318 = vunpack.c.l.b16 %v660
    %v1319 = vunpack.c.h.b16 %v660
    %v1320 = vunpack.c.l.b16 %v661
    %v1321 = vunpack.c.h.b16 %v661
    %v1322 = vunpack.c.l.b16 %v662
    %v1323 = vunpack.c.h.b16 %v662
    %v1324 = vunpack.c.l.b16 %v663
    %v1325 = vunpack.c.h.b16 %v663
    %v1326 = vunpack.c.l.b16 %v664
    %v1327 = vunpack.c.h.b16 %v664
    %v1328 = vunpack.c.l.b16 %v665
    %v1329 = vunpack.c.h.b16 %v665
    %v1330 = vunpack.c.l.b16 %v666
    %v1331 = vunpack.c.h.b16 %v666
    %v1332 = vunpack.c.l.b16 %v667
    %v1333 = vunpack.c.h.b16 %v667
    %v1334 = vunpack.c.l.b16 %v668
    %v1335 = vunpack.c.h.b16 %v668
    %v1336 = vunpack.c.l.b16 %v669
    %v1337 = vunpack.c.h.b16 %v669
    %v1338 = vunpack.c.l.b16 %v670
    %v1339 = vunpack.c.h.b16 %v670
    %v1340 = vunpack.c.l.b16 %v671
    %v1341 = vunpack.c.h.b16 %v671
    %v1342 = vunpack.c.l.b16 %v672
    %v1343 = vunpack.c.h.b16 %v672
    %v1344 = vunpack.c.l.b16 %v673
    %v1345 = vunpack.c.h.b16 %v673
    %v1346 = vunpack.c.l.b16 %v674
    %v1347 = vunpack.c.h.b16 %v674
    %v1348 = vunpack.c.l.b16 %v675
    %v1349 = vunpack.c.h.b16 %v675
    %v1350 = vunpack.c.l.b16 %v676
    %v1351 = vunpack.c.h.b16 %v676
    %v1352 = vunpack.c.l.b16 %v677
    %v1353 = vunpack.c.h.b16 %v677
    %v1354 = vunpack.c.l.b16 %v678
    %v1355 = vunpack.c.h.b16 %v678
    %v1356 = vunpack.c.l.b16 %v679
    %v1357 = vunpack.c.h.b16 %v679
    %v1358 = vunpack.c.l.b16 %v680
    %v1359 = vunpack.c.h.b16 %v680
    %v1360 = vunpack.c.l.b16 %v681
    %v1361 = vunpack.c.h.b16 %v681
    %v1362 = vunpack.c.l.b16 %v682
    %v1363 = vunpack.c.h.b16 %v682
    %v1364 = vunpack.c.l.b16 %v683
    %v1365 = vunpack.c.h.b16 %v683
    %v1366 = vunpack.c.l.b16 %v684
    %v1367 = vunpack.c.h.b16 %v684
    %v1368 = vunpack.c.l.b16 %v685
    %v1369 = vunpack.c.h.b16 %v685
    %v1370 = vunpack.c.l.b16 %v686
    %v1371 = vunpack.c.h.b16 %v686
    %v1372 = vunpack.c.l.b16 %v687
    %v1373 = vunpack.c.h.b16 %v687
    %v1374 = vunpack.c.l.b16 %v688
    %v1375 = vunpack.c.h.b16 %v688
    %v1376 = vunpack.c.l.b16 %v689
    %v1377 = vunpack.c.h.b16 %v689
    %v1378 = vunpack.c.l.b16 %v690
    %v1379 = vunpack.c.h.b16 %v690
    %v1380 = vunpack.c.l.b16 %v691
    %v1381 = vunpack.c.h.b16 %v691
    %v1382 = vunpack.c.l.b16 %v692
    %v1383 = vunpack.c.h.b16 %v692
    %v1384 = vunpack.c.l.b16 %v693
    %v1385 = vunpack.c.h.b16 %v693
    %v1386 = vunpack.c.l.b16 %v694
    %v1387 = vunpack.c.h.b16 %v694
    %v1388 = vunpack.c.l.b16 %v695
    %v1389 = vunpack.c.h.b16 %v695
    %v1390 = vunpack.c.l.b16 %v696
    %v1391 = vunpack.c.h.b16 %v696
    %v1392 = vunpack.c.l.b16 %v697
    %v1393 = vunpack.c.h.b16 %v697
    %v1394 = vunpack.c.l.b16 %v698
    %v1395 = vunpack.c.h.b16 %v698
    %v1396 = vunpack.c.l.b16 %v699
    %v1397 = vunpack.c.h.b16 %v699
    %v1398 = vunpack.c.l.b16 %v700
    %v1399 = vunpack.c.h.b16 %v700
    %v1400 = vunpack.c.l.b16 %v701
    %v1401 = vunpack.c.h.b16 %v701
    %v1402 = vunpack.c.l.b16 %v702
    %v1403 = vunpack.c.h.b16 %v702
    %v1404 = vunpack.c.l.b16 %v703
    %v1405 = vunpack.c.h.b16 %v703
    %v1406 = vunpack.c.l.b16 %v704
    %v1407 = vunpack.c.h.b16 %v704
    %v1408 = vunpack.c.l.b16 %v705
    %v1409 = vunpack.c.h.b16 %v705
    %v1410 = vunpack.c.l.b16 %v706
    %v1411 = vunpack.c.h.b16 %v706
    %v1412 = vunpack.c.l.b16 %v707
    %v1413 = vunpack.c.h.b16 %v707
    %v1414 = vunpack.c.l.b16 %v708
    %v1415 = vunpack.c.h.b16 %v708
    %v1416 = vunpack.c.l.b16 %v709
    %v1417 = vunpack.c.h.b16 %v709
    %v1418 = vunpack.c.l.b16 %v710
    %v1419 = vunpack.c.h.b16 %v710
    %v1420 = vunpack.c.l.b16 %v711
    %v1421 = vunpack.c.h.b16 %v711
    %v1422 = vunpack.c.l.b16 %v712
    %v1423 = vunpack.c.h.b16 %v712
    %v1424 = vunpack.c.l.b16 %v713
    %v1425 = vunpack.c.h.b16 %v713
    %v1426 = vunpack.c.l.b16 %v714
    %v1427 = vunpack.c.h.b16 %v714
    %v1428 = vunpack.c.l.b16 %v715
    %v1429 = vunpack.c.h.b16 %v715
    %v1430 = vunpack.c.l.b16 %v716
    %v1431 = vunpack.c.h.b16 %v716
    %v1432 = vunpack.c.l.b16 %v717
    %v1433 = vunpack.c.h.b16 %v717
    %v1434 = vunpack.c.l.b16 %v718
    %v1435 = vunpack.c.h.b16 %v718
    %v1436 = vunpack.c.l.b16 %v719
    %v1437 = vunpack.c.h.b16 %v719
    %v1438 = vunpack.c.l.b16 %v720
    %v1439 = vunpack.c.h.b16 %v720
    %v1440 = vunpack.c.l.b16 %v721
    %v1441 = vunpack.c.h.b16 %v721
    %v1442 = vunpack.c.l.b16 %v722
    %v1443 = vunpack.c.h.b16 %v722
    %v1444 = vunpack.c.l.b16 %v723
    %v1445 = vunpack.c.h.b16 %v723
    %v1446 = vunpack.c.l.b16 %v724
    %v1447 = vunpack.c.h.b16 %v724
    %v1448 = vunpack.c.l.b16 %v725
    %v1449 = vunpack.c.h.b16 %v725
    %v1450 = vunpack.c.l.b16 %v726
    %v1451 = vunpack.c.h.b16 %v726
    %v1452 = vunpack.c.l.b16 %v727
    %v1453 = vunpack.c.h.b16 %v727
    %v1454 = vunpack.c.l.b16 %v728
    %v1455 = vunpack.c.h.b16 %v728
    %v1456 = vunpack.c.l.b16 %v729
    %v1457 = vunpack.c.h.b16 %v729
    %v1458 = vunpack.c.l.b16 %v730
    %v1459 = vunpack.c.h.b16 %v730
    %v1460 = vunpack.c.l.b16 %v731
    %v1461 = vunpack.c.h.b16 %v731
    %v1462 = vunpack.c.l.b16 %v732
    %v1463 = vunpack.c.h.b16 %v732
    %v1464 = vunpack.c.l.b16 %v733
    %v1465 = vunpack.c.h.b16 %v733
    %v1466 = vunpack.c.l.b16 %v734
    %v1467 = vunpack.c.h.b16 %v734
    %v1468 = vunpack.c.l.b16 %v735
    %v1469 = vunpack.c.h.b16 %v735
    %v1470 = vunpack.c.l.b16 %v736
    %v1471 = vunpack.c.h.b16 %v736
    %v1472 = vunpack.c.l.b16 %v737
    %v1473 = vunpack.c.h.b16 %v737
    %v1474 = vunpack.c.l.b16 %v738
    %v1475 = vunpack.c.h.b16 %v738
    %v1476 = vunpack.c.l.b16 %v739
    %v1477 = vunpack.c.h.b16 %v739
    %v1478 = vunpack.c.l.b16 %v740
    %v1479 = vunpack.c.h.b16 %v740
    %v1480 = vunpack.c.l.b16 %v741
    %v1481 = vunpack.c.h.b16 %v741
    %v1482 = vunpack.c.l.b16 %v742
    %v1483 = vunpack.c.h.b16 %v742
    %v1484 = vunpack.c.l.b16 %v743
    %v1485 = vunpack.c.h.b16 %v743
    %v1486 = vunpack.c.l.b16 %v744
    %v1487 = vunpack.c.h.b16 %v744
    %v1488 = vunpack.c.l.b16 %v745
    %v1489 = vunpack.c.h.b16 %v745
    %v1490 = vunpack.c.l.b16 %v746
    %v1491 = vunpack.c.h.b16 %v746
    %v1492 = vunpack.c.l.b16 %v747
    %v1493 = vunpack.c.h.b16 %v747
    %v1494 = vunpack.c.l.b16 %v748
    %v1495 = vunpack.c.h.b16 %v748
    %v1496 = vunpack.c.l.b16 %v749
    %v1497 = vunpack.c.h.b16 %v749
    %v1498 = vunpack.c.l.b16 %v750
    %v1499 = vunpack.c.h.b16 %v750
    %v1500 = vunpack.c.l.b16 %v751
    %v1501 = vunpack.c.h.b16 %v751
    %v1502 = vunpack.c.l.b16 %v752
    %v1503 = vunpack.c.h.b16 %v752
    %v1504 = vunpack.c.l.b16 %v753
    %v1505 = vunpack.c.h.b16 %v753
    %v1506 = vunpack.c.l.b16 %v754
    %v1507 = vunpack.c.h.b16 %v754
    %v1508 = vunpack.c.l.b16 %v755
    %v1509 = vunpack.c.h.b16 %v755
    %v1510 = vunpack.c.l.b16 %v756
    %v1511 = vunpack.c.h.b16 %v756
    %v1512 = vunpack.c.l.b16 %v757
    %v1513 = vunpack.c.h.b16 %v757
    %v1514 = vunpack.c.l.b16 %v758
    %v1515 = vunpack.c.h.b16 %v758
    %v1516 = vunpack.c.l.b16 %v759
    %v1517 = vunpack.c.h.b16 %v759
    %v1518 = vunpack.c.l.b16 %v760
    %v1519 = vunpack.c.h.b16 %v760
    %v1520 = vunpack.c.l.b16 %v761
    %v1521 = vunpack.c.h.b16 %v761
    %v1522 = vunpack.c.l.b16 %v762
    %v1523 = vunpack.c.h.b16 %v762
    %v1524 = vunpack.c.l.b16 %v763
    %v1525 = vunpack.c.h.b16 %v763
    %v1526 = vunpack.c.l.b16 %v764
    %v1527 = vunpack.c.h.b16 %v764
    %v1528 = vunpack.c.l.b16 %v765
    %v1529 = vunpack.c.h.b16 %v765
    %v1530 = vunpack.c.l.b16 %v766
    %v1531 = vunpack.c.h.b16 %v766
    %v1532 = vunpack.c.l.b16 %v767
    %v1533 = vunpack.c.h.b16 %v767
    %v1534 = vunpack.c.l.b16 %v768
    %v1535 = vunpack.c.h.b16 %v768
    %v1536 = vunpack.c.l.b16 %v769
    %v1537 = vunpack.c.h.b16 %v769
    %v1538 = vunpack.c.l.b16 %v770
    %v1539 = vunpack.c.h.b16 %v770
    %v1540 = vunpack.c.l.b16 %v771
    %v1541 = vunpack.c.h.b16 %v771
    %v1542 = vunpack.c.l.b16 %v772
    %v1543 = vunpack.c.h.b16 %v772
    %v1544 = vunpack.c.l.b16 %v773
    %v1545 = vunpack.c.h.b16 %v773
    %v1546 = vunpack.c.l.b16 %v774
    %v1547 = vunpack.c.h.b16 %v774
    %v1548 = vunpack.c.l.b16 %v775
    %v1549 = vunpack.c.h.b16 %v775
    %v1550 = vunpack.c.l.b16 %v776
    %v1551 = vunpack.c.h.b16 %v776
    %v1552 = vunpack.c.l.b16 %v777
    %v1553 = vunpack.c.h.b16 %v777
    %v1554 = vunpack.c.l.b16 %v778
    %v1555 = vunpack.c.h.b16 %v778
    %v1556 = vunpack.c.l.b16 %v779
    %v1557 = vunpack.c.h.b16 %v779
    %v1558 = vunpack.c.l.b16 %v780
    %v1559 = vunpack.c.h.b16 %v780
    %v1560 = vunpack.c.l.b16 %v781
    %v1561 = vunpack.c.h.b16 %v781
    %v1562 = vunpack.c.l.b16 %v782
    %v1563 = vunpack.c.h.b16 %v782
    %v1564 = vunpack.c.l.b16 %v783
    %v1565 = vunpack.c.h.b16 %v783
    %v1566 = vunpack.c.l.b16 %v784
    %v1567 = vunpack.c.h.b16 %v784
    %v1568 = vunpack.c.l.b16 %v785
    %v1569 = vunpack.c.h.b16 %v785
    %v1570 = vunpack.c.l.b16 %v786
    %v1571 = vunpack.c.h.b16 %v786
    %v1572 = vunpack.c.l.b16 %v787
    %v1573 = vunpack.c.h.b16 %v787
    %v1574 = vunpack.c.l.b16 %v788
    %v1575 = vunpack.c.h.b16 %v788
    %v1576 = vunpack.c.l.b16 %v789
    %v1577 = vunpack.c.h.b16 %v789
    %v1578 = vunpack.c.l.b16 %v790
    %v1579 = vunpack.c.h.b16 %v790
    %v1580 = vunpack.c.l.b16 %v791
    %v1581 = vunpack.c.h.b16 %v791
    %v1582 = vunpack.c.l.b16 %v792
    %v1583 = vunpack.c.h.b16 %v792
    %v1584 = vunpack.c.l.b16 %v793
    %v1585 = vunpack.c.h.b16 %v793
    %v1586 = vunpack.c.l.b16 %v794
    %v1587 = vunpack.c.h.b16 %v794
    %v1588 = vunpack.c.l.b16 %v795
    %v1589 = vunpack.c.h.b16 %v795
    %v1590 = vunpack.c.l.b16 %v796
    %v1591 = vunpack.c.h.b16 %v796
    %v1592 = vunpack.c.l.b16 %v797
    %v1593 = vunpack.c.h.b16 %v797
    %v1594 = vunpack.c.l.b16 %v798
    %v1595 = vunpack.c.h.b16 %v798
    %v1596 = vunpack.c.l.b16 %v799
    %v1597 = vunpack.c.h.b16 %v799
    %v1598 = vunpack.c.l.b16 %v800
    %v1599 = vunpack.c.h.b16 %v800
    %v1600 = vunpack.c.l.b16 %v801
    %v1601 = vunpack.c.h.b16 %v801
    %v1602 = vunpack.c.l.b16 %v802
    %v1603 = vunpack.c.h.b16 %v802
    %v1604 = vunpack.c.l.b16 %v803
    %v1605 = vunpack.c.h.b16 %v803
    %v1606 = vunpack.c.l.b16 %v804
    %v1607 = vunpack.c.h.b16 %v804
    %v1608 = vunpack.c.l.b16 %v805
    %v1609 = vunpack.c.h.b16 %v805
    %v1610 = vunpack.c.l.b16 %v806
    %v1611 = vunpack.c.h.b16 %v806
    %v1612 = vunpack.c.l.b16 %v807
    %v1613 = vunpack.c.h.b16 %v807
    %v1614 = vunpack.c.l.b16 %v808
    %v1615 = vunpack.c.h.b16 %v808
    %v1616 = vunpack.c.l.b16 %v809
    %v1617 = vunpack.c.h.b16 %v809
    %v1618 = vunpack.c.l.b16 %v810
    %v1619 = vunpack.c.h.b16 %v810
    %v1620 = vunpack.c.l.b16 %v811
    %v1621 = vunpack.c.h.b16 %v811
    %v1622 = vunpack.c.l.b16 %v812
    %v1623 = vunpack.c.h.b16 %v812
    %v1624 = vunpack.c.l.b16 %v813
    %v1625 = vunpack.c.h.b16 %v813
    %v1626 = vunpack.c.l.b16 %v814
    %v1627 = vunpack.c.h.b16 %v814
    %v1628 = vunpack.c.l.b16 %v815
    %v1629 = vunpack.c.h.b16 %v815
    %v1630 = vunpack.c.l.b16 %v816
    %v1631 = vunpack.c.h.b16 %v816
    %v1632 = vunpack.c.l.b16 %v817
    %v1633 = vunpack.c.h.b16 %v817
    %v1634 = vunpack.c.l.b16 %v818
    %v1635 = vunpack.c.h.b16 %v818
    %v1636 = vunpack.c.l.b16 %v819
    %v1637 = vunpack.c.h.b16 %v819
    %v1638 = vunpack.c.l.b16 %v820
    %v1639 = vunpack.c.h.b16 %v820
    %v1640 = vunpack.c.l.b16 %v821
    %v1641 = vunpack.c.h.b16 %v821
    %v1642 = vunpack.c.l.b16 %v822
    %v1643 = vunpack.c.h.b16 %v822
    %v1644 = vunpack.c.l.b16 %v823
    %v1645 = vunpack.c.h.b16 %v823
    %v1646 = vunpack.c.l.b16 %v824
    %v1647 = vunpack.c.h.b16 %v824
    %v1648 = vunpack.c.l.b16 %v825
    %v1649 = vunpack.c.h.b16 %v825
    %v1650 = vunpack.c.l.b16 %v826
    %v1651 = vunpack.c.h.b16 %v826
    %v1652 = vunpack.c.l.b16 %v827
    %v1653 = vunpack.c.h.b16 %v827
    %v1654 = vunpack.c.l.b16 %v828
    %v1655 = vunpack.c.h.b16 %v828
    %v1656 = vunpack.c.l.b16 %v829
    %v1657 = vunpack.c.h.b16 %v829
    %v1658 = vunpack.c.l.b16 %v830
    %v1659 = vunpack.c.h.b16 %v830
    %v1660 = vunpack.c.l.b16 %v831
    %v1661 = vunpack.c.h.b16 %v831
    %v1662 = vunpack.c.l.b16 %v832
    %v1663 = vunpack.c.h.b16 %v832
    %v1664 = vunpack.c.l.b16 %v833
    %v1665 = vunpack.c.h.b16 %v833
    %v1666 = vunpack.c.l.b16 %v834
    %v1667 = vunpack.c.h.b16 %v834
    %v1668 = vunpack.c.l.b16 %v835
    %v1669 = vunpack.c.h.b16 %v835
    %v1670 = vunpack.c.l.b16 %v836
    %v1671 = vunpack.c.h.b16 %v836
    %v1672 = vunpack.c.l.b16 %v837
    %v1673 = vunpack.c.h.b16 %v837
    %v1674 = vunpack.c.l.b16 %v838
    %v1675 = vunpack.c.h.b16 %v838
    %v1676 = vunpack.c.l.b16 %v839
    %v1677 = vunpack.c.h.b16 %v839
    %v1678 = vunpack.c.l.b16 %v840
    %v1679 = vunpack.c.h.b16 %v840
    %v1680 = vunpack.c.l.b16 %v841
    %v1681 = vunpack.c.h.b16 %v841
    %v1682 = vunpack.c.l.b16 %v842
    %v1683 = vunpack.c.h.b16 %v842
    %v1684 = vunpack.c.l.b16 %v843
    %v1685 = vunpack.c.h.b16 %v843
    %v1686 = vunpack.c.l.b16 %v844
    %v1687 = vunpack.c.h.b16 %v844
    %v1688 = vunpack.c.l.b16 %v845
    %v1689 = vunpack.c.h.b16 %v845
    %v1690 = vunpack.c.l.b16 %v846
    %v1691 = vunpack.c.h.b16 %v846
    %v1692 = vunpack.c.l.b16 %v847
    %v1693 = vunpack.c.h.b16 %v847
    %v1694 = vunpack.c.l.b16 %v848
    %v1695 = vunpack.c.h.b16 %v848
    %v1696 = vunpack.c.l.b16 %v849
    %v1697 = vunpack.c.h.b16 %v849
    %v1698 = vunpack.c.l.b16 %v850
    %v1699 = vunpack.c.h.b16 %v850
    %v1700 = vunpack.c.l.b16 %v851
    %v1701 = vunpack.c.h.b16 %v851
    %v1702 = vunpack.c.l.b16 %v852
    %v1703 = vunpack.c.h.b16 %v852
    %v1704 = vunpack.c.l.b16 %v853
    %v1705 = vunpack.c.h.b16 %v853
    %v1706 = vunpack.c.l.b16 %v854
    %v1707 = vunpack.c.h.b16 %v854
    %v1708 = vunpack.c.l.b16 %v855
    %v1709 = vunpack.c.h.b16 %v855
    %v1710 = vunpack.c.l.b16 %v856
    %v1711 = vunpack.c.h.b16 %v856
    %v1712 = vunpack.c.l.b16 %v857
    %v1713 = vunpack.c.h.b16 %v857
    %v1714 = vunpack.c.l.b16 %v858
    %v1715 = vunpack.c.h.b16 %v858
    %v1716 = vunpack.c.l.b16 %v859
    %v1717 = vunpack.c.h.b16 %v859
    %v1718 = vunpack.c.l.b16 %v860
    %v1719 = vunpack.c.h.b16 %v860
    %v1720 = vunpack.c.l.b16 %v861
    %v1721 = vunpack.c.h.b16 %v861
    %v1722 = vunpack.c.l.b16 %v862
    %v1723 = vunpack.c.h.b16 %v862
    %v1724 = vunpack.c.l.b16 %v863
    %v1725 = vunpack.c.h.b16 %v863
    %v1726 = vunpack.c.l.b16 %v864
    %v1727 = vunpack.c.h.b16 %v864
    %v1728 = vunpack.c.l.b16 %v865
    %v1729 = vunpack.c.h.b16 %v865
    %v1730 = vunpack.c.l.b16 %v866
    %v1731 = vunpack.c.h.b16 %v866
    %v1732 = vunpack.c.l.b16 %v867
    %v1733 = vunpack.c.h.b16 %v867
    %v1734 = vunpack.c.l.b16 %v868
    %v1735 = vunpack.c.h.b16 %v868
    %v1736 = vunpack.c.l.b16 %v869
    %v1737 = vunpack.c.h.b16 %v869
    %v1738 = vunpack.c.l.b16 %v870
    %v1739 = vunpack.c.h.b16 %v870
    %v1740 = vunpack.c.l.b16 %v871
    %v1741 = vunpack.c.h.b16 %v871
    %v1742 = vunpack.c.l.b16 %v872
    %v1743 = vunpack.c.h.b16 %v872
    %v1744 = vunpack.c.l.b16 %v873
    %v1745 = vunpack.c.h.b16 %v873
    %v1746 = vunpack.c.l.b16 %v874
    %v1747 = vunpack.c.h.b16 %v874
    %v1748 = vunpack.c.l.b16 %v875
    %v1749 = vunpack.c.h.b16 %v875
    %v1750 = vunpack.c.l.b16 %v876
    %v1751 = vunpack.c.h.b16 %v876
    %v1752 = vunpack.c.l.b16 %v877
    %v1753 = vunpack.c.h.b16 %v877
    %v1754 = vunpack.c.l.b16 %v878
    %v1755 = vunpack.c.h.b16 %v878
    %v1756 = vunpack.c.l.b16 %v879
    %v1757 = vunpack.c.h.b16 %v879
    %v1758 = vunpack.c.l.b16 %v880
    %v1759 = vunpack.c.h.b16 %v880
    %v1760 = vunpack.c.l.b16 %v881
    %v1761 = vunpack.c.h.b16 %v881
    %v1762 = vunpack.c.l.b16 %v882
    %v1763 = vunpack.c.h.b16 %v882
    %v1764 = vunpack.c.l.b16 %v883
    %v1765 = vunpack.c.h.b16 %v883
    %v1766 = vunpack.c.l.b16 %v884
    %v1767 = vunpack.c.h.b16 %v884
    %v1768 = vunpack.c.l.b16 %v885
    %v1769 = vunpack.c.h.b16 %v885
    %v1770 = vunpack.c.l.b16 %v886
    %v1771 = vunpack.c.h.b16 %v886
    %v1772 = vunpack.c.l.b16 %v887
    %v1773 = vunpack.c.h.b16 %v887
    %v1774 = vunpack.c.l.b16 %v888
    %v1775 = vunpack.c.h.b16 %v888
    %v1776 = vunpack.c.l.b16 %v889
    %v1777 = vunpack.c.h.b16 %v889
    %v1778 = vunpack.c.l.b16 %v890
    %v1779 = vunpack.c.h.b16 %v890
    %v1780 = vunpack.c.l.b16 %v891
    %v1781 = vunpack.c.h.b16 %v891
    %v1782 = vunpack.c.l.b16 %v892
    %v1783 = vunpack.c.h.b16 %v892
    %v1784 = vunpack.c.l.b16 %v893
    %v1785 = vunpack.c.h.b16 %v893
    %v1786 = vunpack.c.l.b16 %v894
    %v1787 = vunpack.c.h.b16 %v894
    %v1788 = vunpack.c.l.b16 %v895
    %v1789 = vunpack.c.h.b16 %v895
    %v1790 = vunpack.c.l.b16 %v896
    %v1791 = vunpack.c.h.b16 %v896
    %v1792 = vunpack.c.l.b16 %v897
    %v1793 = vunpack.c.h.b16 %v897
    %v1794 = vpack.c.b16 %v1224, %v1218
    %v1795 = vpack.c.b16 %v1225, %v1219
    %v1796 = vpack.c.b16 %v1226, %v1220
    %v1797 = vpack.c.b16 %v1227, %v1221
    %v1798 = vpack.c.b16 %v1228, %v1222
    %v1799 = vpack.c.b16 %v1229, %v1223
    %v1800 = vpack.c.b16 %v1236, %v1230
    %v1801 = vpack.c.b16 %v1237, %v1231
    %v1802 = vpack.c.b16 %v1238, %v1232
    %v1803 = vpack.c.b16 %v1239, %v1233
    %v1804 = vpack.c.b16 %v1240, %v1234
    %v1805 = vpack.c.b16 %v1241, %v1235
    %v1806 = vpack.c.b16 %v1248, %v1242
    %v1807 = vpack.c.b16 %v1249, %v1243
    %v1808 = vpack.c.b16 %v1250, %v1244
    %v1809 = vpack.c.b16 %v1251, %v1245
    %v1810 = vpack.c.b16 %v1252, %v1246
    %v1811 = vpack.c.b16 %v1253, %v1247
    %v1812 = vpack.c.b16 %v1260, %v1254
    %v1813 = vpack.c.b16 %v1261, %v1255
    %v1814 = vpack.c.b16 %v1262, %v1256
    %v1815 = vpack.c.b16 %v1263, %v1257
    %v1816 = vpack.c.b16 %v1264, %v1258
    %v1817 = vpack.c.b16 %v1265, %v1259
    %v1818 = vpack.c.b16 %v1272, %v1266
    %v1819 = vpack.c.b16 %v1273, %v1267
    %v1820 = vpack.c.b16 %v1274, %v1268
    %v1821 = vpack.c.b16 %v1275, %v1269
    %v1822 = vpack.c.b16 %v1276, %v1270
    %v1823 = vpack.c.b16 %v1277, %v1271
    %v1824 = vpack.c.b16 %v1284, %v1278
    %v1825 = vpack.c.b16 %v1285, %v1279
    %v1826 = vpack.c.b16 %v1286, %v1280
    %v1827 = vpack.c.b16 %v1287, %v1281
    %v1828 = vpack.c.b16 %v1288, %v1282
    %v1829 = vpack.c.b16 %v1289, %v1283
    %v1830 = vpack.c.b16 %v1296, %v1290
    %v1831 = vpack.c.b16 %v1297, %v1291
    %v1832 = vpack.c.b16 %v1298, %v1292
    %v1833 = vpack.c.b16 %v1299, %v1293
    %v1834 = vpack.c.b16 %v1300, %v1294
    %v1835 = vpack.c.b16 %v1301, %v1295
    %v1836 = vpack.c.b16 %v1308, %v1302
    %v1837 = vpack.c.b16 %v1309, %v1303
    %v1838 = vpack.c.b16 %v1310, %v1304
    %v1839 = vpack.c.b16 %v1311, %v1305
    %v1840 = vpack.c.b16 %v1312, %v1306
    %v1841 = vpack.c.b16 %v1313, %v1307
    %v1842 = vpack.c.b16 %v1320, %v1314
    %v1843 = vpack.c.b16 %v1321, %v1315
    %v1844 = vpack.c.b16 %v1322, %v1316
    %v1845 = vpack.c.b16 %v1323, %v1317
    %v1846 = vpack.c.b16 %v1324, %v1318
    %v1847 = vpack.c.b16 %v1325, %v1319
    %v1848 = vpack.c.b16 %v1332, %v1326
    %v1849 = vpack.c.b16 %v1333, %v1327
    %v1850 = vpack.c.b16 %v1334, %v1328
    %v1851 = vpack.c.b16 %v1335, %v1329
    %v1852 = vpack.c.b16 %v1336, %v1330
    %v1853 = vpack.c.b16 %v1337, %v1331
    %v1854 = vpack.c.b16 %v1344, %v1338
    %v1855 = vpack.c.b16 %v1345, %v1339
    %v1856 = vpack.c.b16 %v1346, %v1340
    %v1857 = vpack.c.b16 %v1347, %v1341
    %v1858 = vpack.c.b16 %v1348, %v1342
    %v1859 = vpack.c.b16 %v1349, %v1343
    %v1860 = vpack.c.b16 %v1356, %v1350
    %v1861 = vpack.c.b16 %v1357, %v1351
    %v1862 = vpack.c.b16 %v1358, %v1352
    %v1863 = vpack.c.b16 %v1359, %v1353
    %v1864 = vpack.c.b16 %v1360, %v1354
    %v1865 = vpack.c.b16 %v1361, %v1355
    %v1866 = vpack.c.b16 %v1368, %v1362
    %v1867 = vpack.c.b16 %v1369, %v1363
    %v1868 = vpack.c.b16 %v1370, %v1364
    %v1869 = vpack.c.b16 %v1371, %v1365
    %v1870 = vpack.c.b16 %v1372, %v1366
    %v1871 = vpack.c.b16 %v1373, %v1367
    %v1872 = vpack.c.b16 %v1380, %v1374
    %v1873 = vpack.c.b16 %v1381, %v1375
    %v1874 = vpack.c.b16 %v1382, %v1376
    %v1875 = vpack.c.b16 %v1383, %v1377
    %v1876 = vpack.c.b16 %v1384, %v1378
    %v1877 = vpack.c.b16 %v1385, %v1379
    %v1878 = vpack.c.b16 %v1392, %v1386
    %v1879 = vpack.c.b16 %v1393, %v1387
    %v1880 = vpack.c.b16 %v1394, %v1388
    %v1881 = vpack.c.b16 %v1395, %v1389
    %v1882 = vpack.c.b16 %v1396, %v1390
    %v1883 = vpack.c.b16 %v1397, %v1391
    %v1884 = vpack.c.b16 %v1404, %v1398
    %v1885 = vpack.c.b16 %v1405, %v1399
    %v1886 = vpack.c.b16 %v1406, %v1400
    %v1887 = vpack.c.b16 %v1407, %v1401
    %v1888 = vpack.c.b16 %v1408, %v1402
    %v1889 = vpack.c.b16 %v1409, %v1403
    %v1890 = vpack.c.b16 %v1416, %v1410
    %v1891 = vpack.c.b16 %v1417, %v1411
    %v1892 = vpack.c.b16 %v1418, %v1412
    %v1893 = vpack.c.b16 %v1419, %v1413
    %v1894 = vpack.c.b16 %v1420, %v1414
    %v1895 = vpack.c.b16 %v1421, %v1415
    %v1896 = vpack.c.b16 %v1428, %v1422
    %v1897 = vpack.c.b16 %v1429, %v1423
    %v1898 = vpack.c.b16 %v1430, %v1424
    %v1899 = vpack.c.b16 %v1431, %v1425
    %v1900 = vpack.c.b16 %v1432, %v1426
    %v1901 = vpack.c.b16 %v1433, %v1427
    %v1902 = vpack.c.b16 %v1440, %v1434
    %v1903 = vpack.c.b16 %v1441, %v1435
    %v1904 = vpack.c.b16 %v1442, %v1436
    %v1905 = vpack.c.b16 %v1443, %v1437
    %v1906 = vpack.c.b16 %v1444, %v1438
    %v1907 = vpack.c.b16 %v1445, %v1439
    %v1908 = vpack.c.b16 %v1452, %v1446
    %v1909 = vpack.c.b16 %v1453, %v1447
    %v1910 = vpack.c.b16 %v1454, %v1448
    %v1911 = vpack.c.b16 %v1455, %v1449
    %v1912 = vpack.c.b16 %v1456, %v1450
    %v1913 = vpack.c.b16 %v1457, %v1451
    %v1914 = vpack.c.b16 %v1464, %v1458
    %v1915 = vpack.c.b16 %v1465, %v1459
    %v1916 = vpack.c.b16 %v1466, %v1460
    %v1917 = vpack.c.b16 %v1467, %v1461
    %v1918 = vpack.c.b16 %v1468, %v1462
    %v1919 = vpack.c.b16 %v1469, %v1463
    %v1920 = vpack.c.b16 %v1476, %v1470
    %v1921 = vpack.c.b16 %v1477, %v1471
    %v1922 = vpack.c.b16 %v1478, %v1472
    %v1923 = vpack.c.b16 %v1479, %v1473
    %v1924 = vpack.c.b16 %v1480, %v1474
    %v1925 = vpack.c.b16 %v1481, %v1475
    %v1926 = vpack.c.b16 %v1488, %v1482
    %v1927 = vpack.c.b16 %v1489, %v1483
    %v1928 = vpack.c.b16 %v1490, %v1484
    %v1929 = vpack.c.b16 %v1491, %v1485
    %v1930 = vpack.c.b16 %v1492, %v1486
    %v1931 = vpack.c.b16 %v1493, %v1487
    %v1932 = vpack.c.b16 %v1500, %v1494
    %v1933 = vpack.c.b16 %v1501, %v1495
    %v1934 = vpack.c.b16 %v1502, %v1496
    %v1935 = vpack.c.b16 %v1503, %v1497
    %v1936 = vpack.c.b16 %v1504, %v1498
    %v1937 = vpack.c.b16 %v1505, %v1499
    %v1938 = vpack.c.b16 %v1512, %v1506
    %v1939 = vpack.c.b16 %v1513, %v1507
    %v1940 = vpack.c.b16 %v1514, %v1508
    %v1941 = vpack.c.b16 %v1515, %v1509
    %v1942 = vpack.c.b16 %v1516, %v1510
    %v1943 = vpack.c.b16 %v1517, %v1511
    %v1944 = vpack.c.b16 %v1524, %v1518
    %v1945 = vpack.c.b16 %v1525, %v1519
    %v1946 = vpack.c.b16 %v1526, %v1520
    %v1947 = vpack.c.b16 %v1527, %v1521
    %v1948 = vpack.c.b16 %v1528, %v1522
    %v1949 = vpack.c.b16 %v1529, %v1523
    %v1950 = vpack.c.b16 %v1536, %v1530
    %v1951 = vpack.c.b16 %v1537, %v1531
    %v1952 = vpack.c.b16 %v1538, %v1532
    %v1953 = vpack.c.b16 %v1539, %v1533
    %v1954 = vpack.c.b16 %v1540, %v1534
    %v1955 = vpack.c.b16 %v1541, %v1535
    %v1956 = vpack.c.b16 %v1548, %v1542
    %v1957 = vpack.c.b16 %v1549, %v1543
    %v1958 = vpack.c.b16 %v1550, %v1544
    %v1959 = vpack.c.b16 %v1551, %v1545
    %v1960 = vpack.c.b16 %v1552, %v1546
    %v1961 = vpack.c.b16 %v1553, %v1547
    %v1962 = vpack.c.b16 %v1560, %v1554
    %v1963 = vpack.c.b16 %v1561, %v1555
    %v1964 = vpack.c.b16 %v1562, %v1556
    %v1965 = vpack.c.b16 %v1563, %v1557
    %v1966 = vpack.c.b16 %v1564, %v1558
    %v1967 = vpack.c.b16 %v1565, %v1559
    %v1968 = vpack.c.b16 %v1572, %v1566
    %v1969 = vpack.c.b16 %v1573, %v1567
    %v1970 = vpack.c.b16 %v1574, %v1568
    %v1971 = vpack.c.b16 %v1575, %v1569
    %v1972 = vpack.c.b16 %v1576, %v1570
    %v1973 = vpack.c.b16 %v1577, %v1571
    %v1974 = vpack.c.b16 %v1584, %v1578
    %v1975 = vpack.c.b16 %v1585, %v1579
    %v1976 = vpack.c.b16 %v1586, %v1580
    %v1977 = vpack.c.b16 %v1587, %v1581
    %v1978 = vpack.c.b16 %v1588, %v1582
    %v1979 = vpack.c.b16 %v1589, %v1583
    %v1980 = vpack.c.b16 %v1596, %v1590
    %v1981 = vpack.c.b16 %v1597, %v1591
    %v1982 = vpack.c.b16 %v1598, %v1592
    %v1983 = vpack.c.b16 %v1599, %v1593
    %v1984 = vpack.c.b16 %v1600, %v1594
    %v1985 = vpack.c.b16 %v1601, %v1595
    %v1986 = vpack.c.b16 %v1608, %v1602
    %v1987 = vpack.c.b16 %v1609, %v1603
    %v1988 = vpack.c.b16 %v1610, %v1604
    %v1989 = vpack.c.b16 %v1611, %v1605
    %v1990 = vpack.c.b16 %v1612, %v1606
    %v1991 = vpack.c.b16 %v1613, %v1607
    %v1992 = vpack.c.b16 %v1620, %v1614
    %v1993 = vpack.c.b16 %v1621, %v1615
    %v1994 = vpack.c.b16 %v1622, %v1616
    %v1995 = vpack.c.b16 %v1623, %v1617
    %v1996 = vpack.c.b16 %v1624, %v1618
    %v1997 = vpack.c.b16 %v1625, %v1619
    %v1998 = vpack.c.b16 %v1632, %v1626
    %v1999 = vpack.c.b16 %v1633, %v1627
    %v2000 = vpack.c.b16 %v1634, %v1628
    %v2001 = vpack.c.b16 %v1635, %v1629
    %v2002 = vpack.c.b16 %v1636, %v1630
    %v2003 = vpack.c.b16 %v1637, %v1631
    %v2004 = vpack.c.b16 %v1644, %v1638
    %v2005 = vpack.c.b16 %v1645, %v1639
    %v2006 = vpack.c.b16 %v1646, %v1640
    %v2007 = vpack.c.b16 %v1647, %v1641
    %v2008 = vpack.c.b16 %v1648, %v1642
    %v2009 = vpack.c.b16 %v1649, %v1643
    %v2010 = vpack.c.b16 %v1656, %v1650
    %v2011 = vpack.c.b16 %v1657, %v1651
    %v2012 = vpack.c.b16 %v1658, %v1652
    %v2013 = vpack.c.b16 %v1659, %v1653
    %v2014 = vpack.c.b16 %v1660, %v1654
    %v2015 = vpack.c.b16 %v1661, %v1655
    %v2016 = vpack.c.b16 %v1668, %v1662
    %v2017 = vpack.c.b16 %v1669, %v1663
    %v2018 = vpack.c.b16 %v1670, %v1664
    %v2019 = vpack.c.b16 %v1671, %v1665
    %v2020 = vpack.c.b16 %v1672, %v1666
    %v2021 = vpack.c.b16 %v1673, %v1667
    %v2022 = vpack.c.b16 %v1680, %v1674
    %v2023 = vpack.c.b16 %v1681, %v1675
    %v2024 = vpack.c.b16 %v1682, %v1676
    %v2025 = vpack.c.b16 %v1683, %v1677
    %v2026 = vpack.c.b16 %v1684, %v1678
    %v2027 = vpack.c.b16 %v1685, %v1679
    %v2028 = vpack.c.b16 %v1692, %v1686
    %v2029 = vpack.c.b16 %v1693, %v1687
    %v2030 = vpack.c.b16 %v1694, %v1688
    %v2031 = vpack.c.b16 %v1695, %v1689
    %v2032 = vpack.c.b16 %v1696, %v1690
    %v2033 = vpack.c.b16 %v1697, %v1691
    %v2034 = vpack.c.b16 %v1704, %v1698
    %v2035 = vpack.c.b16 %v1705, %v1699
    %v2036 = vpack.c.b16 %v1706, %v1700
    %v2037 = vpack.c.b16 %v1707, %v1701
    %v2038 = vpack.c.b16 %v1708, %v1702
    %v2039 = vpack.c.b16 %v1709, %v1703
    %v2040 = vpack.c.b16 %v1716, %v1710
    %v2041 = vpack.c.b16 %v1717, %v1711
    %v2042 = vpack.c.b16 %v1718, %v1712
    %v2043 = vpack.c.b16 %v1719, %v1713
    %v2044 = vpack.c.b16 %v1720, %v1714
    %v2045 = vpack.c.b16 %v1721, %v1715
    %v2046 = vpack.c.b16 %v1728, %v1722
    %v2047 = vpack.c.b16 %v1729, %v1723
    %v2048 = vpack.c.b16 %v1730, %v1724
    %v2049 = vpack.c.b16 %v1731, %v1725
    %v2050 = vpack.c.b16 %v1732, %v1726
    %v2051 = vpack.c.b16 %v1733, %v1727
    %v2052 = vpack.c.b16 %v1740, %v1734
    %v2053 = vpack.c.b16 %v1741, %v1735
    %v2054 = vpack.c.b16 %v1742, %v1736
    %v2055 = vpack.c.b16 %v1743, %v1737
    %v2056 = vpack.c.b16 %v1744, %v1738
    %v2057 = vpack.c.b16 %v1745, %v1739
    %v2058 = vpack.c.b16 %v1752, %v1746
    %v2059 = vpack.c.b16 %v1753, %v1747
    %v2060 = vpack.c.b16 %v1754, %v1748
    %v2061 = vpack.c.b16 %v1755, %v1749
    %v2062 = vpack.c.b16 %v1756, %v1750
    %v2063 = vpack.c.b16 %v1757, %v1751
    %v2064 = vpack.c.b16 %v1764, %v1758
    %v2065 = vpack.c.b16 %v1765, %v1759
    %v2066 = vpack.c.b16 %v1766, %v1760
    %v2067 = vpack.c.b16 %v1767, %v1761
    %v2068 = vpack.c.b16 %v1768, %v1762
    %v2069 = vpack.c.b16 %v1769, %v1763
    %v2070 = vpack.c.b16 %v1776, %v1770
    %v2071 = vpack.c.b16 %v1777, %v1771
    %v2072 = vpack.c.b16 %v1778, %v1772
    %v2073 = vpack.c.b16 %v1779, %v1773
    %v2074 = vpack.c.b16 %v1780, %v1774
    %v2075 = vpack.c.b16 %v1781, %v1775
    %v2076 = vpack.c.b16 %v1788, %v1782
    %v2077 = vpack.c.b16 %v1789, %v1783
    %v2078 = vpack.c.b16 %v1790, %v1784
    %v2079 = vpack.c.b16 %v1791, %v1785
    %v2080 = vpack.c.b16 %v1792, %v1786
    %v2081 = vpack.c.b16 %v1793, %v1787
    %2370 = vmatprep.subr.bf16.mxu0 %v1795
    %2371 = vmatpush1.bf16.msra.mxu0 %v1794
    %2372 = vmatprep.subr.bf16.mxu0 %v1801
    %2373 = vmatpush1.bf16.msra.mxu0 %v1800
    %2374 = vmatprep.subr.bf16.mxu0 %v1807
    %2375 = vmatpush1.bf16.msra.mxu0 %v1806
    %2376 = vmatprep.subr.bf16.mxu0 %v1813
    %2377 = vmatpush1.bf16.msra.mxu0 %v1812
    %2378 = vmatprep.subr.bf16.mxu0 %v1819
    %2379 = vmatpush1.bf16.msra.mxu0 %v1818
    %2380 = vmatprep.subr.bf16.mxu0 %v1825
    %2381 = vmatpush1.bf16.msra.mxu0 %v1824
    %2382 = vmatprep.subr.bf16.mxu0 %v1831
    %2383 = vmatpush1.bf16.msra.mxu0 %v1830
    %2384 = vmatprep.subr.bf16.mxu0 %v1837
    %2385 = vmatpush1.bf16.msra.mxu0 %v1836
    %2386 = vmatprep.subr.bf16.mxu0 %v1843
    %2387 = vmatpush1.bf16.msra.mxu0 %v1842
    %2388 = vmatprep.subr.bf16.mxu0 %v1849
    %2389 = vmatpush1.bf16.msra.mxu0 %v1848
    %2390 = vmatprep.subr.bf16.mxu0 %v1855
    %2391 = vmatpush1.bf16.msra.mxu0 %v1854
    %2392 = vmatprep.subr.bf16.mxu0 %v1861
    %2393 = vmatpush1.bf16.msra.mxu0 %v1860
    %2394 = vmatprep.subr.bf16.mxu0 %v1867
    %2395 = vmatpush1.bf16.msra.mxu0 %v1866
    %2396 = vmatprep.subr.bf16.mxu0 %v1873
    %2397 = vmatpush1.bf16.msra.mxu0 %v1872
    %2398 = vmatprep.subr.bf16.mxu0 %v1879
    %2399 = vmatpush1.bf16.msra.mxu0 %v1878
    %2400 = vmatprep.subr.bf16.mxu0 %v1885
    %2401 = vmatpush1.bf16.msra.mxu0 %v1884
    %2402 = vmatprep.mubr.bf16.mxu0 %v605
    %2403 = vmatmul.mubr.bf16.gmra.mrb[0].mxu0 %v604
    %v2404 = vpop.f32.mrb[0].mxu0
    %v2405 = vadd.f32 %v903, %v2404
    %v2406 = vpop.f32.mrb[0].mxu0
    %v2407 = vadd.f32 %v907, %v2406
    %v2408 = vpop.f32.mrb[0].mxu0
    %v2409 = vpop.f32.mrb[0].mxu0
    %2410 = vdwg.mxu0
    %2411 = vmatprep.subr.bf16.mxu0 %v1891
    %2412 = vmatpush1.bf16.msra.mxu0 %v1890
    %2413 = vmatprep.subr.bf16.mxu0 %v1897
    %2414 = vmatpush1.bf16.msra.mxu0 %v1896
    %2415 = vmatprep.subr.bf16.mxu0 %v1903
    %2416 = vmatpush1.bf16.msra.mxu0 %v1902
    %2417 = vmatprep.subr.bf16.mxu0 %v1909
    %2418 = vmatpush1.bf16.msra.mxu0 %v1908
    %2419 = vmatprep.subr.bf16.mxu0 %v1915
    %2420 = vmatpush1.bf16.msra.mxu0 %v1914
    %2421 = vmatprep.subr.bf16.mxu0 %v1921
    %2422 = vmatpush1.bf16.msra.mxu0 %v1920
    %2423 = vmatprep.subr.bf16.mxu0 %v1927
    %2424 = vmatpush1.bf16.msra.mxu0 %v1926
    %2425 = vmatprep.subr.bf16.mxu0 %v1933
    %2426 = vmatpush1.bf16.msra.mxu0 %v1932
    %2427 = vmatprep.subr.bf16.mxu0 %v1939
    %2428 = vmatpush1.bf16.msra.mxu0 %v1938
    %2429 = vmatprep.subr.bf16.mxu0 %v1945
    %2430 = vmatpush1.bf16.msra.mxu0 %v1944
    %2431 = vmatprep.subr.bf16.mxu0 %v1951
    %2432 = vmatpush1.bf16.msra.mxu0 %v1950
    %2433 = vmatprep.subr.bf16.mxu0 %v1957
    %2434 = vmatpush1.bf16.msra.mxu0 %v1956
    %2435 = vmatprep.subr.bf16.mxu0 %v1963
    %2436 = vmatpush1.bf16.msra.mxu0 %v1962
    %2437 = vmatprep.subr.bf16.mxu0 %v1969
    %2438 = vmatpush1.bf16.msra.mxu0 %v1968
    %2439 = vmatprep.subr.bf16.mxu0 %v1975
    %2440 = vmatpush1.bf16.msra.mxu0 %v1974
    %2441 = vmatprep.subr.bf16.mxu0 %v1981
    %2442 = vmatpush1.bf16.msra.mxu0 %v1980
    %2443 = vmatprep.mubr.bf16.mxu0 %v607
    %2444 = vmatmul.mubr.bf16.gmra.mrb[0].mxu0 %v606
    %v2445 = vpop.f32.mrb[0].mxu0
    %v2446 = vadd.f32 %v2405, %v2445
    %v2447 = vpop.f32.mrb[0].mxu0
    %v2448 = vadd.f32 %v2407, %v2447
    %v2449 = vpop.f32.mrb[0].mxu0
    %v2450 = vpop.f32.mrb[0].mxu0
    %2451 = vdwg.mxu0
    %2452 = vmatprep.subr.bf16.mxu0 %v1987
    %2453 = vmatpush1.bf16.msra.mxu0 %v1986
    %2454 = vmatprep.subr.bf16.mxu0 %v1993
    %2455 = vmatpush1.bf16.msra.mxu0 %v1992
    %2456 = vmatprep.subr.bf16.mxu0 %v1999
    %2457 = vmatpush1.bf16.msra.mxu0 %v1998
    %2458 = vmatprep.subr.bf16.mxu0 %v2005
    %2459 = vmatpush1.bf16.msra.mxu0 %v2004
    %2460 = vmatprep.subr.bf16.mxu0 %v2011
    %2461 = vmatpush1.bf16.msra.mxu0 %v2010
    %2462 = vmatprep.subr.bf16.mxu0 %v2017
    %2463 = vmatpush1.bf16.msra.mxu0 %v2016
    %2464 = vmatprep.subr.bf16.mxu0 %v2023
    %2465 = vmatpush1.bf16.msra.mxu0 %v2022
    %2466 = vmatprep.subr.bf16.mxu0 %v2029
    %2467 = vmatpush1.bf16.msra.mxu0 %v2028
    %2468 = vmatprep.subr.bf16.mxu0 %v2035
    %2469 = vmatpush1.bf16.msra.mxu0 %v2034
    %2470 = vmatprep.subr.bf16.mxu0 %v2041
    %2471 = vmatpush1.bf16.msra.mxu0 %v2040
    %2472 = vmatprep.subr.bf16.mxu0 %v2047
    %2473 = vmatpush1.bf16.msra.mxu0 %v2046
    %2474 = vmatprep.subr.bf16.mxu0 %v2053
    %2475 = vmatpush1.bf16.msra.mxu0 %v2052
    %2476 = vmatprep.subr.bf16.mxu0 %v2059
    %2477 = vmatpush1.bf16.msra.mxu0 %v2058
    %2478 = vmatprep.subr.bf16.mxu0 %v2065
    %2479 = vmatpush1.bf16.msra.mxu0 %v2064
    %2480 = vmatprep.subr.bf16.mxu0 %v2071
    %2481 = vmatpush1.bf16.msra.mxu0 %v2070
    %2482 = vmatprep.subr.bf16.mxu0 %v2077
    %2483 = vmatpush1.bf16.msra.mxu0 %v2076
    %2484 = vmatprep.mubr.bf16.mxu0 %v609
    %2485 = vmatmul.mubr.bf16.gmra.mrb[0].mxu0 %v608
    %v2486 = vpop.f32.mrb[0].mxu0
    %v2487 = vadd.f32 %v2446, %v2486
    %v2488 = vpop.f32.mrb[0].mxu0
    %v2489 = vadd.f32 %v2448, %v2488
    %v2490 = vpop.f32.mrb[0].mxu0
    %v2491 = vpop.f32.mrb[0].mxu0
    %2492 = vdwg.mxu0
    %2493 = vmatprep.subr.bf16.mxu0 %v1797
    %2494 = vmatpush1.bf16.msra.mxu0 %v1796
    %2495 = vmatprep.subr.bf16.mxu0 %v1803
    %2496 = vmatpush1.bf16.msra.mxu0 %v1802
    %2497 = vmatprep.subr.bf16.mxu0 %v1809
    %2498 = vmatpush1.bf16.msra.mxu0 %v1808
    %2499 = vmatprep.subr.bf16.mxu0 %v1815
    %2500 = vmatpush1.bf16.msra.mxu0 %v1814
    %2501 = vmatprep.subr.bf16.mxu0 %v1821
    %2502 = vmatpush1.bf16.msra.mxu0 %v1820
    %2503 = vmatprep.subr.bf16.mxu0 %v1827
    %2504 = vmatpush1.bf16.msra.mxu0 %v1826
    %2505 = vmatprep.subr.bf16.mxu0 %v1833
    %2506 = vmatpush1.bf16.msra.mxu0 %v1832
    %2507 = vmatprep.subr.bf16.mxu0 %v1839
    %2508 = vmatpush1.bf16.msra.mxu0 %v1838
    %2509 = vmatprep.subr.bf16.mxu0 %v1845
    %2510 = vmatpush1.bf16.msra.mxu0 %v1844
    %2511 = vmatprep.subr.bf16.mxu0 %v1851
    %2512 = vmatpush1.bf16.msra.mxu0 %v1850
    %2513 = vmatprep.subr.bf16.mxu0 %v1857
    %2514 = vmatpush1.bf16.msra.mxu0 %v1856
    %2515 = vmatprep.subr.bf16.mxu0 %v1863
    %2516 = vmatpush1.bf16.msra.mxu0 %v1862
    %2517 = vmatprep.subr.bf16.mxu0 %v1869
    %2518 = vmatpush1.bf16.msra.mxu0 %v1868
    %2519 = vmatprep.subr.bf16.mxu0 %v1875
    %2520 = vmatpush1.bf16.msra.mxu0 %v1874
    %2521 = vmatprep.subr.bf16.mxu0 %v1881
    %2522 = vmatpush1.bf16.msra.mxu0 %v1880
    %2523 = vmatprep.subr.bf16.mxu0 %v1887
    %2524 = vmatpush1.bf16.msra.mxu0 %v1886
    %2525 = vmatprep.mubr.bf16.mxu0 %v605
    %2526 = vmatmul.mubr.bf16.gmra.mrb[0].mxu0 %v604
    %v2527 = vpop.f32.mrb[0].mxu0
    %v2528 = vadd.f32 %v911, %v2527
    %v2529 = vpop.f32.mrb[0].mxu0
    %v2530 = vadd.f32 %v915, %v2529
    %v2531 = vpop.f32.mrb[0].mxu0
    %v2532 = vpop.f32.mrb[0].mxu0
    %2533 = vdwg.mxu0
    %2534 = vmatprep.subr.bf16.mxu0 %v1893
    %2535 = vmatpush1.bf16.msra.mxu0 %v1892
    %2536 = vmatprep.subr.bf16.mxu0 %v1899
    %2537 = vmatpush1.bf16.msra.mxu0 %v1898
    %2538 = vmatprep.subr.bf16.mxu0 %v1905
    %2539 = vmatpush1.bf16.msra.mxu0 %v1904
    %2540 = vmatprep.subr.bf16.mxu0 %v1911
    %2541 = vmatpush1.bf16.msra.mxu0 %v1910
    %2542 = vmatprep.subr.bf16.mxu0 %v1917
    %2543 = vmatpush1.bf16.msra.mxu0 %v1916
    %2544 = vmatprep.subr.bf16.mxu0 %v1923
    %2545 = vmatpush1.bf16.msra.mxu0 %v1922
    %2546 = vmatprep.subr.bf16.mxu0 %v1929
    %2547 = vmatpush1.bf16.msra.mxu0 %v1928
    %2548 = vmatprep.subr.bf16.mxu0 %v1935
    %2549 = vmatpush1.bf16.msra.mxu0 %v1934
    %2550 = vmatprep.subr.bf16.mxu0 %v1941
    %2551 = vmatpush1.bf16.msra.mxu0 %v1940
    %2552 = vmatprep.subr.bf16.mxu0 %v1947
    %2553 = vmatpush1.bf16.msra.mxu0 %v1946
    %2554 = vmatprep.subr.bf16.mxu0 %v1953
    %2555 = vmatpush1.bf16.msra.mxu0 %v1952
    %2556 = vmatprep.subr.bf16.mxu0 %v1959
    %2557 = vmatpush1.bf16.msra.mxu0 %v1958
    %2558 = vmatprep.subr.bf16.mxu0 %v1965
    %2559 = vmatpush1.bf16.msra.mxu0 %v1964
    %2560 = vmatprep.subr.bf16.mxu0 %v1971
    %2561 = vmatpush1.bf16.msra.mxu0 %v1970
    %2562 = vmatprep.subr.bf16.mxu0 %v1977
    %2563 = vmatpush1.bf16.msra.mxu0 %v1976
    %2564 = vmatprep.subr.bf16.mxu0 %v1983
    %2565 = vmatpush1.bf16.msra.mxu0 %v1982
    %2566 = vmatprep.mubr.bf16.mxu0 %v607
    %2567 = vmatmul.mubr.bf16.gmra.mrb[0].mxu0 %v606
    %v2568 = vpop.f32.mrb[0].mxu0
    %v2569 = vadd.f32 %v2528, %v2568
    %v2570 = vpop.f32.mrb[0].mxu0
    %v2571 = vadd.f32 %v2530, %v2570
    %v2572 = vpop.f32.mrb[0].mxu0
    %v2573 = vpop.f32.mrb[0].mxu0
    %2574 = vdwg.mxu0
    %2575 = vmatprep.subr.bf16.mxu0 %v1989
    %2576 = vmatpush1.bf16.msra.mxu0 %v1988
    %2577 = vmatprep.subr.bf16.mxu0 %v1995
    %2578 = vmatpush1.bf16.msra.mxu0 %v1994
    %2579 = vmatprep.subr.bf16.mxu0 %v2001
    %2580 = vmatpush1.bf16.msra.mxu0 %v2000
    %2581 = vmatprep.subr.bf16.mxu0 %v2007
    %2582 = vmatpush1.bf16.msra.mxu0 %v2006
    %2583 = vmatprep.subr.bf16.mxu0 %v2013
    %2584 = vmatpush1.bf16.msra.mxu0 %v2012
    %2585 = vmatprep.subr.bf16.mxu0 %v2019
    %2586 = vmatpush1.bf16.msra.mxu0 %v2018
    %2587 = vmatprep.subr.bf16.mxu0 %v2025
    %2588 = vmatpush1.bf16.msra.mxu0 %v2024
    %2589 = vmatprep.subr.bf16.mxu0 %v2031
    %2590 = vmatpush1.bf16.msra.mxu0 %v2030
    %2591 = vmatprep.subr.bf16.mxu0 %v2037
    %2592 = vmatpush1.bf16.msra.mxu0 %v2036
    %2593 = vmatprep.subr.bf16.mxu0 %v2043
    %2594 = vmatpush1.bf16.msra.mxu0 %v2042
    %2595 = vmatprep.subr.bf16.mxu0 %v2049
    %2596 = vmatpush1.bf16.msra.mxu0 %v2048
    %2597 = vmatprep.subr.bf16.mxu0 %v2055
    %2598 = vmatpush1.bf16.msra.mxu0 %v2054
    %2599 = vmatprep.subr.bf16.mxu0 %v2061
    %2600 = vmatpush1.bf16.msra.mxu0 %v2060
    %2601 = vmatprep.subr.bf16.mxu0 %v2067
    %2602 = vmatpush1.bf16.msra.mxu0 %v2066
    %2603 = vmatprep.subr.bf16.mxu0 %v2073
    %2604 = vmatpush1.bf16.msra.mxu0 %v2072
    %2605 = vmatprep.subr.bf16.mxu0 %v2079
    %2606 = vmatpush1.bf16.msra.mxu0 %v2078
    %2607 = vmatprep.mubr.bf16.mxu0 %v609
    %2608 = vmatmul.mubr.bf16.gmra.mrb[0].mxu0 %v608
    %v2609 = vpop.f32.mrb[0].mxu0
    %v2610 = vadd.f32 %v2569, %v2609
    %v2611 = vpop.f32.mrb[0].mxu0
    %v2612 = vadd.f32 %v2571, %v2611
    %v2613 = vpop.f32.mrb[0].mxu0
    %v2614 = vpop.f32.mrb[0].mxu0
    %2615 = vdwg.mxu0
    %2616 = vmatprep.subr.bf16.mxu0 %v1799
    %2617 = vmatpush1.bf16.msra.mxu0 %v1798
    %2618 = vmatprep.subr.bf16.mxu0 %v1805
    %2619 = vmatpush1.bf16.msra.mxu0 %v1804
    %2620 = vmatprep.subr.bf16.mxu0 %v1811
    %2621 = vmatpush1.bf16.msra.mxu0 %v1810
    %2622 = vmatprep.subr.bf16.mxu0 %v1817
    %2623 = vmatpush1.bf16.msra.mxu0 %v1816
    %2624 = vmatprep.subr.bf16.mxu0 %v1823
    %2625 = vmatpush1.bf16.msra.mxu0 %v1822
    %2626 = vmatprep.subr.bf16.mxu0 %v1829
    %2627 = vmatpush1.bf16.msra.mxu0 %v1828
    %2628 = vmatprep.subr.bf16.mxu0 %v1835
    %2629 = vmatpush1.bf16.msra.mxu0 %v1834
    %2630 = vmatprep.subr.bf16.mxu0 %v1841
    %2631 = vmatpush1.bf16.msra.mxu0 %v1840
    %2632 = vmatprep.subr.bf16.mxu0 %v1847
    %2633 = vmatpush1.bf16.msra.mxu0 %v1846
    %2634 = vmatprep.subr.bf16.mxu0 %v1853
    %2635 = vmatpush1.bf16.msra.mxu0 %v1852
    %2636 = vmatprep.subr.bf16.mxu0 %v1859
    %2637 = vmatpush1.bf16.msra.mxu0 %v1858
    %2638 = vmatprep.subr.bf16.mxu0 %v1865
    %2639 = vmatpush1.bf16.msra.mxu0 %v1864
    %2640 = vmatprep.subr.bf16.mxu0 %v1871
    %2641 = vmatpush1.bf16.msra.mxu0 %v1870
    %2642 = vmatprep.subr.bf16.mxu0 %v1877
    %2643 = vmatpush1.bf16.msra.mxu0 %v1876
    %2644 = vmatprep.subr.bf16.mxu0 %v1883
    %2645 = vmatpush1.bf16.msra.mxu0 %v1882
    %2646 = vmatprep.subr.bf16.mxu0 %v1889
    %2647 = vmatpush1.bf16.msra.mxu0 %v1888
    %2648 = vmatprep.mubr.bf16.mxu0 %v605
    %2649 = vmatmul.mubr.bf16.gmra.mrb[0].mxu0 %v604
    %v2650 = vpop.f32.mrb[0].mxu0
    %v2651 = vadd.f32 %v919, %v2650
    %v2652 = vpop.f32.mrb[0].mxu0
    %v2653 = vadd.f32 %v923, %v2652
    %v2654 = vpop.f32.mrb[0].mxu0
    %v2655 = vpop.f32.mrb[0].mxu0
    %2656 = vdwg.mxu0
    %2657 = vmatprep.subr.bf16.mxu0 %v1895
    %2658 = vmatpush1.bf16.msra.mxu0 %v1894
    %2659 = vmatprep.subr.bf16.mxu0 %v1901
    %2660 = vmatpush1.bf16.msra.mxu0 %v1900
    %2661 = vmatprep.subr.bf16.mxu0 %v1907
    %2662 = vmatpush1.bf16.msra.mxu0 %v1906
    %2663 = vmatprep.subr.bf16.mxu0 %v1913
    %2664 = vmatpush1.bf16.msra.mxu0 %v1912
    %2665 = vmatprep.subr.bf16.mxu0 %v1919
    %2666 = vmatpush1.bf16.msra.mxu0 %v1918
    %2667 = vmatprep.subr.bf16.mxu0 %v1925
    %2668 = vmatpush1.bf16.msra.mxu0 %v1924
    %2669 = vmatprep.subr.bf16.mxu0 %v1931
    %2670 = vmatpush1.bf16.msra.mxu0 %v1930
    %2671 = vmatprep.subr.bf16.mxu0 %v1937
    %2672 = vmatpush1.bf16.msra.mxu0 %v1936
    %2673 = vmatprep.subr.bf16.mxu0 %v1943
    %2674 = vmatpush1.bf16.msra.mxu0 %v1942
    %2675 = vmatprep.subr.bf16.mxu0 %v1949
    %2676 = vmatpush1.bf16.msra.mxu0 %v1948
    %2677 = vmatprep.subr.bf16.mxu0 %v1955
    %2678 = vmatpush1.bf16.msra.mxu0 %v1954
    %2679 = vmatprep.subr.bf16.mxu0 %v1961
    %2680 = vmatpush1.bf16.msra.mxu0 %v1960
    %2681 = vmatprep.subr.bf16.mxu0 %v1967
    %2682 = vmatpush1.bf16.msra.mxu0 %v1966
    %2683 = vmatprep.subr.bf16.mxu0 %v1973
    %2684 = vmatpush1.bf16.msra.mxu0 %v1972
    %2685 = vmatprep.subr.bf16.mxu0 %v1979
    %2686 = vmatpush1.bf16.msra.mxu0 %v1978
    %2687 = vmatprep.subr.bf16.mxu0 %v1985
    %2688 = vmatpush1.bf16.msra.mxu0 %v1984
    %2689 = vmatprep.mubr.bf16.mxu0 %v607
    %2690 = vmatmul.mubr.bf16.gmra.mrb[0].mxu0 %v606
    %v2691 = vpop.f32.mrb[0].mxu0
    %v2692 = vadd.f32 %v2651, %v2691
    %v2693 = vpop.f32.mrb[0].mxu0
    %v2694 = vadd.f32 %v2653, %v2693
    %v2695 = vpop.f32.mrb[0].mxu0
    %v2696 = vpop.f32.mrb[0].mxu0
    %2697 = vdwg.mxu0
    %2698 = vmatprep.subr.bf16.mxu0 %v1991
    %2699 = vmatpush1.bf16.msra.mxu0 %v1990
    %2700 = vmatprep.subr.bf16.mxu0 %v1997
    %2701 = vmatpush1.bf16.msra.mxu0 %v1996
    %2702 = vmatprep.subr.bf16.mxu0 %v2003
    %2703 = vmatpush1.bf16.msra.mxu0 %v2002
    %2704 = vmatprep.subr.bf16.mxu0 %v2009
    %2705 = vmatpush1.bf16.msra.mxu0 %v2008
    %2706 = vmatprep.subr.bf16.mxu0 %v2015
    %2707 = vmatpush1.bf16.msra.mxu0 %v2014
    %2708 = vmatprep.subr.bf16.mxu0 %v2021
    %2709 = vmatpush1.bf16.msra.mxu0 %v2020
    %2710 = vmatprep.subr.bf16.mxu0 %v2027
    %2711 = vmatpush1.bf16.msra.mxu0 %v2026
    %2712 = vmatprep.subr.bf16.mxu0 %v2033
    %2713 = vmatpush1.bf16.msra.mxu0 %v2032
    %2714 = vmatprep.subr.bf16.mxu0 %v2039
    %2715 = vmatpush1.bf16.msra.mxu0 %v2038
    %2716 = vmatprep.subr.bf16.mxu0 %v2045
    %2717 = vmatpush1.bf16.msra.mxu0 %v2044
    %2718 = vmatprep.subr.bf16.mxu0 %v2051
    %2719 = vmatpush1.bf16.msra.mxu0 %v2050
    %2720 = vmatprep.subr.bf16.mxu0 %v2057
    %2721 = vmatpush1.bf16.msra.mxu0 %v2056
    %2722 = vmatprep.subr.bf16.mxu0 %v2063
    %2723 = vmatpush1.bf16.msra.mxu0 %v2062
    %2724 = vmatprep.subr.bf16.mxu0 %v2069
    %2725 = vmatpush1.bf16.msra.mxu0 %v2068
    %2726 = vmatprep.subr.bf16.mxu0 %v2075
    %2727 = vmatpush1.bf16.msra.mxu0 %v2074
    %2728 = vmatprep.subr.bf16.mxu0 %v2081
    %2729 = vmatpush1.bf16.msra.mxu0 %v2080
    %2730 = vmatprep.mubr.bf16.mxu0 %v609
    %2731 = vmatmul.mubr.bf16.gmra.mrb[0].mxu0 %v608
    %v2732 = vpop.f32.mrb[0].mxu0
    %v2733 = vadd.f32 %v2692, %v2732
    %v2734 = vpop.f32.mrb[0].mxu0
    %v2735 = vadd.f32 %v2694, %v2734
    %v2736 = vpop.f32.mrb[0].mxu0
    %v2737 = vpop.f32.mrb[0].mxu0
    %2738 = vdwg.mxu0
    %v2739 = vmax.f32 %v2487, 0.0
    %v2740 = vmax.f32 %v2489, 0.0
    %v2741 = vmax.f32 %v2610, 0.0
    %v2742 = vmax.f32 %v2612, 0.0
    %v2743 = vmax.f32 %v2733, 0.0
    %v2744 = vmax.f32 %v2735, 0.0
    %v2745 = vpack.c.bf16 %v2739, %v2739
    %v2746 = vpack.c.bf16 %v2740, %v2740
    %v2747 = vpack.c.bf16 %v2741, %v2741
    %v2748 = vpack.c.bf16 %v2742, %v2742
    %v2749 = vpack.c.bf16 %v2743, %v2743
    %v2750 = vpack.c.bf16 %v2744, %v2744
    %v2751 = vld [vmem:[%s8] sm:$0xf]
    %v2752 = vld [vmem:[%s8 + $0x4] sm:$0xf]
    %v2753 = vld [vmem:[%s8 + $0x8] sm:$0xf]
    %v2754 = vld [vmem:[%s8 + $0xc] sm:$0xf]
    %v2755 = vld [vmem:[%s8 + $0x10] sm:$0xf]
    %v2756 = vld [vmem:[%s8 + $0x14] sm:$0xf]
    %v2757 = vld [vmem:[%s8 + $0x18] sm:$0xf]
    %v2758 = vld [vmem:[%s8 + $0x1c] sm:$0xf]
    %v2759 = vld [vmem:[%s8 + $0x20] sm:$0xf]
    %v2760 = vld [vmem:[%s8 + $0x24] sm:$0xf]
    %v2761 = vld [vmem:[%s8 + $0x28] sm:$0xf]
    %v2762 = vld [vmem:[%s8 + $0x2c] sm:$0xf]
    %v2763 = vld [vmem:[%s8 + $0x30] sm:$0xf]
    %v2764 = vld [vmem:[%s8 + $0x34] sm:$0xf]
    %v2765 = vld [vmem:[%s8 + $0x38] sm:$0xf]
    %v2766 = vld [vmem:[%s8 + $0x3c] sm:$0xf]
    %v2767 = vld [vmem:[%s8 + $0x40] sm:$0xf]
    %v2768 = vld [vmem:[%s8 + $0x44] sm:$0xf]
    %v2769 = vld [vmem:[%s8 + $0x48] sm:$0xf]
    %v2770 = vld [vmem:[%s8 + $0x4c] sm:$0xf]
    %v2771 = vld [vmem:[%s8 + $0x50] sm:$0xf]
    %v2772 = vld [vmem:[%s8 + $0x54] sm:$0xf]
    %v2773 = vld [vmem:[%s8 + $0x58] sm:$0xf]
    %v2774 = vld [vmem:[%s8 + $0x5c] sm:$0xf]
    %v2775 = vld [vmem:[%s8 + $0x60] sm:$0xf]
    %v2776 = vld [vmem:[%s8 + $0x64] sm:$0xf]
    %v2777 = vld [vmem:[%s8 + $0x68] sm:$0xf]
    %v2778 = vld [vmem:[%s8 + $0x6c] sm:$0xf]
    %v2779 = vld [vmem:[%s8 + $0x70] sm:$0xf]
    %v2780 = vld [vmem:[%s8 + $0x74] sm:$0xf]
    %v2781 = vld [vmem:[%s8 + $0x78] sm:$0xf]
    %v2782 = vld [vmem:[%s8 + $0x7c] sm:$0xf]
    %v2783 = vld [vmem:[%s8 + $0x80] sm:$0xf]
    %v2784 = vld [vmem:[%s8 + $0x84] sm:$0xf]
    %v2785 = vld [vmem:[%s8 + $0x88] sm:$0xf]
    %v2786 = vld [vmem:[%s8 + $0x8c] sm:$0xf]
    %v2787 = vld [vmem:[%s8 + $0x90] sm:$0xf]
    %v2788 = vld [vmem:[%s8 + $0x94] sm:$0xf]
    %v2789 = vld [vmem:[%s8 + $0x98] sm:$0xf]
    %v2790 = vld [vmem:[%s8 + $0x9c] sm:$0xf]
    %v2791 = vld [vmem:[%s8 + $0xa0] sm:$0xf]
    %v2792 = vld [vmem:[%s8 + $0xa4] sm:$0xf]
    %v2793 = vld [vmem:[%s8 + $0xa8] sm:$0xf]
    %v2794 = vld [vmem:[%s8 + $0xac] sm:$0xf]
    %v2795 = vld [vmem:[%s8 + $0xb0] sm:$0xf]
    %v2796 = vld [vmem:[%s8 + $0xb4] sm:$0xf]
    %v2797 = vld [vmem:[%s8 + $0xb8] sm:$0xf]
    %v2798 = vld [vmem:[%s8 + $0xbc] sm:$0xf]
    %v2799 = vld [vmem:[%s8 + $0xc0] sm:$0xf]
    %v2800 = vld [vmem:[%s8 + $0xc4] sm:$0xf]
    %v2801 = vld [vmem:[%s8 + $0xc8] sm:$0xf]
    %v2802 = vld [vmem:[%s8 + $0xcc] sm:$0xf]
    %v2803 = vld [vmem:[%s8 + $0xd0] sm:$0xf]
    %v2804 = vld [vmem:[%s8 + $0xd4] sm:$0xf]
    %v2805 = vld [vmem:[%s8 + $0xd8] sm:$0xf]
    %v2806 = vld [vmem:[%s8 + $0xdc] sm:$0xf]
    %v2807 = vld [vmem:[%s8 + $0xe0] sm:$0xf]
    %v2808 = vld [vmem:[%s8 + $0xe4] sm:$0xf]
    %v2809 = vld [vmem:[%s8 + $0xe8] sm:$0xf]
    %v2810 = vld [vmem:[%s8 + $0xec] sm:$0xf]
    %v2811 = vld [vmem:[%s8 + $0xf0] sm:$0xf]
    %v2812 = vld [vmem:[%s8 + $0xf4] sm:$0xf]
    %v2813 = vld [vmem:[%s8 + $0xf8] sm:$0xf]
    %v2814 = vld [vmem:[%s8 + $0xfc] sm:$0xf]
    %v2815 = vld [vmem:[%s8 + $0x100] sm:$0xf]
    %v2816 = vld [vmem:[%s8 + $0x104] sm:$0xf]
    %v2817 = vld [vmem:[%s8 + $0x108] sm:$0xf]
    %v2818 = vld [vmem:[%s8 + $0x10c] sm:$0xf]
    %v2819 = vld [vmem:[%s8 + $0x110] sm:$0xf]
    %v2820 = vld [vmem:[%s8 + $0x114] sm:$0xf]
    %v2821 = vld [vmem:[%s8 + $0x118] sm:$0xf]
    %v2822 = vld [vmem:[%s8 + $0x11c] sm:$0xf]
    %v2823 = vld [vmem:[%s8 + $0x120] sm:$0xf]
    %v2824 = vld [vmem:[%s8 + $0x124] sm:$0xf]
    %v2825 = vld [vmem:[%s8 + $0x128] sm:$0xf]
    %v2826 = vld [vmem:[%s8 + $0x12c] sm:$0xf]
    %v2827 = vld [vmem:[%s8 + $0x130] sm:$0xf]
    %v2828 = vld [vmem:[%s8 + $0x134] sm:$0xf]
    %v2829 = vld [vmem:[%s8 + $0x138] sm:$0xf]
    %v2830 = vld [vmem:[%s8 + $0x13c] sm:$0xf]
    %v2831 = vld [vmem:[%s8 + $0x140] sm:$0xf]
    %v2832 = vld [vmem:[%s8 + $0x144] sm:$0xf]
    %v2833 = vld [vmem:[%s8 + $0x148] sm:$0xf]
    %v2834 = vld [vmem:[%s8 + $0x14c] sm:$0xf]
    %v2835 = vld [vmem:[%s8 + $0x150] sm:$0xf]
    %v2836 = vld [vmem:[%s8 + $0x154] sm:$0xf]
    %v2837 = vld [vmem:[%s8 + $0x158] sm:$0xf]
    %v2838 = vld [vmem:[%s8 + $0x15c] sm:$0xf]
    %v2839 = vld [vmem:[%s8 + $0x160] sm:$0xf]
    %v2840 = vld [vmem:[%s8 + $0x164] sm:$0xf]
    %v2841 = vld [vmem:[%s8 + $0x168] sm:$0xf]
    %v2842 = vld [vmem:[%s8 + $0x16c] sm:$0xf]
    %v2843 = vld [vmem:[%s8 + $0x170] sm:$0xf]
    %v2844 = vld [vmem:[%s8 + $0x174] sm:$0xf]
    %v2845 = vld [vmem:[%s8 + $0x178] sm:$0xf]
    %v2846 = vld [vmem:[%s8 + $0x17c] sm:$0xf]
    %v2847 = vld [vmem:[#allocation14] sm:$0x1]
    %v2849 = vlaneseq
    %v2850 = vshrl.u32 %v2849, 7
    %v2851 = vsub.s32 0, %v2850
    %v2852 = vrot.slane %v2847, %v2851
    %v2950 = vunpack.c.l.b16 %v2751
    %v2951 = vunpack.c.l.b16 %v2752
    %v2952 = vunpack.c.l.b16 %v2753
    %v2953 = vunpack.c.l.b16 %v2754
    %v2954 = vunpack.c.l.b16 %v2755
    %v2955 = vunpack.c.l.b16 %v2756
    %v2956 = vunpack.c.l.b16 %v2757
    %v2957 = vunpack.c.l.b16 %v2758
    %v2958 = vunpack.c.l.b16 %v2759
    %v2959 = vunpack.c.l.b16 %v2760
    %v2960 = vunpack.c.l.b16 %v2761
    %v2961 = vunpack.c.l.b16 %v2762
    %v2962 = vunpack.c.l.b16 %v2763
    %v2963 = vunpack.c.l.b16 %v2764
    %v2964 = vunpack.c.l.b16 %v2765
    %v2965 = vunpack.c.l.b16 %v2766
    %v2966 = vunpack.c.l.b16 %v2767
    %v2967 = vunpack.c.l.b16 %v2768
    %v2968 = vunpack.c.l.b16 %v2769
    %v2969 = vunpack.c.l.b16 %v2770
    %v2970 = vunpack.c.l.b16 %v2771
    %v2971 = vunpack.c.l.b16 %v2772
    %v2972 = vunpack.c.l.b16 %v2773
    %v2973 = vunpack.c.l.b16 %v2774
    %v2974 = vunpack.c.l.b16 %v2775
    %v2975 = vunpack.c.l.b16 %v2776
    %v2976 = vunpack.c.l.b16 %v2777
    %v2977 = vunpack.c.l.b16 %v2778
    %v2978 = vunpack.c.l.b16 %v2779
    %v2979 = vunpack.c.l.b16 %v2780
    %v2980 = vunpack.c.l.b16 %v2781
    %v2981 = vunpack.c.l.b16 %v2782
    %v2982 = vunpack.c.l.b16 %v2783
    %v2983 = vunpack.c.l.b16 %v2784
    %v2984 = vunpack.c.l.b16 %v2785
    %v2985 = vunpack.c.l.b16 %v2786
    %v2986 = vunpack.c.l.b16 %v2787
    %v2987 = vunpack.c.l.b16 %v2788
    %v2988 = vunpack.c.l.b16 %v2789
    %v2989 = vunpack.c.l.b16 %v2790
    %v2990 = vunpack.c.l.b16 %v2791
    %v2991 = vunpack.c.l.b16 %v2792
    %v2992 = vunpack.c.l.b16 %v2793
    %v2993 = vunpack.c.l.b16 %v2794
    %v2994 = vunpack.c.l.b16 %v2795
    %v2995 = vunpack.c.l.b16 %v2796
    %v2996 = vunpack.c.l.b16 %v2797
    %v2997 = vunpack.c.l.b16 %v2798
    %v2998 = vunpack.c.l.b16 %v2799
    %v2999 = vunpack.c.l.b16 %v2800
    %v3000 = vunpack.c.l.b16 %v2801
    %v3001 = vunpack.c.l.b16 %v2802
    %v3002 = vunpack.c.l.b16 %v2803
    %v3003 = vunpack.c.l.b16 %v2804
    %v3004 = vunpack.c.l.b16 %v2805
    %v3005 = vunpack.c.l.b16 %v2806
    %v3006 = vunpack.c.l.b16 %v2807
    %v3007 = vunpack.c.l.b16 %v2808
    %v3008 = vunpack.c.l.b16 %v2809
    %v3009 = vunpack.c.l.b16 %v2810
    %v3010 = vunpack.c.l.b16 %v2811
    %v3011 = vunpack.c.l.b16 %v2812
    %v3012 = vunpack.c.l.b16 %v2813
    %v3013 = vunpack.c.l.b16 %v2814
    %v3014 = vunpack.c.l.b16 %v2815
    %v3015 = vunpack.c.l.b16 %v2816
    %v3016 = vunpack.c.l.b16 %v2817
    %v3017 = vunpack.c.l.b16 %v2818
    %v3018 = vunpack.c.l.b16 %v2819
    %v3019 = vunpack.c.l.b16 %v2820
    %v3020 = vunpack.c.l.b16 %v2821
    %v3021 = vunpack.c.l.b16 %v2822
    %v3022 = vunpack.c.l.b16 %v2823
    %v3023 = vunpack.c.l.b16 %v2824
    %v3024 = vunpack.c.l.b16 %v2825
    %v3025 = vunpack.c.l.b16 %v2826
    %v3026 = vunpack.c.l.b16 %v2827
    %v3027 = vunpack.c.l.b16 %v2828
    %v3028 = vunpack.c.l.b16 %v2829
    %v3029 = vunpack.c.l.b16 %v2830
    %v3030 = vunpack.c.l.b16 %v2831
    %v3031 = vunpack.c.l.b16 %v2832
    %v3032 = vunpack.c.l.b16 %v2833
    %v3033 = vunpack.c.l.b16 %v2834
    %v3034 = vunpack.c.l.b16 %v2835
    %v3035 = vunpack.c.l.b16 %v2836
    %v3036 = vunpack.c.l.b16 %v2837
    %v3037 = vunpack.c.l.b16 %v2838
    %v3038 = vunpack.c.l.b16 %v2839
    %v3039 = vunpack.c.l.b16 %v2840
    %v3040 = vunpack.c.l.b16 %v2841
    %v3041 = vunpack.c.l.b16 %v2842
    %v3042 = vunpack.c.l.b16 %v2843
    %v3043 = vunpack.c.l.b16 %v2844
    %v3044 = vunpack.c.l.b16 %v2845
    %v3045 = vunpack.c.l.b16 %v2846
    %v3046 = vpack.c.b16 %v2951, %v2950
    %v3047 = vpack.c.b16 %v2953, %v2952
    %v3048 = vpack.c.b16 %v2955, %v2954
    %v3049 = vpack.c.b16 %v2957, %v2956
    %v3050 = vpack.c.b16 %v2959, %v2958
    %v3051 = vpack.c.b16 %v2961, %v2960
    %v3052 = vpack.c.b16 %v2963, %v2962
    %v3053 = vpack.c.b16 %v2965, %v2964
    %v3054 = vpack.c.b16 %v2967, %v2966
    %v3055 = vpack.c.b16 %v2969, %v2968
    %v3056 = vpack.c.b16 %v2971, %v2970
    %v3057 = vpack.c.b16 %v2973, %v2972
    %v3058 = vpack.c.b16 %v2975, %v2974
    %v3059 = vpack.c.b16 %v2977, %v2976
    %v3060 = vpack.c.b16 %v2979, %v2978
    %v3061 = vpack.c.b16 %v2981, %v2980
    %v3062 = vpack.c.b16 %v2983, %v2982
    %v3063 = vpack.c.b16 %v2985, %v2984
    %v3064 = vpack.c.b16 %v2987, %v2986
    %v3065 = vpack.c.b16 %v2989, %v2988
    %v3066 = vpack.c.b16 %v2991, %v2990
    %v3067 = vpack.c.b16 %v2993, %v2992
    %v3068 = vpack.c.b16 %v2995, %v2994
    %v3069 = vpack.c.b16 %v2997, %v2996
    %v3070 = vpack.c.b16 %v2999, %v2998
    %v3071 = vpack.c.b16 %v3001, %v3000
    %v3072 = vpack.c.b16 %v3003, %v3002
    %v3073 = vpack.c.b16 %v3005, %v3004
    %v3074 = vpack.c.b16 %v3007, %v3006
    %v3075 = vpack.c.b16 %v3009, %v3008
    %v3076 = vpack.c.b16 %v3011, %v3010
    %v3077 = vpack.c.b16 %v3013, %v3012
    %v3078 = vpack.c.b16 %v3015, %v3014
    %v3079 = vpack.c.b16 %v3017, %v3016
    %v3080 = vpack.c.b16 %v3019, %v3018
    %v3081 = vpack.c.b16 %v3021, %v3020
    %v3082 = vpack.c.b16 %v3023, %v3022
    %v3083 = vpack.c.b16 %v3025, %v3024
    %v3084 = vpack.c.b16 %v3027, %v3026
    %v3085 = vpack.c.b16 %v3029, %v3028
    %v3086 = vpack.c.b16 %v3031, %v3030
    %v3087 = vpack.c.b16 %v3033, %v3032
    %v3088 = vpack.c.b16 %v3035, %v3034
    %v3089 = vpack.c.b16 %v3037, %v3036
    %v3090 = vpack.c.b16 %v3039, %v3038
    %v3091 = vpack.c.b16 %v3041, %v3040
    %v3092 = vpack.c.b16 %v3043, %v3042
    %v3093 = vpack.c.b16 %v3045, %v3044
    %3142 = vmatprep.subr.bf16.mxu0 0
    %3143 = vmatpush1.bf16.msra.mxu0 %v3046
    %3144 = vmatprep.subr.bf16.mxu0 0
    %3145 = vmatpush1.bf16.msra.mxu0 %v3047
    %3146 = vmatprep.subr.bf16.mxu0 0
    %3147 = vmatpush1.bf16.msra.mxu0 %v3048
    %3148 = vmatprep.subr.bf16.mxu0 0
    %3149 = vmatpush1.bf16.msra.mxu0 %v3049
    %3150 = vmatprep.subr.bf16.mxu0 0
    %3151 = vmatpush1.bf16.msra.mxu0 %v3050
    %3152 = vmatprep.subr.bf16.mxu0 0
    %3153 = vmatpush1.bf16.msra.mxu0 %v3051
    %3154 = vmatprep.subr.bf16.mxu0 0
    %3155 = vmatpush1.bf16.msra.mxu0 %v3052
    %3156 = vmatprep.subr.bf16.mxu0 0
    %3157 = vmatpush1.bf16.msra.mxu0 %v3053
    %3158 = vmatprep.subr.bf16.mxu0 0
    %3159 = vmatpush1.bf16.msra.mxu0 %v3054
    %3160 = vmatprep.subr.bf16.mxu0 0
    %3161 = vmatpush1.bf16.msra.mxu0 %v3055
    %3162 = vmatprep.subr.bf16.mxu0 0
    %3163 = vmatpush1.bf16.msra.mxu0 %v3056
    %3164 = vmatprep.subr.bf16.mxu0 0
    %3165 = vmatpush1.bf16.msra.mxu0 %v3057
    %3166 = vmatprep.subr.bf16.mxu0 0
    %3167 = vmatpush1.bf16.msra.mxu0 %v3058
    %3168 = vmatprep.subr.bf16.mxu0 0
    %3169 = vmatpush1.bf16.msra.mxu0 %v3059
    %3170 = vmatprep.subr.bf16.mxu0 0
    %3171 = vmatpush1.bf16.msra.mxu0 %v3060
    %3172 = vmatprep.subr.bf16.mxu0 0
    %3173 = vmatpush1.bf16.msra.mxu0 %v3061
    %3174 = vmatprep.mubr.bf16.mxu0 %v2746
    %3175 = vmatmul.mubr.bf16.gmra.mrb[0].mxu0 %v2745
    %v3176 = vpop.f32.mrb[0].mxu0
    %v3177 = vadd.f32 %v2852, %v3176
    %v3178 = vpop.f32.mrb[0].mxu0
    %v3179 = vpop.f32.mrb[0].mxu0
    %v3180 = vpop.f32.mrb[0].mxu0
    %3181 = vdwg.mxu0
    %3182 = vmatprep.subr.bf16.mxu0 0
    %3183 = vmatpush1.bf16.msra.mxu0 %v3062
    %3184 = vmatprep.subr.bf16.mxu0 0
    %3185 = vmatpush1.bf16.msra.mxu0 %v3063
    %3186 = vmatprep.subr.bf16.mxu0 0
    %3187 = vmatpush1.bf16.msra.mxu0 %v3064
    %3188 = vmatprep.subr.bf16.mxu0 0
    %3189 = vmatpush1.bf16.msra.mxu0 %v3065
    %3190 = vmatprep.subr.bf16.mxu0 0
    %3191 = vmatpush1.bf16.msra.mxu0 %v3066
    %3192 = vmatprep.subr.bf16.mxu0 0
    %3193 = vmatpush1.bf16.msra.mxu0 %v3067
    %3194 = vmatprep.subr.bf16.mxu0 0
    %3195 = vmatpush1.bf16.msra.mxu0 %v3068
    %3196 = vmatprep.subr.bf16.mxu0 0
    %3197 = vmatpush1.bf16.msra.mxu0 %v3069
    %3198 = vmatprep.subr.bf16.mxu0 0
    %3199 = vmatpush1.bf16.msra.mxu0 %v3070
    %3200 = vmatprep.subr.bf16.mxu0 0
    %3201 = vmatpush1.bf16.msra.mxu0 %v3071
    %3202 = vmatprep.subr.bf16.mxu0 0
    %3203 = vmatpush1.bf16.msra.mxu0 %v3072
    %3204 = vmatprep.subr.bf16.mxu0 0
    %3205 = vmatpush1.bf16.msra.mxu0 %v3073
    %3206 = vmatprep.subr.bf16.mxu0 0
    %3207 = vmatpush1.bf16.msra.mxu0 %v3074
    %3208 = vmatprep.subr.bf16.mxu0 0
    %3209 = vmatpush1.bf16.msra.mxu0 %v3075
    %3210 = vmatprep.subr.bf16.mxu0 0
    %3211 = vmatpush1.bf16.msra.mxu0 %v3076
    %3212 = vmatprep.subr.bf16.mxu0 0
    %3213 = vmatpush1.bf16.msra.mxu0 %v3077
    %3214 = vmatprep.mubr.bf16.mxu0 %v2748
    %3215 = vmatmul.mubr.bf16.gmra.mrb[0].mxu0 %v2747
    %v3216 = vpop.f32.mrb[0].mxu0
    %v3217 = vadd.f32 %v3177, %v3216
    %v3218 = vpop.f32.mrb[0].mxu0
    %v3219 = vpop.f32.mrb[0].mxu0
    %v3220 = vpop.f32.mrb[0].mxu0
    %3221 = vdwg.mxu0
    %3222 = vmatprep.subr.bf16.mxu0 0
    %3223 = vmatpush1.bf16.msra.mxu0 %v3078
    %3224 = vmatprep.subr.bf16.mxu0 0
    %3225 = vmatpush1.bf16.msra.mxu0 %v3079
    %3226 = vmatprep.subr.bf16.mxu0 0
    %3227 = vmatpush1.bf16.msra.mxu0 %v3080
    %3228 = vmatprep.subr.bf16.mxu0 0
    %3229 = vmatpush1.bf16.msra.mxu0 %v3081
    %3230 = vmatprep.subr.bf16.mxu0 0
    %3231 = vmatpush1.bf16.msra.mxu0 %v3082
    %3232 = vmatprep.subr.bf16.mxu0 0
    %3233 = vmatpush1.bf16.msra.mxu0 %v3083
    %3234 = vmatprep.subr.bf16.mxu0 0
    %3235 = vmatpush1.bf16.msra.mxu0 %v3084
    %3236 = vmatprep.subr.bf16.mxu0 0
    %3237 = vmatpush1.bf16.msra.mxu0 %v3085
    %3238 = vmatprep.subr.bf16.mxu0 0
    %3239 = vmatpush1.bf16.msra.mxu0 %v3086
    %3240 = vmatprep.subr.bf16.mxu0 0
    %3241 = vmatpush1.bf16.msra.mxu0 %v3087
    %3242 = vmatprep.subr.bf16.mxu0 0
    %3243 = vmatpush1.bf16.msra.mxu0 %v3088
    %3244 = vmatprep.subr.bf16.mxu0 0
    %3245 = vmatpush1.bf16.msra.mxu0 %v3089
    %3246 = vmatprep.subr.bf16.mxu0 0
    %3247 = vmatpush1.bf16.msra.mxu0 %v3090
    %3248 = vmatprep.subr.bf16.mxu0 0
    %3249 = vmatpush1.bf16.msra.mxu0 %v3091
    %3250 = vmatprep.subr.bf16.mxu0 0
    %3251 = vmatpush1.bf16.msra.mxu0 %v3092
    %3252 = vmatprep.subr.bf16.mxu0 0
    %3253 = vmatpush1.bf16.msra.mxu0 %v3093
    %3254 = vmatprep.mubr.bf16.mxu0 %v2750
    %3255 = vmatmul.mubr.bf16.gmra.mrb[0].mxu0 %v2749
    %v3256 = vpop.f32.mrb[0].mxu0
    %v3257 = vadd.f32 %v3217, %v3256
    %v3258 = vpop.f32.mrb[0].mxu0
    %v3259 = vpop.f32.mrb[0].mxu0
    %v3260 = vpop.f32.mrb[0].mxu0
    %3261 = vdwg.mxu0
    %v3262 = vmax.f32 %v3257, -4.0
    %v3263 = vmin.f32 %v3262, 15.0
    %v3264 = vmul.f32 %v3263, 1.442695
    %v3265 = vpow.pop %v3264
    %3267 = vrot.lane.b32.xlu0 %v230, 4
    %v3268 = vpop.permute.xlu0 %3267
    %v3270 = vmul.f32 %v3265, %v3268
    %3272 = vrot.lane.b32.xlu0 %v3270, 124
    %v3273 = vpop.permute.xlu0 %3272
    %v3275 = vadd.f32 %v3257, %v3273
    %v3276 = vld [vmem:[#allocation16] sm:$0xff]
    %v3277 = vld [vmem:[#allocation16 + $0x8] sm:$0xff]
    %v3278 = vld [vmem:[#allocation16 + $0x10] sm:$0xff]
    %v3279 = vld [vmem:[#allocation16 + $0x18] sm:$0xff]
    %v3280 = vld [vmem:[#allocation16 + $0x20] sm:$0xff]
    %v3281 = vld [vmem:[#allocation16 + $0x28] sm:$0xff]
    %v3282 = vpack.c.bf16 %v3275, %v3275
    %v3283 = vld [vmem:[#allocation17] sm:$0xff]
    %v3284 = vld [vmem:[#allocation17 + $0x8] sm:$0xf]
    %v3287 = vcombine.high %v3283, %v3283
    %v3289 = vunpack.c.l.s4 1983009808
    %v3290 = vunpack.c.0.s8 %v3289
    %v3291 = vlaneseq
    %v3292 = vshrl.u32 %v3291, 7
    %v3293 = vsub.s32 %v3290, %v3292
    %v3294 = vrot.slane %v3283, %v3293
    %v3296 = vunpack.c.l.s4 1983009808
    %v3297 = vunpack.c.0.s8 %v3296
    %v3298 = vlaneseq
    %v3299 = vshrl.u32 %v3298, 7
    %v3300 = vsub.s32 %v3297, %v3299
    %v3301 = vrot.slane %v3287, %v3300
    %v3302 = vcombine.high %v3294, %v3294
    %v3303 = vcombine.high %v3301, %v3301
    %v3305 = vunpack.c.l.s4 1983009808
    %v3306 = vunpack.c.0.s8 %v3305
    %v3307 = vlaneseq
    %v3308 = vshrl.u32 %v3307, 7
    %v3309 = vsub.s32 %v3306, %v3308
    %v3310 = vrot.slane %v3284, %v3309
    %v3311 = vcombine.high %v3310, %v3310
    %vm3312 = vcmask 31744
    %v3314 = vsel %vm3312, %v3282, 0
    %vm3316 = vcmask 1041408
    %v3318 = vsel %vm3316, %v3294, 0
    %v3321 = vsel %vm3316, %v3302, 0
    %v3324 = vsel %vm3316, %v3301, 0
    %v3327 = vsel %vm3316, %v3303, 0
    %v3330 = vsel %vm3316, %v3310, 0
    %v3333 = vsel %vm3316, %v3311, 0
    %3335 = vmatprep.subr.bf16.mxu0 %v3321
    %3336 = vmatpush1.bf16.msra.mxu0 %v3318
    %3337 = vmatprep.subr.bf16.mxu0 0
    %3338 = vmatpush1.bf16.msra.mxu0 0
    %3339 = vmatprep.subr.bf16.mxu0 0
    %3340 = vmatpush1.bf16.msra.mxu0 0
    %3341 = vmatprep.subr.bf16.mxu0 0
    %3342 = vmatpush1.bf16.msra.mxu0 0
    %3343 = vmatprep.subr.bf16.mxu0 0
    %3344 = vmatpush1.bf16.msra.mxu0 0
    %3345 = vmatprep.subr.bf16.mxu0 0
    %3346 = vmatpush1.bf16.msra.mxu0 0
    %3347 = vmatprep.subr.bf16.mxu0 0
    %3348 = vmatpush1.bf16.msra.mxu0 0
    %3349 = vmatprep.subr.bf16.mxu0 0
    %3350 = vmatpush1.bf16.msra.mxu0 0
    %3351 = vmatprep.subr.bf16.mxu0 0
    %3352 = vmatpush1.bf16.msra.mxu0 0
    %3353 = vmatprep.subr.bf16.mxu0 0
    %3354 = vmatpush1.bf16.msra.mxu0 0
    %3355 = vmatprep.subr.bf16.mxu0 0
    %3356 = vmatpush1.bf16.msra.mxu0 0
    %3357 = vmatprep.subr.bf16.mxu0 0
    %3358 = vmatpush1.bf16.msra.mxu0 0
    %3359 = vmatprep.subr.bf16.mxu0 0
    %3360 = vmatpush1.bf16.msra.mxu0 0
    %3361 = vmatprep.subr.bf16.mxu0 0
    %3362 = vmatpush1.bf16.msra.mxu0 0
    %3363 = vmatprep.subr.bf16.mxu0 0
    %3364 = vmatpush1.bf16.msra.mxu0 0
    %3365 = vmatprep.subr.bf16.mxu0 0
    %3366 = vmatpush1.bf16.msra.mxu0 0
    %3367 = vmatprep.mubr.bf16.mxu0 0
    %3368 = vmatmul.mubr.bf16.gmra.mrb[0].mxu0 %v3314
    %v3369 = vpop.f32.mrb[0].mxu0
    %v3370 = vadd.f32 0.0, %v3369
    %v3371 = vpop.f32.mrb[0].mxu0
    %v3372 = vadd.f32 0.0, %v3371
    %v3373 = vpop.f32.mrb[0].mxu0
    %v3374 = vpop.f32.mrb[0].mxu0
    %3375 = vdwg.mxu0
    %3376 = vmatprep.subr.bf16.mxu0 %v3327
    %3377 = vmatpush1.bf16.msra.mxu0 %v3324
    %3378 = vmatprep.subr.bf16.mxu0 0
    %3379 = vmatpush1.bf16.msra.mxu0 0
    %3380 = vmatprep.subr.bf16.mxu0 0
    %3381 = vmatpush1.bf16.msra.mxu0 0
    %3382 = vmatprep.subr.bf16.mxu0 0
    %3383 = vmatpush1.bf16.msra.mxu0 0
    %3384 = vmatprep.subr.bf16.mxu0 0
    %3385 = vmatpush1.bf16.msra.mxu0 0
    %3386 = vmatprep.subr.bf16.mxu0 0
    %3387 = vmatpush1.bf16.msra.mxu0 0
    %3388 = vmatprep.subr.bf16.mxu0 0
    %3389 = vmatpush1.bf16.msra.mxu0 0
    %3390 = vmatprep.subr.bf16.mxu0 0
    %3391 = vmatpush1.bf16.msra.mxu0 0
    %3392 = vmatprep.subr.bf16.mxu0 0
    %3393 = vmatpush1.bf16.msra.mxu0 0
    %3394 = vmatprep.subr.bf16.mxu0 0
    %3395 = vmatpush1.bf16.msra.mxu0 0
    %3396 = vmatprep.subr.bf16.mxu0 0
    %3397 = vmatpush1.bf16.msra.mxu0 0
    %3398 = vmatprep.subr.bf16.mxu0 0
    %3399 = vmatpush1.bf16.msra.mxu0 0
    %3400 = vmatprep.subr.bf16.mxu0 0
    %3401 = vmatpush1.bf16.msra.mxu0 0
    %3402 = vmatprep.subr.bf16.mxu0 0
    %3403 = vmatpush1.bf16.msra.mxu0 0
    %3404 = vmatprep.subr.bf16.mxu0 0
    %3405 = vmatpush1.bf16.msra.mxu0 0
    %3406 = vmatprep.subr.bf16.mxu0 0
    %3407 = vmatpush1.bf16.msra.mxu0 0
    %3408 = vmatprep.mubr.bf16.mxu0 0
    %3409 = vmatmul.mubr.bf16.gmra.mrb[0].mxu0 %v3314
    %v3410 = vpop.f32.mrb[0].mxu0
    %v3411 = vadd.f32 0.0, %v3410
    %v3412 = vpop.f32.mrb[0].mxu0
    %v3413 = vadd.f32 0.0, %v3412
    %v3414 = vpop.f32.mrb[0].mxu0
    %v3415 = vpop.f32.mrb[0].mxu0
    %3416 = vdwg.mxu0
    %3417 = vmatprep.subr.bf16.mxu0 %v3333
    %3418 = vmatpush1.bf16.msra.mxu0 %v3330
    %3419 = vmatprep.subr.bf16.mxu0 0
    %3420 = vmatpush1.bf16.msra.mxu0 0
    %3421 = vmatprep.subr.bf16.mxu0 0
    %3422 = vmatpush1.bf16.msra.mxu0 0
    %3423 = vmatprep.subr.bf16.mxu0 0
    %3424 = vmatpush1.bf16.msra.mxu0 0
    %3425 = vmatprep.subr.bf16.mxu0 0
    %3426 = vmatpush1.bf16.msra.mxu0 0
    %3427 = vmatprep.subr.bf16.mxu0 0
    %3428 = vmatpush1.bf16.msra.mxu0 0
    %3429 = vmatprep.subr.bf16.mxu0 0
    %3430 = vmatpush1.bf16.msra.mxu0 0
    %3431 = vmatprep.subr.bf16.mxu0 0
    %3432 = vmatpush1.bf16.msra.mxu0 0
    %3433 = vmatprep.subr.bf16.mxu0 0
    %3434 = vmatpush1.bf16.msra.mxu0 0
    %3435 = vmatprep.subr.bf16.mxu0 0
    %3436 = vmatpush1.bf16.msra.mxu0 0
    %3437 = vmatprep.subr.bf16.mxu0 0
    %3438 = vmatpush1.bf16.msra.mxu0 0
    %3439 = vmatprep.subr.bf16.mxu0 0
    %3440 = vmatpush1.bf16.msra.mxu0 0
    %3441 = vmatprep.subr.bf16.mxu0 0
    %3442 = vmatpush1.bf16.msra.mxu0 0
    %3443 = vmatprep.subr.bf16.mxu0 0
    %3444 = vmatpush1.bf16.msra.mxu0 0
    %3445 = vmatprep.subr.bf16.mxu0 0
    %3446 = vmatpush1.bf16.msra.mxu0 0
    %3447 = vmatprep.subr.bf16.mxu0 0
    %3448 = vmatpush1.bf16.msra.mxu0 0
    %3449 = vmatprep.mubr.bf16.mxu0 0
    %3450 = vmatmul.mubr.bf16.gmra.mrb[0].mxu0 %v3314
    %v3451 = vpop.f32.mrb[0].mxu0
    %v3452 = vadd.f32 0.0, %v3451
    %v3453 = vpop.f32.mrb[0].mxu0
    %v3454 = vadd.f32 0.0, %v3453
    %v3455 = vpop.f32.mrb[0].mxu0
    %v3456 = vpop.f32.mrb[0].mxu0
    %3457 = vdwg.mxu0
    %v3464 = vunpack.c.l.b16 %v3276
    %v3465 = vunpack.c.h.b16 %v3276
    %v3466 = vunpack.c.l.b16 %v3277
    %v3467 = vunpack.c.h.b16 %v3277
    %v3468 = vunpack.c.l.b16 %v3278
    %v3469 = vunpack.c.h.b16 %v3278
    %v3470 = vunpack.c.l.b16 %v3279
    %v3471 = vunpack.c.h.b16 %v3279
    %v3472 = vunpack.c.l.b16 %v3280
    %v3473 = vunpack.c.h.b16 %v3280
    %v3474 = vunpack.c.l.b16 %v3281
    %v3475 = vunpack.c.h.b16 %v3281
    %v3476 = vpack.c.b16 %v3470, %v3464
    %v3477 = vpack.c.b16 %v3471, %v3465
    %v3478 = vpack.c.b16 %v3472, %v3466
    %v3479 = vpack.c.b16 %v3473, %v3467
    %v3480 = vpack.c.b16 %v3474, %v3468
    %v3481 = vpack.c.b16 %v3475, %v3469
    %3488 = vmatprep.subr.bf16.mxu0 %v3477
    %3489 = vmatpush1.bf16.msra.mxu0 %v3476
    %3490 = vmatprep.subr.bf16.mxu0 0
    %3491 = vmatpush1.bf16.msra.mxu0 0
    %3492 = vmatprep.subr.bf16.mxu0 0
    %3493 = vmatpush1.bf16.msra.mxu0 0
    %3494 = vmatprep.subr.bf16.mxu0 0
    %3495 = vmatpush1.bf16.msra.mxu0 0
    %3496 = vmatprep.subr.bf16.mxu0 0
    %3497 = vmatpush1.bf16.msra.mxu0 0
    %3498 = vmatprep.subr.bf16.mxu0 0
    %3499 = vmatpush1.bf16.msra.mxu0 0
    %3500 = vmatprep.subr.bf16.mxu0 0
    %3501 = vmatpush1.bf16.msra.mxu0 0
    %3502 = vmatprep.subr.bf16.mxu0 0
    %3503 = vmatpush1.bf16.msra.mxu0 0
    %3504 = vmatprep.subr.bf16.mxu0 0
    %3505 = vmatpush1.bf16.msra.mxu0 0
    %3506 = vmatprep.subr.bf16.mxu0 0
    %3507 = vmatpush1.bf16.msra.mxu0 0
    %3508 = vmatprep.subr.bf16.mxu0 0
    %3509 = vmatpush1.bf16.msra.mxu0 0
    %3510 = vmatprep.subr.bf16.mxu0 0
    %3511 = vmatpush1.bf16.msra.mxu0 0
    %3512 = vmatprep.subr.bf16.mxu0 0
    %3513 = vmatpush1.bf16.msra.mxu0 0
    %3514 = vmatprep.subr.bf16.mxu0 0
    %3515 = vmatpush1.bf16.msra.mxu0 0
    %3516 = vmatprep.subr.bf16.mxu0 0
    %3517 = vmatpush1.bf16.msra.mxu0 0
    %3518 = vmatprep.subr.bf16.mxu0 0
    %3519 = vmatpush1.bf16.msra.mxu0 0
    %3520 = vmatprep.mubr.bf16.mxu0 0
    %3521 = vmatmul.mubr.bf16.gmra.mrb[0].mxu0 %v435
    %v3522 = vpop.f32.mrb[0].mxu0
    %v3523 = vadd.f32 %v3370, %v3522
    %v3524 = vpop.f32.mrb[0].mxu0
    %v3525 = vadd.f32 %v3372, %v3524
    %v3526 = vpop.f32.mrb[0].mxu0
    %v3527 = vpop.f32.mrb[0].mxu0
    %3528 = vdwg.mxu0
    %3529 = vmatprep.subr.bf16.mxu0 %v3479
    %3530 = vmatpush1.bf16.msra.mxu0 %v3478
    %3531 = vmatprep.subr.bf16.mxu0 0
    %3532 = vmatpush1.bf16.msra.mxu0 0
    %3533 = vmatprep.subr.bf16.mxu0 0
    %3534 = vmatpush1.bf16.msra.mxu0 0
    %3535 = vmatprep.subr.bf16.mxu0 0
    %3536 = vmatpush1.bf16.msra.mxu0 0
    %3537 = vmatprep.subr.bf16.mxu0 0
    %3538 = vmatpush1.bf16.msra.mxu0 0
    %3539 = vmatprep.subr.bf16.mxu0 0
    %3540 = vmatpush1.bf16.msra.mxu0 0
    %3541 = vmatprep.subr.bf16.mxu0 0
    %3542 = vmatpush1.bf16.msra.mxu0 0
    %3543 = vmatprep.subr.bf16.mxu0 0
    %3544 = vmatpush1.bf16.msra.mxu0 0
    %3545 = vmatprep.subr.bf16.mxu0 0
    %3546 = vmatpush1.bf16.msra.mxu0 0
    %3547 = vmatprep.subr.bf16.mxu0 0
    %3548 = vmatpush1.bf16.msra.mxu0 0
    %3549 = vmatprep.subr.bf16.mxu0 0
    %3550 = vmatpush1.bf16.msra.mxu0 0
    %3551 = vmatprep.subr.bf16.mxu0 0
    %3552 = vmatpush1.bf16.msra.mxu0 0
    %3553 = vmatprep.subr.bf16.mxu0 0
    %3554 = vmatpush1.bf16.msra.mxu0 0
    %3555 = vmatprep.subr.bf16.mxu0 0
    %3556 = vmatpush1.bf16.msra.mxu0 0
    %3557 = vmatprep.subr.bf16.mxu0 0
    %3558 = vmatpush1.bf16.msra.mxu0 0
    %3559 = vmatprep.subr.bf16.mxu0 0
    %3560 = vmatpush1.bf16.msra.mxu0 0
    %3561 = vmatprep.mubr.bf16.mxu0 0
    %3562 = vmatmul.mubr.bf16.gmra.mrb[0].mxu0 %v435
    %v3563 = vpop.f32.mrb[0].mxu0
    %v3564 = vadd.f32 %v3411, %v3563
    %v3565 = vpop.f32.mrb[0].mxu0
    %v3566 = vadd.f32 %v3413, %v3565
    %v3567 = vpop.f32.mrb[0].mxu0
    %v3568 = vpop.f32.mrb[0].mxu0
    %3569 = vdwg.mxu0
    %3570 = vmatprep.subr.bf16.mxu0 %v3481
    %3571 = vmatpush1.bf16.msra.mxu0 %v3480
    %3572 = vmatprep.subr.bf16.mxu0 0
    %3573 = vmatpush1.bf16.msra.mxu0 0
    %3574 = vmatprep.subr.bf16.mxu0 0
    %3575 = vmatpush1.bf16.msra.mxu0 0
    %3576 = vmatprep.subr.bf16.mxu0 0
    %3577 = vmatpush1.bf16.msra.mxu0 0
    %3578 = vmatprep.subr.bf16.mxu0 0
    %3579 = vmatpush1.bf16.msra.mxu0 0
    %3580 = vmatprep.subr.bf16.mxu0 0
    %3581 = vmatpush1.bf16.msra.mxu0 0
    %3582 = vmatprep.subr.bf16.mxu0 0
    %3583 = vmatpush1.bf16.msra.mxu0 0
    %3584 = vmatprep.subr.bf16.mxu0 0
    %3585 = vmatpush1.bf16.msra.mxu0 0
    %3586 = vmatprep.subr.bf16.mxu0 0
    %3587 = vmatpush1.bf16.msra.mxu0 0
    %3588 = vmatprep.subr.bf16.mxu0 0
    %3589 = vmatpush1.bf16.msra.mxu0 0
    %3590 = vmatprep.subr.bf16.mxu0 0
    %3591 = vmatpush1.bf16.msra.mxu0 0
    %3592 = vmatprep.subr.bf16.mxu0 0
    %3593 = vmatpush1.bf16.msra.mxu0 0
    %3594 = vmatprep.subr.bf16.mxu0 0
    %3595 = vmatpush1.bf16.msra.mxu0 0
    %3596 = vmatprep.subr.bf16.mxu0 0
    %3597 = vmatpush1.bf16.msra.mxu0 0
    %3598 = vmatprep.subr.bf16.mxu0 0
    %3599 = vmatpush1.bf16.msra.mxu0 0
    %3600 = vmatprep.subr.bf16.mxu0 0
    %3601 = vmatpush1.bf16.msra.mxu0 0
    %3602 = vmatprep.mubr.bf16.mxu0 0
    %3603 = vmatmul.mubr.bf16.gmra.mrb[0].mxu0 %v435
    %v3604 = vpop.f32.mrb[0].mxu0
    %v3605 = vadd.f32 %v3452, %v3604
    %v3606 = vpop.f32.mrb[0].mxu0
    %v3607 = vadd.f32 %v3454, %v3606
    %v3608 = vpop.f32.mrb[0].mxu0
    %v3609 = vpop.f32.mrb[0].mxu0
    %3610 = vdwg.mxu0
    %v3611 = vld [vmem:[#allocation19] sm:$0x3f]
    %v3613 = vlaneseq
    %v3614 = vshrl.u32 %v3613, 7
    %v3615 = vsub.s32 0, %v3614
    %v3616 = vrot.slane %v3611, %v3615
    %v3617 = vlaneseq
    %v3618 = vshrl.u32 %v3617, 7
    %v3619 = vsub.s32 1, %v3618
    %v3620 = vrot.slane %v3611, %v3619
    %v3621 = vlaneseq
    %v3622 = vshrl.u32 %v3621, 7
    %v3623 = vsub.s32 2, %v3622
    %v3624 = vrot.slane %v3611, %v3623
    %v3625 = vlaneseq
    %v3626 = vshrl.u32 %v3625, 7
    %v3627 = vsub.s32 3, %v3626
    %v3628 = vrot.slane %v3611, %v3627
    %v3629 = vlaneseq
    %v3630 = vshrl.u32 %v3629, 7
    %v3631 = vsub.s32 4, %v3630
    %v3632 = vrot.slane %v3611, %v3631
    %v3633 = vlaneseq
    %v3634 = vshrl.u32 %v3633, 7
    %v3635 = vsub.s32 5, %v3634
    %v3636 = vrot.slane %v3611, %v3635
    %v3643 = vadd.f32 %v3523, %v3616
    %v3644 = vadd.f32 %v3525, %v3620
    %v3645 = vadd.f32 %v3564, %v3624
    %v3646 = vadd.f32 %v3566, %v3628
    %v3647 = vadd.f32 %v3605, %v3632
    %v3648 = vadd.f32 %v3607, %v3636
    %v3649 = vmax.f32 %v3643, 0.0
    %v3650 = vmax.f32 %v3644, 0.0
    %v3651 = vmax.f32 %v3645, 0.0
    %v3652 = vmax.f32 %v3646, 0.0
    %v3653 = vmax.f32 %v3647, 0.0
    %v3654 = vmax.f32 %v3648, 0.0
    %v3655 = vpack.c.bf16 %v3649, %v3649
    %v3656 = vpack.c.bf16 %v3650, %v3650
    %v3657 = vpack.c.bf16 %v3651, %v3651
    %v3658 = vpack.c.bf16 %v3652, %v3652
    %v3659 = vpack.c.bf16 %v3653, %v3653
    %v3660 = vpack.c.bf16 %v3654, %v3654
    %v3661 = vld [vmem:[#allocation20] sm:$0xff]
    %v3662 = vld [vmem:[#allocation20 + $0x8] sm:$0xff]
    %v3663 = vld [vmem:[#allocation20 + $0x10] sm:$0xff]
    %v3664 = vld [vmem:[#allocation20 + $0x18] sm:$0xff]
    %v3665 = vld [vmem:[#allocation20 + $0x20] sm:$0xff]
    %v3666 = vld [vmem:[#allocation20 + $0x28] sm:$0xff]
    %v3667 = vld [vmem:[#allocation20 + $0x30] sm:$0xff]
    %v3668 = vld [vmem:[#allocation20 + $0x38] sm:$0xff]
    %v3669 = vld [vmem:[#allocation20 + $0x40] sm:$0xff]
    %v3670 = vld [vmem:[#allocation20 + $0x48] sm:$0xff]
    %v3671 = vld [vmem:[#allocation20 + $0x50] sm:$0xff]
    %v3672 = vld [vmem:[#allocation20 + $0x58] sm:$0xff]
    %v3673 = vld [vmem:[#allocation20 + $0x60] sm:$0xff]
    %v3674 = vld [vmem:[#allocation20 + $0x68] sm:$0xff]
    %v3675 = vld [vmem:[#allocation20 + $0x70] sm:$0xff]
    %v3676 = vld [vmem:[#allocation20 + $0x78] sm:$0xff]
    %v3677 = vld [vmem:[#allocation20 + $0x80] sm:$0xff]
    %v3678 = vld [vmem:[#allocation20 + $0x88] sm:$0xff]
    %v3679 = vld [vmem:[#allocation20 + $0x90] sm:$0xff]
    %v3680 = vld [vmem:[#allocation20 + $0x98] sm:$0xff]
    %v3681 = vld [vmem:[#allocation20 + $0xa0] sm:$0xff]
    %v3682 = vld [vmem:[#allocation20 + $0xa8] sm:$0xff]
    %v3683 = vld [vmem:[#allocation20 + $0xb0] sm:$0xff]
    %v3684 = vld [vmem:[#allocation20 + $0xb8] sm:$0xff]
    %v3685 = vld [vmem:[#allocation20 + $0xc0] sm:$0xff]
    %v3686 = vld [vmem:[#allocation20 + $0xc8] sm:$0xff]
    %v3687 = vld [vmem:[#allocation20 + $0xd0] sm:$0xff]
    %v3688 = vld [vmem:[#allocation20 + $0xd8] sm:$0xff]
    %v3689 = vld [vmem:[#allocation20 + $0xe0] sm:$0xff]
    %v3690 = vld [vmem:[#allocation20 + $0xe8] sm:$0xff]
    %v3691 = vld [vmem:[#allocation20 + $0xf0] sm:$0xff]
    %v3692 = vld [vmem:[#allocation20 + $0xf8] sm:$0xff]
    %v3693 = vld [vmem:[#allocation20 + $0x100] sm:$0xff]
    %v3694 = vld [vmem:[#allocation20 + $0x108] sm:$0xff]
    %v3695 = vld [vmem:[#allocation20 + $0x110] sm:$0xff]
    %v3696 = vld [vmem:[#allocation20 + $0x118] sm:$0xff]
    %v3697 = vld [vmem:[#allocation20 + $0x120] sm:$0xff]
    %v3698 = vld [vmem:[#allocation20 + $0x128] sm:$0xff]
    %v3699 = vld [vmem:[#allocation20 + $0x130] sm:$0xff]
    %v3700 = vld [vmem:[#allocation20 + $0x138] sm:$0xff]
    %v3701 = vld [vmem:[#allocation20 + $0x140] sm:$0xff]
    %v3702 = vld [vmem:[#allocation20 + $0x148] sm:$0xff]
    %v3703 = vld [vmem:[#allocation20 + $0x150] sm:$0xff]
    %v3704 = vld [vmem:[#allocation20 + $0x158] sm:$0xff]
    %v3705 = vld [vmem:[#allocation20 + $0x160] sm:$0xff]
    %v3706 = vld [vmem:[#allocation20 + $0x168] sm:$0xff]
    %v3707 = vld [vmem:[#allocation20 + $0x170] sm:$0xff]
    %v3708 = vld [vmem:[#allocation20 + $0x178] sm:$0xff]
    %v3709 = vld [vmem:[#allocation20 + $0x180] sm:$0xff]
    %v3710 = vld [vmem:[#allocation20 + $0x188] sm:$0xff]
    %v3711 = vld [vmem:[#allocation20 + $0x190] sm:$0xff]
    %v3712 = vld [vmem:[#allocation20 + $0x198] sm:$0xff]
    %v3713 = vld [vmem:[#allocation20 + $0x1a0] sm:$0xff]
    %v3714 = vld [vmem:[#allocation20 + $0x1a8] sm:$0xff]
    %v3715 = vld [vmem:[#allocation20 + $0x1b0] sm:$0xff]
    %v3716 = vld [vmem:[#allocation20 + $0x1b8] sm:$0xff]
    %v3717 = vld [vmem:[#allocation20 + $0x1c0] sm:$0xff]
    %v3718 = vld [vmem:[#allocation20 + $0x1c8] sm:$0xff]
    %v3719 = vld [vmem:[#allocation20 + $0x1d0] sm:$0xff]
    %v3720 = vld [vmem:[#allocation20 + $0x1d8] sm:$0xff]
    %v3721 = vld [vmem:[#allocation20 + $0x1e0] sm:$0xff]
    %v3722 = vld [vmem:[#allocation20 + $0x1e8] sm:$0xff]
    %v3723 = vld [vmem:[#allocation20 + $0x1f0] sm:$0xff]
    %v3724 = vld [vmem:[#allocation20 + $0x1f8] sm:$0xff]
    %v3725 = vld [vmem:[#allocation20 + $0x200] sm:$0xff]
    %v3726 = vld [vmem:[#allocation20 + $0x208] sm:$0xff]
    %v3727 = vld [vmem:[#allocation20 + $0x210] sm:$0xff]
    %v3728 = vld [vmem:[#allocation20 + $0x218] sm:$0xff]
    %v3729 = vld [vmem:[#allocation20 + $0x220] sm:$0xff]
    %v3730 = vld [vmem:[#allocation20 + $0x228] sm:$0xff]
    %v3731 = vld [vmem:[#allocation20 + $0x230] sm:$0xff]
    %v3732 = vld [vmem:[#allocation20 + $0x238] sm:$0xff]
    %v3733 = vld [vmem:[#allocation20 + $0x240] sm:$0xff]
    %v3734 = vld [vmem:[#allocation20 + $0x248] sm:$0xff]
    %v3735 = vld [vmem:[#allocation20 + $0x250] sm:$0xff]
    %v3736 = vld [vmem:[#allocation20 + $0x258] sm:$0xff]
    %v3737 = vld [vmem:[#allocation20 + $0x260] sm:$0xff]
    %v3738 = vld [vmem:[#allocation20 + $0x268] sm:$0xff]
    %v3739 = vld [vmem:[#allocation20 + $0x270] sm:$0xff]
    %v3740 = vld [vmem:[#allocation20 + $0x278] sm:$0xff]
    %v3741 = vld [vmem:[#allocation20 + $0x280] sm:$0xff]
    %v3742 = vld [vmem:[#allocation20 + $0x288] sm:$0xff]
    %v3743 = vld [vmem:[#allocation20 + $0x290] sm:$0xff]
    %v3744 = vld [vmem:[#allocation20 + $0x298] sm:$0xff]
    %v3745 = vld [vmem:[#allocation20 + $0x2a0] sm:$0xff]
    %v3746 = vld [vmem:[#allocation20 + $0x2a8] sm:$0xff]
    %v3747 = vld [vmem:[#allocation20 + $0x2b0] sm:$0xff]
    %v3748 = vld [vmem:[#allocation20 + $0x2b8] sm:$0xff]
    %v3749 = vld [vmem:[#allocation20 + $0x2c0] sm:$0xff]
    %v3750 = vld [vmem:[#allocation20 + $0x2c8] sm:$0xff]
    %v3751 = vld [vmem:[#allocation20 + $0x2d0] sm:$0xff]
    %v3752 = vld [vmem:[#allocation20 + $0x2d8] sm:$0xff]
    %v3753 = vld [vmem:[#allocation20 + $0x2e0] sm:$0xff]
    %v3754 = vld [vmem:[#allocation20 + $0x2e8] sm:$0xff]
    %v3755 = vld [vmem:[#allocation20 + $0x2f0] sm:$0xff]
    %v3756 = vld [vmem:[#allocation20 + $0x2f8] sm:$0xff]
    %v3757 = vld [vmem:[#allocation20 + $0x300] sm:$0xff]
    %v3758 = vld [vmem:[#allocation20 + $0x308] sm:$0xff]
    %v3759 = vld [vmem:[#allocation20 + $0x310] sm:$0xff]
    %v3760 = vld [vmem:[#allocation20 + $0x318] sm:$0xff]
    %v3761 = vld [vmem:[#allocation20 + $0x320] sm:$0xff]
    %v3762 = vld [vmem:[#allocation20 + $0x328] sm:$0xff]
    %v3763 = vld [vmem:[#allocation20 + $0x330] sm:$0xff]
    %v3764 = vld [vmem:[#allocation20 + $0x338] sm:$0xff]
    %v3765 = vld [vmem:[#allocation20 + $0x340] sm:$0xff]
    %v3766 = vld [vmem:[#allocation20 + $0x348] sm:$0xff]
    %v3767 = vld [vmem:[#allocation20 + $0x350] sm:$0xff]
    %v3768 = vld [vmem:[#allocation20 + $0x358] sm:$0xff]
    %v3769 = vld [vmem:[#allocation20 + $0x360] sm:$0xff]
    %v3770 = vld [vmem:[#allocation20 + $0x368] sm:$0xff]
    %v3771 = vld [vmem:[#allocation20 + $0x370] sm:$0xff]
    %v3772 = vld [vmem:[#allocation20 + $0x378] sm:$0xff]
    %v3773 = vld [vmem:[#allocation20 + $0x380] sm:$0xff]
    %v3774 = vld [vmem:[#allocation20 + $0x388] sm:$0xff]
    %v3775 = vld [vmem:[#allocation20 + $0x390] sm:$0xff]
    %v3776 = vld [vmem:[#allocation20 + $0x398] sm:$0xff]
    %v3777 = vld [vmem:[#allocation20 + $0x3a0] sm:$0xff]
    %v3778 = vld [vmem:[#allocation20 + $0x3a8] sm:$0xff]
    %v3779 = vld [vmem:[#allocation20 + $0x3b0] sm:$0xff]
    %v3780 = vld [vmem:[#allocation20 + $0x3b8] sm:$0xff]
    %v3781 = vld [vmem:[#allocation20 + $0x3c0] sm:$0xff]
    %v3782 = vld [vmem:[#allocation20 + $0x3c8] sm:$0xff]
    %v3783 = vld [vmem:[#allocation20 + $0x3d0] sm:$0xff]
    %v3784 = vld [vmem:[#allocation20 + $0x3d8] sm:$0xff]
    %v3785 = vld [vmem:[#allocation20 + $0x3e0] sm:$0xff]
    %v3786 = vld [vmem:[#allocation20 + $0x3e8] sm:$0xff]
    %v3787 = vld [vmem:[#allocation20 + $0x3f0] sm:$0xff]
    %v3788 = vld [vmem:[#allocation20 + $0x3f8] sm:$0xff]
    %v3789 = vld [vmem:[#allocation20 + $0x400] sm:$0xff]
    %v3790 = vld [vmem:[#allocation20 + $0x408] sm:$0xff]
    %v3791 = vld [vmem:[#allocation20 + $0x410] sm:$0xff]
    %v3792 = vld [vmem:[#allocation20 + $0x418] sm:$0xff]
    %v3793 = vld [vmem:[#allocation20 + $0x420] sm:$0xff]
    %v3794 = vld [vmem:[#allocation20 + $0x428] sm:$0xff]
    %v3795 = vld [vmem:[#allocation20 + $0x430] sm:$0xff]
    %v3796 = vld [vmem:[#allocation20 + $0x438] sm:$0xff]
    %v3797 = vld [vmem:[#allocation20 + $0x440] sm:$0xff]
    %v3798 = vld [vmem:[#allocation20 + $0x448] sm:$0xff]
    %v3799 = vld [vmem:[#allocation20 + $0x450] sm:$0xff]
    %v3800 = vld [vmem:[#allocation20 + $0x458] sm:$0xff]
    %v3801 = vld [vmem:[#allocation20 + $0x460] sm:$0xff]
    %v3802 = vld [vmem:[#allocation20 + $0x468] sm:$0xff]
    %v3803 = vld [vmem:[#allocation20 + $0x470] sm:$0xff]
    %v3804 = vld [vmem:[#allocation20 + $0x478] sm:$0xff]
    %v3805 = vld [vmem:[#allocation20 + $0x480] sm:$0xff]
    %v3806 = vld [vmem:[#allocation20 + $0x488] sm:$0xff]
    %v3807 = vld [vmem:[#allocation20 + $0x490] sm:$0xff]
    %v3808 = vld [vmem:[#allocation20 + $0x498] sm:$0xff]
    %v3809 = vld [vmem:[#allocation20 + $0x4a0] sm:$0xff]
    %v3810 = vld [vmem:[#allocation20 + $0x4a8] sm:$0xff]
    %v3811 = vld [vmem:[#allocation20 + $0x4b0] sm:$0xff]
    %v3812 = vld [vmem:[#allocation20 + $0x4b8] sm:$0xff]
    %v3813 = vld [vmem:[#allocation20 + $0x4c0] sm:$0xff]
    %v3814 = vld [vmem:[#allocation20 + $0x4c8] sm:$0xff]
    %v3815 = vld [vmem:[#allocation20 + $0x4d0] sm:$0xff]
    %v3816 = vld [vmem:[#allocation20 + $0x4d8] sm:$0xff]
    %v3817 = vld [vmem:[#allocation20 + $0x4e0] sm:$0xff]
    %v3818 = vld [vmem:[#allocation20 + $0x4e8] sm:$0xff]
    %v3819 = vld [vmem:[#allocation20 + $0x4f0] sm:$0xff]
    %v3820 = vld [vmem:[#allocation20 + $0x4f8] sm:$0xff]
    %v3821 = vld [vmem:[#allocation20 + $0x500] sm:$0xff]
    %v3822 = vld [vmem:[#allocation20 + $0x508] sm:$0xff]
    %v3823 = vld [vmem:[#allocation20 + $0x510] sm:$0xff]
    %v3824 = vld [vmem:[#allocation20 + $0x518] sm:$0xff]
    %v3825 = vld [vmem:[#allocation20 + $0x520] sm:$0xff]
    %v3826 = vld [vmem:[#allocation20 + $0x528] sm:$0xff]
    %v3827 = vld [vmem:[#allocation20 + $0x530] sm:$0xff]
    %v3828 = vld [vmem:[#allocation20 + $0x538] sm:$0xff]
    %v3829 = vld [vmem:[#allocation20 + $0x540] sm:$0xff]
    %v3830 = vld [vmem:[#allocation20 + $0x548] sm:$0xff]
    %v3831 = vld [vmem:[#allocation20 + $0x550] sm:$0xff]
    %v3832 = vld [vmem:[#allocation20 + $0x558] sm:$0xff]
    %v3833 = vld [vmem:[#allocation20 + $0x560] sm:$0xff]
    %v3834 = vld [vmem:[#allocation20 + $0x568] sm:$0xff]
    %v3835 = vld [vmem:[#allocation20 + $0x570] sm:$0xff]
    %v3836 = vld [vmem:[#allocation20 + $0x578] sm:$0xff]
    %v3837 = vld [vmem:[#allocation20 + $0x580] sm:$0xff]
    %v3838 = vld [vmem:[#allocation20 + $0x588] sm:$0xff]
    %v3839 = vld [vmem:[#allocation20 + $0x590] sm:$0xff]
    %v3840 = vld [vmem:[#allocation20 + $0x598] sm:$0xff]
    %v3841 = vld [vmem:[#allocation20 + $0x5a0] sm:$0xff]
    %v3842 = vld [vmem:[#allocation20 + $0x5a8] sm:$0xff]
    %v3843 = vld [vmem:[#allocation20 + $0x5b0] sm:$0xff]
    %v3844 = vld [vmem:[#allocation20 + $0x5b8] sm:$0xff]
    %v3845 = vld [vmem:[#allocation20 + $0x5c0] sm:$0xff]
    %v3846 = vld [vmem:[#allocation20 + $0x5c8] sm:$0xff]
    %v3847 = vld [vmem:[#allocation20 + $0x5d0] sm:$0xff]
    %v3848 = vld [vmem:[#allocation20 + $0x5d8] sm:$0xff]
    %v3849 = vld [vmem:[#allocation20 + $0x5e0] sm:$0xff]
    %v3850 = vld [vmem:[#allocation20 + $0x5e8] sm:$0xff]
    %v3851 = vld [vmem:[#allocation20 + $0x5f0] sm:$0xff]
    %v3852 = vld [vmem:[#allocation20 + $0x5f8] sm:$0xff]
    %v3853 = vld [vmem:[#allocation20 + $0x600] sm:$0xff]
    %v3854 = vld [vmem:[#allocation20 + $0x608] sm:$0xff]
    %v3855 = vld [vmem:[#allocation20 + $0x610] sm:$0xff]
    %v3856 = vld [vmem:[#allocation20 + $0x618] sm:$0xff]
    %v3857 = vld [vmem:[#allocation20 + $0x620] sm:$0xff]
    %v3858 = vld [vmem:[#allocation20 + $0x628] sm:$0xff]
    %v3859 = vld [vmem:[#allocation20 + $0x630] sm:$0xff]
    %v3860 = vld [vmem:[#allocation20 + $0x638] sm:$0xff]
    %v3861 = vld [vmem:[#allocation20 + $0x640] sm:$0xff]
    %v3862 = vld [vmem:[#allocation20 + $0x648] sm:$0xff]
    %v3863 = vld [vmem:[#allocation20 + $0x650] sm:$0xff]
    %v3864 = vld [vmem:[#allocation20 + $0x658] sm:$0xff]
    %v3865 = vld [vmem:[#allocation20 + $0x660] sm:$0xff]
    %v3866 = vld [vmem:[#allocation20 + $0x668] sm:$0xff]
    %v3867 = vld [vmem:[#allocation20 + $0x670] sm:$0xff]
    %v3868 = vld [vmem:[#allocation20 + $0x678] sm:$0xff]
    %v3869 = vld [vmem:[#allocation20 + $0x680] sm:$0xff]
    %v3870 = vld [vmem:[#allocation20 + $0x688] sm:$0xff]
    %v3871 = vld [vmem:[#allocation20 + $0x690] sm:$0xff]
    %v3872 = vld [vmem:[#allocation20 + $0x698] sm:$0xff]
    %v3873 = vld [vmem:[#allocation20 + $0x6a0] sm:$0xff]
    %v3874 = vld [vmem:[#allocation20 + $0x6a8] sm:$0xff]
    %v3875 = vld [vmem:[#allocation20 + $0x6b0] sm:$0xff]
    %v3876 = vld [vmem:[#allocation20 + $0x6b8] sm:$0xff]
    %v3877 = vld [vmem:[#allocation20 + $0x6c0] sm:$0xff]
    %v3878 = vld [vmem:[#allocation20 + $0x6c8] sm:$0xff]
    %v3879 = vld [vmem:[#allocation20 + $0x6d0] sm:$0xff]
    %v3880 = vld [vmem:[#allocation20 + $0x6d8] sm:$0xff]
    %v3881 = vld [vmem:[#allocation20 + $0x6e0] sm:$0xff]
    %v3882 = vld [vmem:[#allocation20 + $0x6e8] sm:$0xff]
    %v3883 = vld [vmem:[#allocation20 + $0x6f0] sm:$0xff]
    %v3884 = vld [vmem:[#allocation20 + $0x6f8] sm:$0xff]
    %v3885 = vld [vmem:[#allocation20 + $0x700] sm:$0xff]
    %v3886 = vld [vmem:[#allocation20 + $0x708] sm:$0xff]
    %v3887 = vld [vmem:[#allocation20 + $0x710] sm:$0xff]
    %v3888 = vld [vmem:[#allocation20 + $0x718] sm:$0xff]
    %v3889 = vld [vmem:[#allocation20 + $0x720] sm:$0xff]
    %v3890 = vld [vmem:[#allocation20 + $0x728] sm:$0xff]
    %v3891 = vld [vmem:[#allocation20 + $0x730] sm:$0xff]
    %v3892 = vld [vmem:[#allocation20 + $0x738] sm:$0xff]
    %v3893 = vld [vmem:[#allocation20 + $0x740] sm:$0xff]
    %v3894 = vld [vmem:[#allocation20 + $0x748] sm:$0xff]
    %v3895 = vld [vmem:[#allocation20 + $0x750] sm:$0xff]
    %v3896 = vld [vmem:[#allocation20 + $0x758] sm:$0xff]
    %v3897 = vld [vmem:[#allocation20 + $0x760] sm:$0xff]
    %v3898 = vld [vmem:[#allocation20 + $0x768] sm:$0xff]
    %v3899 = vld [vmem:[#allocation20 + $0x770] sm:$0xff]
    %v3900 = vld [vmem:[#allocation20 + $0x778] sm:$0xff]
    %v3901 = vld [vmem:[#allocation20 + $0x780] sm:$0xff]
    %v3902 = vld [vmem:[#allocation20 + $0x788] sm:$0xff]
    %v3903 = vld [vmem:[#allocation20 + $0x790] sm:$0xff]
    %v3904 = vld [vmem:[#allocation20 + $0x798] sm:$0xff]
    %v3905 = vld [vmem:[#allocation20 + $0x7a0] sm:$0xff]
    %v3906 = vld [vmem:[#allocation20 + $0x7a8] sm:$0xff]
    %v3907 = vld [vmem:[#allocation20 + $0x7b0] sm:$0xff]
    %v3908 = vld [vmem:[#allocation20 + $0x7b8] sm:$0xff]
    %v3909 = vld [vmem:[#allocation20 + $0x7c0] sm:$0xff]
    %v3910 = vld [vmem:[#allocation20 + $0x7c8] sm:$0xff]
    %v3911 = vld [vmem:[#allocation20 + $0x7d0] sm:$0xff]
    %v3912 = vld [vmem:[#allocation20 + $0x7d8] sm:$0xff]
    %v3913 = vld [vmem:[#allocation20 + $0x7e0] sm:$0xff]
    %v3914 = vld [vmem:[#allocation20 + $0x7e8] sm:$0xff]
    %v3915 = vld [vmem:[#allocation20 + $0x7f0] sm:$0xff]
    %v3916 = vld [vmem:[#allocation20 + $0x7f8] sm:$0xff]
    %v3917 = vld [vmem:[#allocation20 + $0x800] sm:$0xff]
    %v3918 = vld [vmem:[#allocation20 + $0x808] sm:$0xff]
    %v3919 = vld [vmem:[#allocation20 + $0x810] sm:$0xff]
    %v3920 = vld [vmem:[#allocation20 + $0x818] sm:$0xff]
    %v3921 = vld [vmem:[#allocation20 + $0x820] sm:$0xff]
    %v3922 = vld [vmem:[#allocation20 + $0x828] sm:$0xff]
    %v3923 = vld [vmem:[#allocation20 + $0x830] sm:$0xff]
    %v3924 = vld [vmem:[#allocation20 + $0x838] sm:$0xff]
    %v3925 = vld [vmem:[#allocation20 + $0x840] sm:$0xff]
    %v3926 = vld [vmem:[#allocation20 + $0x848] sm:$0xff]
    %v3927 = vld [vmem:[#allocation20 + $0x850] sm:$0xff]
    %v3928 = vld [vmem:[#allocation20 + $0x858] sm:$0xff]
    %v3929 = vld [vmem:[#allocation20 + $0x860] sm:$0xff]
    %v3930 = vld [vmem:[#allocation20 + $0x868] sm:$0xff]
    %v3931 = vld [vmem:[#allocation20 + $0x870] sm:$0xff]
    %v3932 = vld [vmem:[#allocation20 + $0x878] sm:$0xff]
    %v3933 = vld [vmem:[#allocation20 + $0x880] sm:$0xff]
    %v3934 = vld [vmem:[#allocation20 + $0x888] sm:$0xff]
    %v3935 = vld [vmem:[#allocation20 + $0x890] sm:$0xff]
    %v3936 = vld [vmem:[#allocation20 + $0x898] sm:$0xff]
    %v3937 = vld [vmem:[#allocation20 + $0x8a0] sm:$0xff]
    %v3938 = vld [vmem:[#allocation20 + $0x8a8] sm:$0xff]
    %v3939 = vld [vmem:[#allocation20 + $0x8b0] sm:$0xff]
    %v3940 = vld [vmem:[#allocation20 + $0x8b8] sm:$0xff]
    %v3941 = vld [vmem:[#allocation20 + $0x8c0] sm:$0xff]
    %v3942 = vld [vmem:[#allocation20 + $0x8c8] sm:$0xff]
    %v3943 = vld [vmem:[#allocation20 + $0x8d0] sm:$0xff]
    %v3944 = vld [vmem:[#allocation20 + $0x8d8] sm:$0xff]
    %v3945 = vld [vmem:[#allocation20 + $0x8e0] sm:$0xff]
    %v3946 = vld [vmem:[#allocation20 + $0x8e8] sm:$0xff]
    %v3947 = vld [vmem:[#allocation20 + $0x8f0] sm:$0xff]
    %v3948 = vld [vmem:[#allocation20 + $0x8f8] sm:$0xff]
    %v3949 = vld [vmem:[#allocation22] sm:$0x3f]
    %v3951 = vlaneseq
    %v3952 = vshrl.u32 %v3951, 7
    %v3953 = vsub.s32 0, %v3952
    %v3954 = vrot.slane %v3949, %v3953
    %v3955 = vlaneseq
    %v3956 = vshrl.u32 %v3955, 7
    %v3957 = vsub.s32 1, %v3956
    %v3958 = vrot.slane %v3949, %v3957
    %v3959 = vlaneseq
    %v3960 = vshrl.u32 %v3959, 7
    %v3961 = vsub.s32 2, %v3960
    %v3962 = vrot.slane %v3949, %v3961
    %v3963 = vlaneseq
    %v3964 = vshrl.u32 %v3963, 7
    %v3965 = vsub.s32 3, %v3964
    %v3966 = vrot.slane %v3949, %v3965
    %v3967 = vlaneseq
    %v3968 = vshrl.u32 %v3967, 7
    %v3969 = vsub.s32 4, %v3968
    %v3970 = vrot.slane %v3949, %v3969
    %v3971 = vlaneseq
    %v3972 = vshrl.u32 %v3971, 7
    %v3973 = vsub.s32 5, %v3972
    %v3974 = vrot.slane %v3949, %v3973
    %v4269 = vunpack.c.l.b16 %v3661
    %v4270 = vunpack.c.h.b16 %v3661
    %v4271 = vunpack.c.l.b16 %v3662
    %v4272 = vunpack.c.h.b16 %v3662
    %v4273 = vunpack.c.l.b16 %v3663
    %v4274 = vunpack.c.h.b16 %v3663
    %v4275 = vunpack.c.l.b16 %v3664
    %v4276 = vunpack.c.h.b16 %v3664
    %v4277 = vunpack.c.l.b16 %v3665
    %v4278 = vunpack.c.h.b16 %v3665
    %v4279 = vunpack.c.l.b16 %v3666
    %v4280 = vunpack.c.h.b16 %v3666
    %v4281 = vunpack.c.l.b16 %v3667
    %v4282 = vunpack.c.h.b16 %v3667
    %v4283 = vunpack.c.l.b16 %v3668
    %v4284 = vunpack.c.h.b16 %v3668
    %v4285 = vunpack.c.l.b16 %v3669
    %v4286 = vunpack.c.h.b16 %v3669
    %v4287 = vunpack.c.l.b16 %v3670
    %v4288 = vunpack.c.h.b16 %v3670
    %v4289 = vunpack.c.l.b16 %v3671
    %v4290 = vunpack.c.h.b16 %v3671
    %v4291 = vunpack.c.l.b16 %v3672
    %v4292 = vunpack.c.h.b16 %v3672
    %v4293 = vunpack.c.l.b16 %v3673
    %v4294 = vunpack.c.h.b16 %v3673
    %v4295 = vunpack.c.l.b16 %v3674
    %v4296 = vunpack.c.h.b16 %v3674
    %v4297 = vunpack.c.l.b16 %v3675
    %v4298 = vunpack.c.h.b16 %v3675
    %v4299 = vunpack.c.l.b16 %v3676
    %v4300 = vunpack.c.h.b16 %v3676
    %v4301 = vunpack.c.l.b16 %v3677
    %v4302 = vunpack.c.h.b16 %v3677
    %v4303 = vunpack.c.l.b16 %v3678
    %v4304 = vunpack.c.h.b16 %v3678
    %v4305 = vunpack.c.l.b16 %v3679
    %v4306 = vunpack.c.h.b16 %v3679
    %v4307 = vunpack.c.l.b16 %v3680
    %v4308 = vunpack.c.h.b16 %v3680
    %v4309 = vunpack.c.l.b16 %v3681
    %v4310 = vunpack.c.h.b16 %v3681
    %v4311 = vunpack.c.l.b16 %v3682
    %v4312 = vunpack.c.h.b16 %v3682
    %v4313 = vunpack.c.l.b16 %v3683
    %v4314 = vunpack.c.h.b16 %v3683
    %v4315 = vunpack.c.l.b16 %v3684
    %v4316 = vunpack.c.h.b16 %v3684
    %v4317 = vunpack.c.l.b16 %v3685
    %v4318 = vunpack.c.h.b16 %v3685
    %v4319 = vunpack.c.l.b16 %v3686
    %v4320 = vunpack.c.h.b16 %v3686
    %v4321 = vunpack.c.l.b16 %v3687
    %v4322 = vunpack.c.h.b16 %v3687
    %v4323 = vunpack.c.l.b16 %v3688
    %v4324 = vunpack.c.h.b16 %v3688
    %v4325 = vunpack.c.l.b16 %v3689
    %v4326 = vunpack.c.h.b16 %v3689
    %v4327 = vunpack.c.l.b16 %v3690
    %v4328 = vunpack.c.h.b16 %v3690
    %v4329 = vunpack.c.l.b16 %v3691
    %v4330 = vunpack.c.h.b16 %v3691
    %v4331 = vunpack.c.l.b16 %v3692
    %v4332 = vunpack.c.h.b16 %v3692
    %v4333 = vunpack.c.l.b16 %v3693
    %v4334 = vunpack.c.h.b16 %v3693
    %v4335 = vunpack.c.l.b16 %v3694
    %v4336 = vunpack.c.h.b16 %v3694
    %v4337 = vunpack.c.l.b16 %v3695
    %v4338 = vunpack.c.h.b16 %v3695
    %v4339 = vunpack.c.l.b16 %v3696
    %v4340 = vunpack.c.h.b16 %v3696
    %v4341 = vunpack.c.l.b16 %v3697
    %v4342 = vunpack.c.h.b16 %v3697
    %v4343 = vunpack.c.l.b16 %v3698
    %v4344 = vunpack.c.h.b16 %v3698
    %v4345 = vunpack.c.l.b16 %v3699
    %v4346 = vunpack.c.h.b16 %v3699
    %v4347 = vunpack.c.l.b16 %v3700
    %v4348 = vunpack.c.h.b16 %v3700
    %v4349 = vunpack.c.l.b16 %v3701
    %v4350 = vunpack.c.h.b16 %v3701
    %v4351 = vunpack.c.l.b16 %v3702
    %v4352 = vunpack.c.h.b16 %v3702
    %v4353 = vunpack.c.l.b16 %v3703
    %v4354 = vunpack.c.h.b16 %v3703
    %v4355 = vunpack.c.l.b16 %v3704
    %v4356 = vunpack.c.h.b16 %v3704
    %v4357 = vunpack.c.l.b16 %v3705
    %v4358 = vunpack.c.h.b16 %v3705
    %v4359 = vunpack.c.l.b16 %v3706
    %v4360 = vunpack.c.h.b16 %v3706
    %v4361 = vunpack.c.l.b16 %v3707
    %v4362 = vunpack.c.h.b16 %v3707
    %v4363 = vunpack.c.l.b16 %v3708
    %v4364 = vunpack.c.h.b16 %v3708
    %v4365 = vunpack.c.l.b16 %v3709
    %v4366 = vunpack.c.h.b16 %v3709
    %v4367 = vunpack.c.l.b16 %v3710
    %v4368 = vunpack.c.h.b16 %v3710
    %v4369 = vunpack.c.l.b16 %v3711
    %v4370 = vunpack.c.h.b16 %v3711
    %v4371 = vunpack.c.l.b16 %v3712
    %v4372 = vunpack.c.h.b16 %v3712
    %v4373 = vunpack.c.l.b16 %v3713
    %v4374 = vunpack.c.h.b16 %v3713
    %v4375 = vunpack.c.l.b16 %v3714
    %v4376 = vunpack.c.h.b16 %v3714
    %v4377 = vunpack.c.l.b16 %v3715
    %v4378 = vunpack.c.h.b16 %v3715
    %v4379 = vunpack.c.l.b16 %v3716
    %v4380 = vunpack.c.h.b16 %v3716
    %v4381 = vunpack.c.l.b16 %v3717
    %v4382 = vunpack.c.h.b16 %v3717
    %v4383 = vunpack.c.l.b16 %v3718
    %v4384 = vunpack.c.h.b16 %v3718
    %v4385 = vunpack.c.l.b16 %v3719
    %v4386 = vunpack.c.h.b16 %v3719
    %v4387 = vunpack.c.l.b16 %v3720
    %v4388 = vunpack.c.h.b16 %v3720
    %v4389 = vunpack.c.l.b16 %v3721
    %v4390 = vunpack.c.h.b16 %v3721
    %v4391 = vunpack.c.l.b16 %v3722
    %v4392 = vunpack.c.h.b16 %v3722
    %v4393 = vunpack.c.l.b16 %v3723
    %v4394 = vunpack.c.h.b16 %v3723
    %v4395 = vunpack.c.l.b16 %v3724
    %v4396 = vunpack.c.h.b16 %v3724
    %v4397 = vunpack.c.l.b16 %v3725
    %v4398 = vunpack.c.h.b16 %v3725
    %v4399 = vunpack.c.l.b16 %v3726
    %v4400 = vunpack.c.h.b16 %v3726
    %v4401 = vunpack.c.l.b16 %v3727
    %v4402 = vunpack.c.h.b16 %v3727
    %v4403 = vunpack.c.l.b16 %v3728
    %v4404 = vunpack.c.h.b16 %v3728
    %v4405 = vunpack.c.l.b16 %v3729
    %v4406 = vunpack.c.h.b16 %v3729
    %v4407 = vunpack.c.l.b16 %v3730
    %v4408 = vunpack.c.h.b16 %v3730
    %v4409 = vunpack.c.l.b16 %v3731
    %v4410 = vunpack.c.h.b16 %v3731
    %v4411 = vunpack.c.l.b16 %v3732
    %v4412 = vunpack.c.h.b16 %v3732
    %v4413 = vunpack.c.l.b16 %v3733
    %v4414 = vunpack.c.h.b16 %v3733
    %v4415 = vunpack.c.l.b16 %v3734
    %v4416 = vunpack.c.h.b16 %v3734
    %v4417 = vunpack.c.l.b16 %v3735
    %v4418 = vunpack.c.h.b16 %v3735
    %v4419 = vunpack.c.l.b16 %v3736
    %v4420 = vunpack.c.h.b16 %v3736
    %v4421 = vunpack.c.l.b16 %v3737
    %v4422 = vunpack.c.h.b16 %v3737
    %v4423 = vunpack.c.l.b16 %v3738
    %v4424 = vunpack.c.h.b16 %v3738
    %v4425 = vunpack.c.l.b16 %v3739
    %v4426 = vunpack.c.h.b16 %v3739
    %v4427 = vunpack.c.l.b16 %v3740
    %v4428 = vunpack.c.h.b16 %v3740
    %v4429 = vunpack.c.l.b16 %v3741
    %v4430 = vunpack.c.h.b16 %v3741
    %v4431 = vunpack.c.l.b16 %v3742
    %v4432 = vunpack.c.h.b16 %v3742
    %v4433 = vunpack.c.l.b16 %v3743
    %v4434 = vunpack.c.h.b16 %v3743
    %v4435 = vunpack.c.l.b16 %v3744
    %v4436 = vunpack.c.h.b16 %v3744
    %v4437 = vunpack.c.l.b16 %v3745
    %v4438 = vunpack.c.h.b16 %v3745
    %v4439 = vunpack.c.l.b16 %v3746
    %v4440 = vunpack.c.h.b16 %v3746
    %v4441 = vunpack.c.l.b16 %v3747
    %v4442 = vunpack.c.h.b16 %v3747
    %v4443 = vunpack.c.l.b16 %v3748
    %v4444 = vunpack.c.h.b16 %v3748
    %v4445 = vunpack.c.l.b16 %v3749
    %v4446 = vunpack.c.h.b16 %v3749
    %v4447 = vunpack.c.l.b16 %v3750
    %v4448 = vunpack.c.h.b16 %v3750
    %v4449 = vunpack.c.l.b16 %v3751
    %v4450 = vunpack.c.h.b16 %v3751
    %v4451 = vunpack.c.l.b16 %v3752
    %v4452 = vunpack.c.h.b16 %v3752
    %v4453 = vunpack.c.l.b16 %v3753
    %v4454 = vunpack.c.h.b16 %v3753
    %v4455 = vunpack.c.l.b16 %v3754
    %v4456 = vunpack.c.h.b16 %v3754
    %v4457 = vunpack.c.l.b16 %v3755
    %v4458 = vunpack.c.h.b16 %v3755
    %v4459 = vunpack.c.l.b16 %v3756
    %v4460 = vunpack.c.h.b16 %v3756
    %v4461 = vunpack.c.l.b16 %v3757
    %v4462 = vunpack.c.h.b16 %v3757
    %v4463 = vunpack.c.l.b16 %v3758
    %v4464 = vunpack.c.h.b16 %v3758
    %v4465 = vunpack.c.l.b16 %v3759
    %v4466 = vunpack.c.h.b16 %v3759
    %v4467 = vunpack.c.l.b16 %v3760
    %v4468 = vunpack.c.h.b16 %v3760
    %v4469 = vunpack.c.l.b16 %v3761
    %v4470 = vunpack.c.h.b16 %v3761
    %v4471 = vunpack.c.l.b16 %v3762
    %v4472 = vunpack.c.h.b16 %v3762
    %v4473 = vunpack.c.l.b16 %v3763
    %v4474 = vunpack.c.h.b16 %v3763
    %v4475 = vunpack.c.l.b16 %v3764
    %v4476 = vunpack.c.h.b16 %v3764
    %v4477 = vunpack.c.l.b16 %v3765
    %v4478 = vunpack.c.h.b16 %v3765
    %v4479 = vunpack.c.l.b16 %v3766
    %v4480 = vunpack.c.h.b16 %v3766
    %v4481 = vunpack.c.l.b16 %v3767
    %v4482 = vunpack.c.h.b16 %v3767
    %v4483 = vunpack.c.l.b16 %v3768
    %v4484 = vunpack.c.h.b16 %v3768
    %v4485 = vunpack.c.l.b16 %v3769
    %v4486 = vunpack.c.h.b16 %v3769
    %v4487 = vunpack.c.l.b16 %v3770
    %v4488 = vunpack.c.h.b16 %v3770
    %v4489 = vunpack.c.l.b16 %v3771
    %v4490 = vunpack.c.h.b16 %v3771
    %v4491 = vunpack.c.l.b16 %v3772
    %v4492 = vunpack.c.h.b16 %v3772
    %v4493 = vunpack.c.l.b16 %v3773
    %v4494 = vunpack.c.h.b16 %v3773
    %v4495 = vunpack.c.l.b16 %v3774
    %v4496 = vunpack.c.h.b16 %v3774
    %v4497 = vunpack.c.l.b16 %v3775
    %v4498 = vunpack.c.h.b16 %v3775
    %v4499 = vunpack.c.l.b16 %v3776
    %v4500 = vunpack.c.h.b16 %v3776
    %v4501 = vunpack.c.l.b16 %v3777
    %v4502 = vunpack.c.h.b16 %v3777
    %v4503 = vunpack.c.l.b16 %v3778
    %v4504 = vunpack.c.h.b16 %v3778
    %v4505 = vunpack.c.l.b16 %v3779
    %v4506 = vunpack.c.h.b16 %v3779
    %v4507 = vunpack.c.l.b16 %v3780
    %v4508 = vunpack.c.h.b16 %v3780
    %v4509 = vunpack.c.l.b16 %v3781
    %v4510 = vunpack.c.h.b16 %v3781
    %v4511 = vunpack.c.l.b16 %v3782
    %v4512 = vunpack.c.h.b16 %v3782
    %v4513 = vunpack.c.l.b16 %v3783
    %v4514 = vunpack.c.h.b16 %v3783
    %v4515 = vunpack.c.l.b16 %v3784
    %v4516 = vunpack.c.h.b16 %v3784
    %v4517 = vunpack.c.l.b16 %v3785
    %v4518 = vunpack.c.h.b16 %v3785
    %v4519 = vunpack.c.l.b16 %v3786
    %v4520 = vunpack.c.h.b16 %v3786
    %v4521 = vunpack.c.l.b16 %v3787
    %v4522 = vunpack.c.h.b16 %v3787
    %v4523 = vunpack.c.l.b16 %v3788
    %v4524 = vunpack.c.h.b16 %v3788
    %v4525 = vunpack.c.l.b16 %v3789
    %v4526 = vunpack.c.h.b16 %v3789
    %v4527 = vunpack.c.l.b16 %v3790
    %v4528 = vunpack.c.h.b16 %v3790
    %v4529 = vunpack.c.l.b16 %v3791
    %v4530 = vunpack.c.h.b16 %v3791
    %v4531 = vunpack.c.l.b16 %v3792
    %v4532 = vunpack.c.h.b16 %v3792
    %v4533 = vunpack.c.l.b16 %v3793
    %v4534 = vunpack.c.h.b16 %v3793
    %v4535 = vunpack.c.l.b16 %v3794
    %v4536 = vunpack.c.h.b16 %v3794
    %v4537 = vunpack.c.l.b16 %v3795
    %v4538 = vunpack.c.h.b16 %v3795
    %v4539 = vunpack.c.l.b16 %v3796
    %v4540 = vunpack.c.h.b16 %v3796
    %v4541 = vunpack.c.l.b16 %v3797
    %v4542 = vunpack.c.h.b16 %v3797
    %v4543 = vunpack.c.l.b16 %v3798
    %v4544 = vunpack.c.h.b16 %v3798
    %v4545 = vunpack.c.l.b16 %v3799
    %v4546 = vunpack.c.h.b16 %v3799
    %v4547 = vunpack.c.l.b16 %v3800
    %v4548 = vunpack.c.h.b16 %v3800
    %v4549 = vunpack.c.l.b16 %v3801
    %v4550 = vunpack.c.h.b16 %v3801
    %v4551 = vunpack.c.l.b16 %v3802
    %v4552 = vunpack.c.h.b16 %v3802
    %v4553 = vunpack.c.l.b16 %v3803
    %v4554 = vunpack.c.h.b16 %v3803
    %v4555 = vunpack.c.l.b16 %v3804
    %v4556 = vunpack.c.h.b16 %v3804
    %v4557 = vunpack.c.l.b16 %v3805
    %v4558 = vunpack.c.h.b16 %v3805
    %v4559 = vunpack.c.l.b16 %v3806
    %v4560 = vunpack.c.h.b16 %v3806
    %v4561 = vunpack.c.l.b16 %v3807
    %v4562 = vunpack.c.h.b16 %v3807
    %v4563 = vunpack.c.l.b16 %v3808
    %v4564 = vunpack.c.h.b16 %v3808
    %v4565 = vunpack.c.l.b16 %v3809
    %v4566 = vunpack.c.h.b16 %v3809
    %v4567 = vunpack.c.l.b16 %v3810
    %v4568 = vunpack.c.h.b16 %v3810
    %v4569 = vunpack.c.l.b16 %v3811
    %v4570 = vunpack.c.h.b16 %v3811
    %v4571 = vunpack.c.l.b16 %v3812
    %v4572 = vunpack.c.h.b16 %v3812
    %v4573 = vunpack.c.l.b16 %v3813
    %v4574 = vunpack.c.h.b16 %v3813
    %v4575 = vunpack.c.l.b16 %v3814
    %v4576 = vunpack.c.h.b16 %v3814
    %v4577 = vunpack.c.l.b16 %v3815
    %v4578 = vunpack.c.h.b16 %v3815
    %v4579 = vunpack.c.l.b16 %v3816
    %v4580 = vunpack.c.h.b16 %v3816
    %v4581 = vunpack.c.l.b16 %v3817
    %v4582 = vunpack.c.h.b16 %v3817
    %v4583 = vunpack.c.l.b16 %v3818
    %v4584 = vunpack.c.h.b16 %v3818
    %v4585 = vunpack.c.l.b16 %v3819
    %v4586 = vunpack.c.h.b16 %v3819
    %v4587 = vunpack.c.l.b16 %v3820
    %v4588 = vunpack.c.h.b16 %v3820
    %v4589 = vunpack.c.l.b16 %v3821
    %v4590 = vunpack.c.h.b16 %v3821
    %v4591 = vunpack.c.l.b16 %v3822
    %v4592 = vunpack.c.h.b16 %v3822
    %v4593 = vunpack.c.l.b16 %v3823
    %v4594 = vunpack.c.h.b16 %v3823
    %v4595 = vunpack.c.l.b16 %v3824
    %v4596 = vunpack.c.h.b16 %v3824
    %v4597 = vunpack.c.l.b16 %v3825
    %v4598 = vunpack.c.h.b16 %v3825
    %v4599 = vunpack.c.l.b16 %v3826
    %v4600 = vunpack.c.h.b16 %v3826
    %v4601 = vunpack.c.l.b16 %v3827
    %v4602 = vunpack.c.h.b16 %v3827
    %v4603 = vunpack.c.l.b16 %v3828
    %v4604 = vunpack.c.h.b16 %v3828
    %v4605 = vunpack.c.l.b16 %v3829
    %v4606 = vunpack.c.h.b16 %v3829
    %v4607 = vunpack.c.l.b16 %v3830
    %v4608 = vunpack.c.h.b16 %v3830
    %v4609 = vunpack.c.l.b16 %v3831
    %v4610 = vunpack.c.h.b16 %v3831
    %v4611 = vunpack.c.l.b16 %v3832
    %v4612 = vunpack.c.h.b16 %v3832
    %v4613 = vunpack.c.l.b16 %v3833
    %v4614 = vunpack.c.h.b16 %v3833
    %v4615 = vunpack.c.l.b16 %v3834
    %v4616 = vunpack.c.h.b16 %v3834
    %v4617 = vunpack.c.l.b16 %v3835
    %v4618 = vunpack.c.h.b16 %v3835
    %v4619 = vunpack.c.l.b16 %v3836
    %v4620 = vunpack.c.h.b16 %v3836
    %v4621 = vunpack.c.l.b16 %v3837
    %v4622 = vunpack.c.h.b16 %v3837
    %v4623 = vunpack.c.l.b16 %v3838
    %v4624 = vunpack.c.h.b16 %v3838
    %v4625 = vunpack.c.l.b16 %v3839
    %v4626 = vunpack.c.h.b16 %v3839
    %v4627 = vunpack.c.l.b16 %v3840
    %v4628 = vunpack.c.h.b16 %v3840
    %v4629 = vunpack.c.l.b16 %v3841
    %v4630 = vunpack.c.h.b16 %v3841
    %v4631 = vunpack.c.l.b16 %v3842
    %v4632 = vunpack.c.h.b16 %v3842
    %v4633 = vunpack.c.l.b16 %v3843
    %v4634 = vunpack.c.h.b16 %v3843
    %v4635 = vunpack.c.l.b16 %v3844
    %v4636 = vunpack.c.h.b16 %v3844
    %v4637 = vunpack.c.l.b16 %v3845
    %v4638 = vunpack.c.h.b16 %v3845
    %v4639 = vunpack.c.l.b16 %v3846
    %v4640 = vunpack.c.h.b16 %v3846
    %v4641 = vunpack.c.l.b16 %v3847
    %v4642 = vunpack.c.h.b16 %v3847
    %v4643 = vunpack.c.l.b16 %v3848
    %v4644 = vunpack.c.h.b16 %v3848
    %v4645 = vunpack.c.l.b16 %v3849
    %v4646 = vunpack.c.h.b16 %v3849
    %v4647 = vunpack.c.l.b16 %v3850
    %v4648 = vunpack.c.h.b16 %v3850
    %v4649 = vunpack.c.l.b16 %v3851
    %v4650 = vunpack.c.h.b16 %v3851
    %v4651 = vunpack.c.l.b16 %v3852
    %v4652 = vunpack.c.h.b16 %v3852
    %v4653 = vunpack.c.l.b16 %v3853
    %v4654 = vunpack.c.h.b16 %v3853
    %v4655 = vunpack.c.l.b16 %v3854
    %v4656 = vunpack.c.h.b16 %v3854
    %v4657 = vunpack.c.l.b16 %v3855
    %v4658 = vunpack.c.h.b16 %v3855
    %v4659 = vunpack.c.l.b16 %v3856
    %v4660 = vunpack.c.h.b16 %v3856
    %v4661 = vunpack.c.l.b16 %v3857
    %v4662 = vunpack.c.h.b16 %v3857
    %v4663 = vunpack.c.l.b16 %v3858
    %v4664 = vunpack.c.h.b16 %v3858
    %v4665 = vunpack.c.l.b16 %v3859
    %v4666 = vunpack.c.h.b16 %v3859
    %v4667 = vunpack.c.l.b16 %v3860
    %v4668 = vunpack.c.h.b16 %v3860
    %v4669 = vunpack.c.l.b16 %v3861
    %v4670 = vunpack.c.h.b16 %v3861
    %v4671 = vunpack.c.l.b16 %v3862
    %v4672 = vunpack.c.h.b16 %v3862
    %v4673 = vunpack.c.l.b16 %v3863
    %v4674 = vunpack.c.h.b16 %v3863
    %v4675 = vunpack.c.l.b16 %v3864
    %v4676 = vunpack.c.h.b16 %v3864
    %v4677 = vunpack.c.l.b16 %v3865
    %v4678 = vunpack.c.h.b16 %v3865
    %v4679 = vunpack.c.l.b16 %v3866
    %v4680 = vunpack.c.h.b16 %v3866
    %v4681 = vunpack.c.l.b16 %v3867
    %v4682 = vunpack.c.h.b16 %v3867
    %v4683 = vunpack.c.l.b16 %v3868
    %v4684 = vunpack.c.h.b16 %v3868
    %v4685 = vunpack.c.l.b16 %v3869
    %v4686 = vunpack.c.h.b16 %v3869
    %v4687 = vunpack.c.l.b16 %v3870
    %v4688 = vunpack.c.h.b16 %v3870
    %v4689 = vunpack.c.l.b16 %v3871
    %v4690 = vunpack.c.h.b16 %v3871
    %v4691 = vunpack.c.l.b16 %v3872
    %v4692 = vunpack.c.h.b16 %v3872
    %v4693 = vunpack.c.l.b16 %v3873
    %v4694 = vunpack.c.h.b16 %v3873
    %v4695 = vunpack.c.l.b16 %v3874
    %v4696 = vunpack.c.h.b16 %v3874
    %v4697 = vunpack.c.l.b16 %v3875
    %v4698 = vunpack.c.h.b16 %v3875
    %v4699 = vunpack.c.l.b16 %v3876
    %v4700 = vunpack.c.h.b16 %v3876
    %v4701 = vunpack.c.l.b16 %v3877
    %v4702 = vunpack.c.h.b16 %v3877
    %v4703 = vunpack.c.l.b16 %v3878
    %v4704 = vunpack.c.h.b16 %v3878
    %v4705 = vunpack.c.l.b16 %v3879
    %v4706 = vunpack.c.h.b16 %v3879
    %v4707 = vunpack.c.l.b16 %v3880
    %v4708 = vunpack.c.h.b16 %v3880
    %v4709 = vunpack.c.l.b16 %v3881
    %v4710 = vunpack.c.h.b16 %v3881
    %v4711 = vunpack.c.l.b16 %v3882
    %v4712 = vunpack.c.h.b16 %v3882
    %v4713 = vunpack.c.l.b16 %v3883
    %v4714 = vunpack.c.h.b16 %v3883
    %v4715 = vunpack.c.l.b16 %v3884
    %v4716 = vunpack.c.h.b16 %v3884
    %v4717 = vunpack.c.l.b16 %v3885
    %v4718 = vunpack.c.h.b16 %v3885
    %v4719 = vunpack.c.l.b16 %v3886
    %v4720 = vunpack.c.h.b16 %v3886
    %v4721 = vunpack.c.l.b16 %v3887
    %v4722 = vunpack.c.h.b16 %v3887
    %v4723 = vunpack.c.l.b16 %v3888
    %v4724 = vunpack.c.h.b16 %v3888
    %v4725 = vunpack.c.l.b16 %v3889
    %v4726 = vunpack.c.h.b16 %v3889
    %v4727 = vunpack.c.l.b16 %v3890
    %v4728 = vunpack.c.h.b16 %v3890
    %v4729 = vunpack.c.l.b16 %v3891
    %v4730 = vunpack.c.h.b16 %v3891
    %v4731 = vunpack.c.l.b16 %v3892
    %v4732 = vunpack.c.h.b16 %v3892
    %v4733 = vunpack.c.l.b16 %v3893
    %v4734 = vunpack.c.h.b16 %v3893
    %v4735 = vunpack.c.l.b16 %v3894
    %v4736 = vunpack.c.h.b16 %v3894
    %v4737 = vunpack.c.l.b16 %v3895
    %v4738 = vunpack.c.h.b16 %v3895
    %v4739 = vunpack.c.l.b16 %v3896
    %v4740 = vunpack.c.h.b16 %v3896
    %v4741 = vunpack.c.l.b16 %v3897
    %v4742 = vunpack.c.h.b16 %v3897
    %v4743 = vunpack.c.l.b16 %v3898
    %v4744 = vunpack.c.h.b16 %v3898
    %v4745 = vunpack.c.l.b16 %v3899
    %v4746 = vunpack.c.h.b16 %v3899
    %v4747 = vunpack.c.l.b16 %v3900
    %v4748 = vunpack.c.h.b16 %v3900
    %v4749 = vunpack.c.l.b16 %v3901
    %v4750 = vunpack.c.h.b16 %v3901
    %v4751 = vunpack.c.l.b16 %v3902
    %v4752 = vunpack.c.h.b16 %v3902
    %v4753 = vunpack.c.l.b16 %v3903
    %v4754 = vunpack.c.h.b16 %v3903
    %v4755 = vunpack.c.l.b16 %v3904
    %v4756 = vunpack.c.h.b16 %v3904
    %v4757 = vunpack.c.l.b16 %v3905
    %v4758 = vunpack.c.h.b16 %v3905
    %v4759 = vunpack.c.l.b16 %v3906
    %v4760 = vunpack.c.h.b16 %v3906
    %v4761 = vunpack.c.l.b16 %v3907
    %v4762 = vunpack.c.h.b16 %v3907
    %v4763 = vunpack.c.l.b16 %v3908
    %v4764 = vunpack.c.h.b16 %v3908
    %v4765 = vunpack.c.l.b16 %v3909
    %v4766 = vunpack.c.h.b16 %v3909
    %v4767 = vunpack.c.l.b16 %v3910
    %v4768 = vunpack.c.h.b16 %v3910
    %v4769 = vunpack.c.l.b16 %v3911
    %v4770 = vunpack.c.h.b16 %v3911
    %v4771 = vunpack.c.l.b16 %v3912
    %v4772 = vunpack.c.h.b16 %v3912
    %v4773 = vunpack.c.l.b16 %v3913
    %v4774 = vunpack.c.h.b16 %v3913
    %v4775 = vunpack.c.l.b16 %v3914
    %v4776 = vunpack.c.h.b16 %v3914
    %v4777 = vunpack.c.l.b16 %v3915
    %v4778 = vunpack.c.h.b16 %v3915
    %v4779 = vunpack.c.l.b16 %v3916
    %v4780 = vunpack.c.h.b16 %v3916
    %v4781 = vunpack.c.l.b16 %v3917
    %v4782 = vunpack.c.h.b16 %v3917
    %v4783 = vunpack.c.l.b16 %v3918
    %v4784 = vunpack.c.h.b16 %v3918
    %v4785 = vunpack.c.l.b16 %v3919
    %v4786 = vunpack.c.h.b16 %v3919
    %v4787 = vunpack.c.l.b16 %v3920
    %v4788 = vunpack.c.h.b16 %v3920
    %v4789 = vunpack.c.l.b16 %v3921
    %v4790 = vunpack.c.h.b16 %v3921
    %v4791 = vunpack.c.l.b16 %v3922
    %v4792 = vunpack.c.h.b16 %v3922
    %v4793 = vunpack.c.l.b16 %v3923
    %v4794 = vunpack.c.h.b16 %v3923
    %v4795 = vunpack.c.l.b16 %v3924
    %v4796 = vunpack.c.h.b16 %v3924
    %v4797 = vunpack.c.l.b16 %v3925
    %v4798 = vunpack.c.h.b16 %v3925
    %v4799 = vunpack.c.l.b16 %v3926
    %v4800 = vunpack.c.h.b16 %v3926
    %v4801 = vunpack.c.l.b16 %v3927
    %v4802 = vunpack.c.h.b16 %v3927
    %v4803 = vunpack.c.l.b16 %v3928
    %v4804 = vunpack.c.h.b16 %v3928
    %v4805 = vunpack.c.l.b16 %v3929
    %v4806 = vunpack.c.h.b16 %v3929
    %v4807 = vunpack.c.l.b16 %v3930
    %v4808 = vunpack.c.h.b16 %v3930
    %v4809 = vunpack.c.l.b16 %v3931
    %v4810 = vunpack.c.h.b16 %v3931
    %v4811 = vunpack.c.l.b16 %v3932
    %v4812 = vunpack.c.h.b16 %v3932
    %v4813 = vunpack.c.l.b16 %v3933
    %v4814 = vunpack.c.h.b16 %v3933
    %v4815 = vunpack.c.l.b16 %v3934
    %v4816 = vunpack.c.h.b16 %v3934
    %v4817 = vunpack.c.l.b16 %v3935
    %v4818 = vunpack.c.h.b16 %v3935
    %v4819 = vunpack.c.l.b16 %v3936
    %v4820 = vunpack.c.h.b16 %v3936
    %v4821 = vunpack.c.l.b16 %v3937
    %v4822 = vunpack.c.h.b16 %v3937
    %v4823 = vunpack.c.l.b16 %v3938
    %v4824 = vunpack.c.h.b16 %v3938
    %v4825 = vunpack.c.l.b16 %v3939
    %v4826 = vunpack.c.h.b16 %v3939
    %v4827 = vunpack.c.l.b16 %v3940
    %v4828 = vunpack.c.h.b16 %v3940
    %v4829 = vunpack.c.l.b16 %v3941
    %v4830 = vunpack.c.h.b16 %v3941
    %v4831 = vunpack.c.l.b16 %v3942
    %v4832 = vunpack.c.h.b16 %v3942
    %v4833 = vunpack.c.l.b16 %v3943
    %v4834 = vunpack.c.h.b16 %v3943
    %v4835 = vunpack.c.l.b16 %v3944
    %v4836 = vunpack.c.h.b16 %v3944
    %v4837 = vunpack.c.l.b16 %v3945
    %v4838 = vunpack.c.h.b16 %v3945
    %v4839 = vunpack.c.l.b16 %v3946
    %v4840 = vunpack.c.h.b16 %v3946
    %v4841 = vunpack.c.l.b16 %v3947
    %v4842 = vunpack.c.h.b16 %v3947
    %v4843 = vunpack.c.l.b16 %v3948
    %v4844 = vunpack.c.h.b16 %v3948
    %v4845 = vpack.c.b16 %v4275, %v4269
    %v4846 = vpack.c.b16 %v4276, %v4270
    %v4847 = vpack.c.b16 %v4277, %v4271
    %v4848 = vpack.c.b16 %v4278, %v4272
    %v4849 = vpack.c.b16 %v4279, %v4273
    %v4850 = vpack.c.b16 %v4280, %v4274
    %v4851 = vpack.c.b16 %v4287, %v4281
    %v4852 = vpack.c.b16 %v4288, %v4282
    %v4853 = vpack.c.b16 %v4289, %v4283
    %v4854 = vpack.c.b16 %v4290, %v4284
    %v4855 = vpack.c.b16 %v4291, %v4285
    %v4856 = vpack.c.b16 %v4292, %v4286
    %v4857 = vpack.c.b16 %v4299, %v4293
    %v4858 = vpack.c.b16 %v4300, %v4294
    %v4859 = vpack.c.b16 %v4301, %v4295
    %v4860 = vpack.c.b16 %v4302, %v4296
    %v4861 = vpack.c.b16 %v4303, %v4297
    %v4862 = vpack.c.b16 %v4304, %v4298
    %v4863 = vpack.c.b16 %v4311, %v4305
    %v4864 = vpack.c.b16 %v4312, %v4306
    %v4865 = vpack.c.b16 %v4313, %v4307
    %v4866 = vpack.c.b16 %v4314, %v4308
    %v4867 = vpack.c.b16 %v4315, %v4309
    %v4868 = vpack.c.b16 %v4316, %v4310
    %v4869 = vpack.c.b16 %v4323, %v4317
    %v4870 = vpack.c.b16 %v4324, %v4318
    %v4871 = vpack.c.b16 %v4325, %v4319
    %v4872 = vpack.c.b16 %v4326, %v4320
    %v4873 = vpack.c.b16 %v4327, %v4321
    %v4874 = vpack.c.b16 %v4328, %v4322
    %v4875 = vpack.c.b16 %v4335, %v4329
    %v4876 = vpack.c.b16 %v4336, %v4330
    %v4877 = vpack.c.b16 %v4337, %v4331
    %v4878 = vpack.c.b16 %v4338, %v4332
    %v4879 = vpack.c.b16 %v4339, %v4333
    %v4880 = vpack.c.b16 %v4340, %v4334
    %v4881 = vpack.c.b16 %v4347, %v4341
    %v4882 = vpack.c.b16 %v4348, %v4342
    %v4883 = vpack.c.b16 %v4349, %v4343
    %v4884 = vpack.c.b16 %v4350, %v4344
    %v4885 = vpack.c.b16 %v4351, %v4345
    %v4886 = vpack.c.b16 %v4352, %v4346
    %v4887 = vpack.c.b16 %v4359, %v4353
    %v4888 = vpack.c.b16 %v4360, %v4354
    %v4889 = vpack.c.b16 %v4361, %v4355
    %v4890 = vpack.c.b16 %v4362, %v4356
    %v4891 = vpack.c.b16 %v4363, %v4357
    %v4892 = vpack.c.b16 %v4364, %v4358
    %v4893 = vpack.c.b16 %v4371, %v4365
    %v4894 = vpack.c.b16 %v4372, %v4366
    %v4895 = vpack.c.b16 %v4373, %v4367
    %v4896 = vpack.c.b16 %v4374, %v4368
    %v4897 = vpack.c.b16 %v4375, %v4369
    %v4898 = vpack.c.b16 %v4376, %v4370
    %v4899 = vpack.c.b16 %v4383, %v4377
    %v4900 = vpack.c.b16 %v4384, %v4378
    %v4901 = vpack.c.b16 %v4385, %v4379
    %v4902 = vpack.c.b16 %v4386, %v4380
    %v4903 = vpack.c.b16 %v4387, %v4381
    %v4904 = vpack.c.b16 %v4388, %v4382
    %v4905 = vpack.c.b16 %v4395, %v4389
    %v4906 = vpack.c.b16 %v4396, %v4390
    %v4907 = vpack.c.b16 %v4397, %v4391
    %v4908 = vpack.c.b16 %v4398, %v4392
    %v4909 = vpack.c.b16 %v4399, %v4393
    %v4910 = vpack.c.b16 %v4400, %v4394
    %v4911 = vpack.c.b16 %v4407, %v4401
    %v4912 = vpack.c.b16 %v4408, %v4402
    %v4913 = vpack.c.b16 %v4409, %v4403
    %v4914 = vpack.c.b16 %v4410, %v4404
    %v4915 = vpack.c.b16 %v4411, %v4405
    %v4916 = vpack.c.b16 %v4412, %v4406
    %v4917 = vpack.c.b16 %v4419, %v4413
    %v4918 = vpack.c.b16 %v4420, %v4414
    %v4919 = vpack.c.b16 %v4421, %v4415
    %v4920 = vpack.c.b16 %v4422, %v4416
    %v4921 = vpack.c.b16 %v4423, %v4417
    %v4922 = vpack.c.b16 %v4424, %v4418
    %v4923 = vpack.c.b16 %v4431, %v4425
    %v4924 = vpack.c.b16 %v4432, %v4426
    %v4925 = vpack.c.b16 %v4433, %v4427
    %v4926 = vpack.c.b16 %v4434, %v4428
    %v4927 = vpack.c.b16 %v4435, %v4429
    %v4928 = vpack.c.b16 %v4436, %v4430
    %v4929 = vpack.c.b16 %v4443, %v4437
    %v4930 = vpack.c.b16 %v4444, %v4438
    %v4931 = vpack.c.b16 %v4445, %v4439
    %v4932 = vpack.c.b16 %v4446, %v4440
    %v4933 = vpack.c.b16 %v4447, %v4441
    %v4934 = vpack.c.b16 %v4448, %v4442
    %v4935 = vpack.c.b16 %v4455, %v4449
    %v4936 = vpack.c.b16 %v4456, %v4450
    %v4937 = vpack.c.b16 %v4457, %v4451
    %v4938 = vpack.c.b16 %v4458, %v4452
    %v4939 = vpack.c.b16 %v4459, %v4453
    %v4940 = vpack.c.b16 %v4460, %v4454
    %v4941 = vpack.c.b16 %v4467, %v4461
    %v4942 = vpack.c.b16 %v4468, %v4462
    %v4943 = vpack.c.b16 %v4469, %v4463
    %v4944 = vpack.c.b16 %v4470, %v4464
    %v4945 = vpack.c.b16 %v4471, %v4465
    %v4946 = vpack.c.b16 %v4472, %v4466
    %v4947 = vpack.c.b16 %v4479, %v4473
    %v4948 = vpack.c.b16 %v4480, %v4474
    %v4949 = vpack.c.b16 %v4481, %v4475
    %v4950 = vpack.c.b16 %v4482, %v4476
    %v4951 = vpack.c.b16 %v4483, %v4477
    %v4952 = vpack.c.b16 %v4484, %v4478
    %v4953 = vpack.c.b16 %v4491, %v4485
    %v4954 = vpack.c.b16 %v4492, %v4486
    %v4955 = vpack.c.b16 %v4493, %v4487
    %v4956 = vpack.c.b16 %v4494, %v4488
    %v4957 = vpack.c.b16 %v4495, %v4489
    %v4958 = vpack.c.b16 %v4496, %v4490
    %v4959 = vpack.c.b16 %v4503, %v4497
    %v4960 = vpack.c.b16 %v4504, %v4498
    %v4961 = vpack.c.b16 %v4505, %v4499
    %v4962 = vpack.c.b16 %v4506, %v4500
    %v4963 = vpack.c.b16 %v4507, %v4501
    %v4964 = vpack.c.b16 %v4508, %v4502
    %v4965 = vpack.c.b16 %v4515, %v4509
    %v4966 = vpack.c.b16 %v4516, %v4510
    %v4967 = vpack.c.b16 %v4517, %v4511
    %v4968 = vpack.c.b16 %v4518, %v4512
    %v4969 = vpack.c.b16 %v4519, %v4513
    %v4970 = vpack.c.b16 %v4520, %v4514
    %v4971 = vpack.c.b16 %v4527, %v4521
    %v4972 = vpack.c.b16 %v4528, %v4522
    %v4973 = vpack.c.b16 %v4529, %v4523
    %v4974 = vpack.c.b16 %v4530, %v4524
    %v4975 = vpack.c.b16 %v4531, %v4525
    %v4976 = vpack.c.b16 %v4532, %v4526
    %v4977 = vpack.c.b16 %v4539, %v4533
    %v4978 = vpack.c.b16 %v4540, %v4534
    %v4979 = vpack.c.b16 %v4541, %v4535
    %v4980 = vpack.c.b16 %v4542, %v4536
    %v4981 = vpack.c.b16 %v4543, %v4537
    %v4982 = vpack.c.b16 %v4544, %v4538
    %v4983 = vpack.c.b16 %v4551, %v4545
    %v4984 = vpack.c.b16 %v4552, %v4546
    %v4985 = vpack.c.b16 %v4553, %v4547
    %v4986 = vpack.c.b16 %v4554, %v4548
    %v4987 = vpack.c.b16 %v4555, %v4549
    %v4988 = vpack.c.b16 %v4556, %v4550
    %v4989 = vpack.c.b16 %v4563, %v4557
    %v4990 = vpack.c.b16 %v4564, %v4558
    %v4991 = vpack.c.b16 %v4565, %v4559
    %v4992 = vpack.c.b16 %v4566, %v4560
    %v4993 = vpack.c.b16 %v4567, %v4561
    %v4994 = vpack.c.b16 %v4568, %v4562
    %v4995 = vpack.c.b16 %v4575, %v4569
    %v4996 = vpack.c.b16 %v4576, %v4570
    %v4997 = vpack.c.b16 %v4577, %v4571
    %v4998 = vpack.c.b16 %v4578, %v4572
    %v4999 = vpack.c.b16 %v4579, %v4573
    %v5000 = vpack.c.b16 %v4580, %v4574
    %v5001 = vpack.c.b16 %v4587, %v4581
    %v5002 = vpack.c.b16 %v4588, %v4582
    %v5003 = vpack.c.b16 %v4589, %v4583
    %v5004 = vpack.c.b16 %v4590, %v4584
    %v5005 = vpack.c.b16 %v4591, %v4585
    %v5006 = vpack.c.b16 %v4592, %v4586
    %v5007 = vpack.c.b16 %v4599, %v4593
    %v5008 = vpack.c.b16 %v4600, %v4594
    %v5009 = vpack.c.b16 %v4601, %v4595
    %v5010 = vpack.c.b16 %v4602, %v4596
    %v5011 = vpack.c.b16 %v4603, %v4597
    %v5012 = vpack.c.b16 %v4604, %v4598
    %v5013 = vpack.c.b16 %v4611, %v4605
    %v5014 = vpack.c.b16 %v4612, %v4606
    %v5015 = vpack.c.b16 %v4613, %v4607
    %v5016 = vpack.c.b16 %v4614, %v4608
    %v5017 = vpack.c.b16 %v4615, %v4609
    %v5018 = vpack.c.b16 %v4616, %v4610
    %v5019 = vpack.c.b16 %v4623, %v4617
    %v5020 = vpack.c.b16 %v4624, %v4618
    %v5021 = vpack.c.b16 %v4625, %v4619
    %v5022 = vpack.c.b16 %v4626, %v4620
    %v5023 = vpack.c.b16 %v4627, %v4621
    %v5024 = vpack.c.b16 %v4628, %v4622
    %v5025 = vpack.c.b16 %v4635, %v4629
    %v5026 = vpack.c.b16 %v4636, %v4630
    %v5027 = vpack.c.b16 %v4637, %v4631
    %v5028 = vpack.c.b16 %v4638, %v4632
    %v5029 = vpack.c.b16 %v4639, %v4633
    %v5030 = vpack.c.b16 %v4640, %v4634
    %v5031 = vpack.c.b16 %v4647, %v4641
    %v5032 = vpack.c.b16 %v4648, %v4642
    %v5033 = vpack.c.b16 %v4649, %v4643
    %v5034 = vpack.c.b16 %v4650, %v4644
    %v5035 = vpack.c.b16 %v4651, %v4645
    %v5036 = vpack.c.b16 %v4652, %v4646
    %v5037 = vpack.c.b16 %v4659, %v4653
    %v5038 = vpack.c.b16 %v4660, %v4654
    %v5039 = vpack.c.b16 %v4661, %v4655
    %v5040 = vpack.c.b16 %v4662, %v4656
    %v5041 = vpack.c.b16 %v4663, %v4657
    %v5042 = vpack.c.b16 %v4664, %v4658
    %v5043 = vpack.c.b16 %v4671, %v4665
    %v5044 = vpack.c.b16 %v4672, %v4666
    %v5045 = vpack.c.b16 %v4673, %v4667
    %v5046 = vpack.c.b16 %v4674, %v4668
    %v5047 = vpack.c.b16 %v4675, %v4669
    %v5048 = vpack.c.b16 %v4676, %v4670
    %v5049 = vpack.c.b16 %v4683, %v4677
    %v5050 = vpack.c.b16 %v4684, %v4678
    %v5051 = vpack.c.b16 %v4685, %v4679
    %v5052 = vpack.c.b16 %v4686, %v4680
    %v5053 = vpack.c.b16 %v4687, %v4681
    %v5054 = vpack.c.b16 %v4688, %v4682
    %v5055 = vpack.c.b16 %v4695, %v4689
    %v5056 = vpack.c.b16 %v4696, %v4690
    %v5057 = vpack.c.b16 %v4697, %v4691
    %v5058 = vpack.c.b16 %v4698, %v4692
    %v5059 = vpack.c.b16 %v4699, %v4693
    %v5060 = vpack.c.b16 %v4700, %v4694
    %v5061 = vpack.c.b16 %v4707, %v4701
    %v5062 = vpack.c.b16 %v4708, %v4702
    %v5063 = vpack.c.b16 %v4709, %v4703
    %v5064 = vpack.c.b16 %v4710, %v4704
    %v5065 = vpack.c.b16 %v4711, %v4705
    %v5066 = vpack.c.b16 %v4712, %v4706
    %v5067 = vpack.c.b16 %v4719, %v4713
    %v5068 = vpack.c.b16 %v4720, %v4714
    %v5069 = vpack.c.b16 %v4721, %v4715
    %v5070 = vpack.c.b16 %v4722, %v4716
    %v5071 = vpack.c.b16 %v4723, %v4717
    %v5072 = vpack.c.b16 %v4724, %v4718
    %v5073 = vpack.c.b16 %v4731, %v4725
    %v5074 = vpack.c.b16 %v4732, %v4726
    %v5075 = vpack.c.b16 %v4733, %v4727
    %v5076 = vpack.c.b16 %v4734, %v4728
    %v5077 = vpack.c.b16 %v4735, %v4729
    %v5078 = vpack.c.b16 %v4736, %v4730
    %v5079 = vpack.c.b16 %v4743, %v4737
    %v5080 = vpack.c.b16 %v4744, %v4738
    %v5081 = vpack.c.b16 %v4745, %v4739
    %v5082 = vpack.c.b16 %v4746, %v4740
    %v5083 = vpack.c.b16 %v4747, %v4741
    %v5084 = vpack.c.b16 %v4748, %v4742
    %v5085 = vpack.c.b16 %v4755, %v4749
    %v5086 = vpack.c.b16 %v4756, %v4750
    %v5087 = vpack.c.b16 %v4757, %v4751
    %v5088 = vpack.c.b16 %v4758, %v4752
    %v5089 = vpack.c.b16 %v4759, %v4753
    %v5090 = vpack.c.b16 %v4760, %v4754
    %v5091 = vpack.c.b16 %v4767, %v4761
    %v5092 = vpack.c.b16 %v4768, %v4762
    %v5093 = vpack.c.b16 %v4769, %v4763
    %v5094 = vpack.c.b16 %v4770, %v4764
    %v5095 = vpack.c.b16 %v4771, %v4765
    %v5096 = vpack.c.b16 %v4772, %v4766
    %v5097 = vpack.c.b16 %v4779, %v4773
    %v5098 = vpack.c.b16 %v4780, %v4774
    %v5099 = vpack.c.b16 %v4781, %v4775
    %v5100 = vpack.c.b16 %v4782, %v4776
    %v5101 = vpack.c.b16 %v4783, %v4777
    %v5102 = vpack.c.b16 %v4784, %v4778
    %v5103 = vpack.c.b16 %v4791, %v4785
    %v5104 = vpack.c.b16 %v4792, %v4786
    %v5105 = vpack.c.b16 %v4793, %v4787
    %v5106 = vpack.c.b16 %v4794, %v4788
    %v5107 = vpack.c.b16 %v4795, %v4789
    %v5108 = vpack.c.b16 %v4796, %v4790
    %v5109 = vpack.c.b16 %v4803, %v4797
    %v5110 = vpack.c.b16 %v4804, %v4798
    %v5111 = vpack.c.b16 %v4805, %v4799
    %v5112 = vpack.c.b16 %v4806, %v4800
    %v5113 = vpack.c.b16 %v4807, %v4801
    %v5114 = vpack.c.b16 %v4808, %v4802
    %v5115 = vpack.c.b16 %v4815, %v4809
    %v5116 = vpack.c.b16 %v4816, %v4810
    %v5117 = vpack.c.b16 %v4817, %v4811
    %v5118 = vpack.c.b16 %v4818, %v4812
    %v5119 = vpack.c.b16 %v4819, %v4813
    %v5120 = vpack.c.b16 %v4820, %v4814
    %v5121 = vpack.c.b16 %v4827, %v4821
    %v5122 = vpack.c.b16 %v4828, %v4822
    %v5123 = vpack.c.b16 %v4829, %v4823
    %v5124 = vpack.c.b16 %v4830, %v4824
    %v5125 = vpack.c.b16 %v4831, %v4825
    %v5126 = vpack.c.b16 %v4832, %v4826
    %v5127 = vpack.c.b16 %v4839, %v4833
    %v5128 = vpack.c.b16 %v4840, %v4834
    %v5129 = vpack.c.b16 %v4841, %v4835
    %v5130 = vpack.c.b16 %v4842, %v4836
    %v5131 = vpack.c.b16 %v4843, %v4837
    %v5132 = vpack.c.b16 %v4844, %v4838
    %5421 = vmatprep.subr.bf16.mxu0 %v4846
    %5422 = vmatpush1.bf16.msra.mxu0 %v4845
    %5423 = vmatprep.subr.bf16.mxu0 %v4852
    %5424 = vmatpush1.bf16.msra.mxu0 %v4851
    %5425 = vmatprep.subr.bf16.mxu0 %v4858
    %5426 = vmatpush1.bf16.msra.mxu0 %v4857
    %5427 = vmatprep.subr.bf16.mxu0 %v4864
    %5428 = vmatpush1.bf16.msra.mxu0 %v4863
    %5429 = vmatprep.subr.bf16.mxu0 %v4870
    %5430 = vmatpush1.bf16.msra.mxu0 %v4869
    %5431 = vmatprep.subr.bf16.mxu0 %v4876
    %5432 = vmatpush1.bf16.msra.mxu0 %v4875
    %5433 = vmatprep.subr.bf16.mxu0 %v4882
    %5434 = vmatpush1.bf16.msra.mxu0 %v4881
    %5435 = vmatprep.subr.bf16.mxu0 %v4888
    %5436 = vmatpush1.bf16.msra.mxu0 %v4887
    %5437 = vmatprep.subr.bf16.mxu0 %v4894
    %5438 = vmatpush1.bf16.msra.mxu0 %v4893
    %5439 = vmatprep.subr.bf16.mxu0 %v4900
    %5440 = vmatpush1.bf16.msra.mxu0 %v4899
    %5441 = vmatprep.subr.bf16.mxu0 %v4906
    %5442 = vmatpush1.bf16.msra.mxu0 %v4905
    %5443 = vmatprep.subr.bf16.mxu0 %v4912
    %5444 = vmatpush1.bf16.msra.mxu0 %v4911
    %5445 = vmatprep.subr.bf16.mxu0 %v4918
    %5446 = vmatpush1.bf16.msra.mxu0 %v4917
    %5447 = vmatprep.subr.bf16.mxu0 %v4924
    %5448 = vmatpush1.bf16.msra.mxu0 %v4923
    %5449 = vmatprep.subr.bf16.mxu0 %v4930
    %5450 = vmatpush1.bf16.msra.mxu0 %v4929
    %5451 = vmatprep.subr.bf16.mxu0 %v4936
    %5452 = vmatpush1.bf16.msra.mxu0 %v4935
    %5453 = vmatprep.mubr.bf16.mxu0 %v3656
    %5454 = vmatmul.mubr.bf16.gmra.mrb[0].mxu0 %v3655
    %v5455 = vpop.f32.mrb[0].mxu0
    %v5456 = vadd.f32 %v3954, %v5455
    %v5457 = vpop.f32.mrb[0].mxu0
    %v5458 = vadd.f32 %v3958, %v5457
    %v5459 = vpop.f32.mrb[0].mxu0
    %v5460 = vpop.f32.mrb[0].mxu0
    %5461 = vdwg.mxu0
    %5462 = vmatprep.subr.bf16.mxu0 %v4942
    %5463 = vmatpush1.bf16.msra.mxu0 %v4941
    %5464 = vmatprep.subr.bf16.mxu0 %v4948
    %5465 = vmatpush1.bf16.msra.mxu0 %v4947
    %5466 = vmatprep.subr.bf16.mxu0 %v4954
    %5467 = vmatpush1.bf16.msra.mxu0 %v4953
    %5468 = vmatprep.subr.bf16.mxu0 %v4960
    %5469 = vmatpush1.bf16.msra.mxu0 %v4959
    %5470 = vmatprep.subr.bf16.mxu0 %v4966
    %5471 = vmatpush1.bf16.msra.mxu0 %v4965
    %5472 = vmatprep.subr.bf16.mxu0 %v4972
    %5473 = vmatpush1.bf16.msra.mxu0 %v4971
    %5474 = vmatprep.subr.bf16.mxu0 %v4978
    %5475 = vmatpush1.bf16.msra.mxu0 %v4977
    %5476 = vmatprep.subr.bf16.mxu0 %v4984
    %5477 = vmatpush1.bf16.msra.mxu0 %v4983
    %5478 = vmatprep.subr.bf16.mxu0 %v4990
    %5479 = vmatpush1.bf16.msra.mxu0 %v4989
    %5480 = vmatprep.subr.bf16.mxu0 %v4996
    %5481 = vmatpush1.bf16.msra.mxu0 %v4995
    %5482 = vmatprep.subr.bf16.mxu0 %v5002
    %5483 = vmatpush1.bf16.msra.mxu0 %v5001
    %5484 = vmatprep.subr.bf16.mxu0 %v5008
    %5485 = vmatpush1.bf16.msra.mxu0 %v5007
    %5486 = vmatprep.subr.bf16.mxu0 %v5014
    %5487 = vmatpush1.bf16.msra.mxu0 %v5013
    %5488 = vmatprep.subr.bf16.mxu0 %v5020
    %5489 = vmatpush1.bf16.msra.mxu0 %v5019
    %5490 = vmatprep.subr.bf16.mxu0 %v5026
    %5491 = vmatpush1.bf16.msra.mxu0 %v5025
    %5492 = vmatprep.subr.bf16.mxu0 %v5032
    %5493 = vmatpush1.bf16.msra.mxu0 %v5031
    %5494 = vmatprep.mubr.bf16.mxu0 %v3658
    %5495 = vmatmul.mubr.bf16.gmra.mrb[0].mxu0 %v3657
    %v5496 = vpop.f32.mrb[0].mxu0
    %v5497 = vadd.f32 %v5456, %v5496
    %v5498 = vpop.f32.mrb[0].mxu0
    %v5499 = vadd.f32 %v5458, %v5498
    %v5500 = vpop.f32.mrb[0].mxu0
    %v5501 = vpop.f32.mrb[0].mxu0
    %5502 = vdwg.mxu0
    %5503 = vmatprep.subr.bf16.mxu0 %v5038
    %5504 = vmatpush1.bf16.msra.mxu0 %v5037
    %5505 = vmatprep.subr.bf16.mxu0 %v5044
    %5506 = vmatpush1.bf16.msra.mxu0 %v5043
    %5507 = vmatprep.subr.bf16.mxu0 %v5050
    %5508 = vmatpush1.bf16.msra.mxu0 %v5049
    %5509 = vmatprep.subr.bf16.mxu0 %v5056
    %5510 = vmatpush1.bf16.msra.mxu0 %v5055
    %5511 = vmatprep.subr.bf16.mxu0 %v5062
    %5512 = vmatpush1.bf16.msra.mxu0 %v5061
    %5513 = vmatprep.subr.bf16.mxu0 %v5068
    %5514 = vmatpush1.bf16.msra.mxu0 %v5067
    %5515 = vmatprep.subr.bf16.mxu0 %v5074
    %5516 = vmatpush1.bf16.msra.mxu0 %v5073
    %5517 = vmatprep.subr.bf16.mxu0 %v5080
    %5518 = vmatpush1.bf16.msra.mxu0 %v5079
    %5519 = vmatprep.subr.bf16.mxu0 %v5086
    %5520 = vmatpush1.bf16.msra.mxu0 %v5085
    %5521 = vmatprep.subr.bf16.mxu0 %v5092
    %5522 = vmatpush1.bf16.msra.mxu0 %v5091
    %5523 = vmatprep.subr.bf16.mxu0 %v5098
    %5524 = vmatpush1.bf16.msra.mxu0 %v5097
    %5525 = vmatprep.subr.bf16.mxu0 %v5104
    %5526 = vmatpush1.bf16.msra.mxu0 %v5103
    %5527 = vmatprep.subr.bf16.mxu0 %v5110
    %5528 = vmatpush1.bf16.msra.mxu0 %v5109
    %5529 = vmatprep.subr.bf16.mxu0 %v5116
    %5530 = vmatpush1.bf16.msra.mxu0 %v5115
    %5531 = vmatprep.subr.bf16.mxu0 %v5122
    %5532 = vmatpush1.bf16.msra.mxu0 %v5121
    %5533 = vmatprep.subr.bf16.mxu0 %v5128
    %5534 = vmatpush1.bf16.msra.mxu0 %v5127
    %5535 = vmatprep.mubr.bf16.mxu0 %v3660
    %5536 = vmatmul.mubr.bf16.gmra.mrb[0].mxu0 %v3659
    %v5537 = vpop.f32.mrb[0].mxu0
    %v5538 = vadd.f32 %v5497, %v5537
    %v5539 = vpop.f32.mrb[0].mxu0
    %v5540 = vadd.f32 %v5499, %v5539
    %v5541 = vpop.f32.mrb[0].mxu0
    %v5542 = vpop.f32.mrb[0].mxu0
    %5543 = vdwg.mxu0
    %5544 = vmatprep.subr.bf16.mxu0 %v4848
    %5545 = vmatpush1.bf16.msra.mxu0 %v4847
    %5546 = vmatprep.subr.bf16.mxu0 %v4854
    %5547 = vmatpush1.bf16.msra.mxu0 %v4853
    %5548 = vmatprep.subr.bf16.mxu0 %v4860
    %5549 = vmatpush1.bf16.msra.mxu0 %v4859
    %5550 = vmatprep.subr.bf16.mxu0 %v4866
    %5551 = vmatpush1.bf16.msra.mxu0 %v4865
    %5552 = vmatprep.subr.bf16.mxu0 %v4872
    %5553 = vmatpush1.bf16.msra.mxu0 %v4871
    %5554 = vmatprep.subr.bf16.mxu0 %v4878
    %5555 = vmatpush1.bf16.msra.mxu0 %v4877
    %5556 = vmatprep.subr.bf16.mxu0 %v4884
    %5557 = vmatpush1.bf16.msra.mxu0 %v4883
    %5558 = vmatprep.subr.bf16.mxu0 %v4890
    %5559 = vmatpush1.bf16.msra.mxu0 %v4889
    %5560 = vmatprep.subr.bf16.mxu0 %v4896
    %5561 = vmatpush1.bf16.msra.mxu0 %v4895
    %5562 = vmatprep.subr.bf16.mxu0 %v4902
    %5563 = vmatpush1.bf16.msra.mxu0 %v4901
    %5564 = vmatprep.subr.bf16.mxu0 %v4908
    %5565 = vmatpush1.bf16.msra.mxu0 %v4907
    %5566 = vmatprep.subr.bf16.mxu0 %v4914
    %5567 = vmatpush1.bf16.msra.mxu0 %v4913
    %5568 = vmatprep.subr.bf16.mxu0 %v4920
    %5569 = vmatpush1.bf16.msra.mxu0 %v4919
    %5570 = vmatprep.subr.bf16.mxu0 %v4926
    %5571 = vmatpush1.bf16.msra.mxu0 %v4925
    %5572 = vmatprep.subr.bf16.mxu0 %v4932
    %5573 = vmatpush1.bf16.msra.mxu0 %v4931
    %5574 = vmatprep.subr.bf16.mxu0 %v4938
    %5575 = vmatpush1.bf16.msra.mxu0 %v4937
    %5576 = vmatprep.mubr.bf16.mxu0 %v3656
    %5577 = vmatmul.mubr.bf16.gmra.mrb[0].mxu0 %v3655
    %v5578 = vpop.f32.mrb[0].mxu0
    %v5579 = vadd.f32 %v3962, %v5578
    %v5580 = vpop.f32.mrb[0].mxu0
    %v5581 = vadd.f32 %v3966, %v5580
    %v5582 = vpop.f32.mrb[0].mxu0
    %v5583 = vpop.f32.mrb[0].mxu0
    %5584 = vdwg.mxu0
    %5585 = vmatprep.subr.bf16.mxu0 %v4944
    %5586 = vmatpush1.bf16.msra.mxu0 %v4943
    %5587 = vmatprep.subr.bf16.mxu0 %v4950
    %5588 = vmatpush1.bf16.msra.mxu0 %v4949
    %5589 = vmatprep.subr.bf16.mxu0 %v4956
    %5590 = vmatpush1.bf16.msra.mxu0 %v4955
    %5591 = vmatprep.subr.bf16.mxu0 %v4962
    %5592 = vmatpush1.bf16.msra.mxu0 %v4961
    %5593 = vmatprep.subr.bf16.mxu0 %v4968
    %5594 = vmatpush1.bf16.msra.mxu0 %v4967
    %5595 = vmatprep.subr.bf16.mxu0 %v4974
    %5596 = vmatpush1.bf16.msra.mxu0 %v4973
    %5597 = vmatprep.subr.bf16.mxu0 %v4980
    %5598 = vmatpush1.bf16.msra.mxu0 %v4979
    %5599 = vmatprep.subr.bf16.mxu0 %v4986
    %5600 = vmatpush1.bf16.msra.mxu0 %v4985
    %5601 = vmatprep.subr.bf16.mxu0 %v4992
    %5602 = vmatpush1.bf16.msra.mxu0 %v4991
    %5603 = vmatprep.subr.bf16.mxu0 %v4998
    %5604 = vmatpush1.bf16.msra.mxu0 %v4997
    %5605 = vmatprep.subr.bf16.mxu0 %v5004
    %5606 = vmatpush1.bf16.msra.mxu0 %v5003
    %5607 = vmatprep.subr.bf16.mxu0 %v5010
    %5608 = vmatpush1.bf16.msra.mxu0 %v5009
    %5609 = vmatprep.subr.bf16.mxu0 %v5016
    %5610 = vmatpush1.bf16.msra.mxu0 %v5015
    %5611 = vmatprep.subr.bf16.mxu0 %v5022
    %5612 = vmatpush1.bf16.msra.mxu0 %v5021
    %5613 = vmatprep.subr.bf16.mxu0 %v5028
    %5614 = vmatpush1.bf16.msra.mxu0 %v5027
    %5615 = vmatprep.subr.bf16.mxu0 %v5034
    %5616 = vmatpush1.bf16.msra.mxu0 %v5033
    %5617 = vmatprep.mubr.bf16.mxu0 %v3658
    %5618 = vmatmul.mubr.bf16.gmra.mrb[0].mxu0 %v3657
    %v5619 = vpop.f32.mrb[0].mxu0
    %v5620 = vadd.f32 %v5579, %v5619
    %v5621 = vpop.f32.mrb[0].mxu0
    %v5622 = vadd.f32 %v5581, %v5621
    %v5623 = vpop.f32.mrb[0].mxu0
    %v5624 = vpop.f32.mrb[0].mxu0
    %5625 = vdwg.mxu0
    %5626 = vmatprep.subr.bf16.mxu0 %v5040
    %5627 = vmatpush1.bf16.msra.mxu0 %v5039
    %5628 = vmatprep.subr.bf16.mxu0 %v5046
    %5629 = vmatpush1.bf16.msra.mxu0 %v5045
    %5630 = vmatprep.subr.bf16.mxu0 %v5052
    %5631 = vmatpush1.bf16.msra.mxu0 %v5051
    %5632 = vmatprep.subr.bf16.mxu0 %v5058
    %5633 = vmatpush1.bf16.msra.mxu0 %v5057
    %5634 = vmatprep.subr.bf16.mxu0 %v5064
    %5635 = vmatpush1.bf16.msra.mxu0 %v5063
    %5636 = vmatprep.subr.bf16.mxu0 %v5070
    %5637 = vmatpush1.bf16.msra.mxu0 %v5069
    %5638 = vmatprep.subr.bf16.mxu0 %v5076
    %5639 = vmatpush1.bf16.msra.mxu0 %v5075
    %5640 = vmatprep.subr.bf16.mxu0 %v5082
    %5641 = vmatpush1.bf16.msra.mxu0 %v5081
    %5642 = vmatprep.subr.bf16.mxu0 %v5088
    %5643 = vmatpush1.bf16.msra.mxu0 %v5087
    %5644 = vmatprep.subr.bf16.mxu0 %v5094
    %5645 = vmatpush1.bf16.msra.mxu0 %v5093
    %5646 = vmatprep.subr.bf16.mxu0 %v5100
    %5647 = vmatpush1.bf16.msra.mxu0 %v5099
    %5648 = vmatprep.subr.bf16.mxu0 %v5106
    %5649 = vmatpush1.bf16.msra.mxu0 %v5105
    %5650 = vmatprep.subr.bf16.mxu0 %v5112
    %5651 = vmatpush1.bf16.msra.mxu0 %v5111
    %5652 = vmatprep.subr.bf16.mxu0 %v5118
    %5653 = vmatpush1.bf16.msra.mxu0 %v5117
    %5654 = vmatprep.subr.bf16.mxu0 %v5124
    %5655 = vmatpush1.bf16.msra.mxu0 %v5123
    %5656 = vmatprep.subr.bf16.mxu0 %v5130
    %5657 = vmatpush1.bf16.msra.mxu0 %v5129
    %5658 = vmatprep.mubr.bf16.mxu0 %v3660
    %5659 = vmatmul.mubr.bf16.gmra.mrb[0].mxu0 %v3659
    %v5660 = vpop.f32.mrb[0].mxu0
    %v5661 = vadd.f32 %v5620, %v5660
    %v5662 = vpop.f32.mrb[0].mxu0
    %v5663 = vadd.f32 %v5622, %v5662
    %v5664 = vpop.f32.mrb[0].mxu0
    %v5665 = vpop.f32.mrb[0].mxu0
    %5666 = vdwg.mxu0
    %5667 = vmatprep.subr.bf16.mxu0 %v4850
    %5668 = vmatpush1.bf16.msra.mxu0 %v4849
    %5669 = vmatprep.subr.bf16.mxu0 %v4856
    %5670 = vmatpush1.bf16.msra.mxu0 %v4855
    %5671 = vmatprep.subr.bf16.mxu0 %v4862
    %5672 = vmatpush1.bf16.msra.mxu0 %v4861
    %5673 = vmatprep.subr.bf16.mxu0 %v4868
    %5674 = vmatpush1.bf16.msra.mxu0 %v4867
    %5675 = vmatprep.subr.bf16.mxu0 %v4874
    %5676 = vmatpush1.bf16.msra.mxu0 %v4873
    %5677 = vmatprep.subr.bf16.mxu0 %v4880
    %5678 = vmatpush1.bf16.msra.mxu0 %v4879
    %5679 = vmatprep.subr.bf16.mxu0 %v4886
    %5680 = vmatpush1.bf16.msra.mxu0 %v4885
    %5681 = vmatprep.subr.bf16.mxu0 %v4892
    %5682 = vmatpush1.bf16.msra.mxu0 %v4891
    %5683 = vmatprep.subr.bf16.mxu0 %v4898
    %5684 = vmatpush1.bf16.msra.mxu0 %v4897
    %5685 = vmatprep.subr.bf16.mxu0 %v4904
    %5686 = vmatpush1.bf16.msra.mxu0 %v4903
    %5687 = vmatprep.subr.bf16.mxu0 %v4910
    %5688 = vmatpush1.bf16.msra.mxu0 %v4909
    %5689 = vmatprep.subr.bf16.mxu0 %v4916
    %5690 = vmatpush1.bf16.msra.mxu0 %v4915
    %5691 = vmatprep.subr.bf16.mxu0 %v4922
    %5692 = vmatpush1.bf16.msra.mxu0 %v4921
    %5693 = vmatprep.subr.bf16.mxu0 %v4928
    %5694 = vmatpush1.bf16.msra.mxu0 %v4927
    %5695 = vmatprep.subr.bf16.mxu0 %v4934
    %5696 = vmatpush1.bf16.msra.mxu0 %v4933
    %5697 = vmatprep.subr.bf16.mxu0 %v4940
    %5698 = vmatpush1.bf16.msra.mxu0 %v4939
    %5699 = vmatprep.mubr.bf16.mxu0 %v3656
    %5700 = vmatmul.mubr.bf16.gmra.mrb[0].mxu0 %v3655
    %v5701 = vpop.f32.mrb[0].mxu0
    %v5702 = vadd.f32 %v3970, %v5701
    %v5703 = vpop.f32.mrb[0].mxu0
    %v5704 = vadd.f32 %v3974, %v5703
    %v5705 = vpop.f32.mrb[0].mxu0
    %v5706 = vpop.f32.mrb[0].mxu0
    %5707 = vdwg.mxu0
    %5708 = vmatprep.subr.bf16.mxu0 %v4946
    %5709 = vmatpush1.bf16.msra.mxu0 %v4945
    %5710 = vmatprep.subr.bf16.mxu0 %v4952
    %5711 = vmatpush1.bf16.msra.mxu0 %v4951
    %5712 = vmatprep.subr.bf16.mxu0 %v4958
    %5713 = vmatpush1.bf16.msra.mxu0 %v4957
    %5714 = vmatprep.subr.bf16.mxu0 %v4964
    %5715 = vmatpush1.bf16.msra.mxu0 %v4963
    %5716 = vmatprep.subr.bf16.mxu0 %v4970
    %5717 = vmatpush1.bf16.msra.mxu0 %v4969
    %5718 = vmatprep.subr.bf16.mxu0 %v4976
    %5719 = vmatpush1.bf16.msra.mxu0 %v4975
    %5720 = vmatprep.subr.bf16.mxu0 %v4982
    %5721 = vmatpush1.bf16.msra.mxu0 %v4981
    %5722 = vmatprep.subr.bf16.mxu0 %v4988
    %5723 = vmatpush1.bf16.msra.mxu0 %v4987
    %5724 = vmatprep.subr.bf16.mxu0 %v4994
    %5725 = vmatpush1.bf16.msra.mxu0 %v4993
    %5726 = vmatprep.subr.bf16.mxu0 %v5000
    %5727 = vmatpush1.bf16.msra.mxu0 %v4999
    %5728 = vmatprep.subr.bf16.mxu0 %v5006
    %5729 = vmatpush1.bf16.msra.mxu0 %v5005
    %5730 = vmatprep.subr.bf16.mxu0 %v5012
    %5731 = vmatpush1.bf16.msra.mxu0 %v5011
    %5732 = vmatprep.subr.bf16.mxu0 %v5018
    %5733 = vmatpush1.bf16.msra.mxu0 %v5017
    %5734 = vmatprep.subr.bf16.mxu0 %v5024
    %5735 = vmatpush1.bf16.msra.mxu0 %v5023
    %5736 = vmatprep.subr.bf16.mxu0 %v5030
    %5737 = vmatpush1.bf16.msra.mxu0 %v5029
    %5738 = vmatprep.subr.bf16.mxu0 %v5036
    %5739 = vmatpush1.bf16.msra.mxu0 %v5035
    %5740 = vmatprep.mubr.bf16.mxu0 %v3658
    %5741 = vmatmul.mubr.bf16.gmra.mrb[0].mxu0 %v3657
    %v5742 = vpop.f32.mrb[0].mxu0
    %v5743 = vadd.f32 %v5702, %v5742
    %v5744 = vpop.f32.mrb[0].mxu0
    %v5745 = vadd.f32 %v5704, %v5744
    %v5746 = vpop.f32.mrb[0].mxu0
    %v5747 = vpop.f32.mrb[0].mxu0
    %5748 = vdwg.mxu0
    %5749 = vmatprep.subr.bf16.mxu0 %v5042
    %5750 = vmatpush1.bf16.msra.mxu0 %v5041
    %5751 = vmatprep.subr.bf16.mxu0 %v5048
    %5752 = vmatpush1.bf16.msra.mxu0 %v5047
    %5753 = vmatprep.subr.bf16.mxu0 %v5054
    %5754 = vmatpush1.bf16.msra.mxu0 %v5053
    %5755 = vmatprep.subr.bf16.mxu0 %v5060
    %5756 = vmatpush1.bf16.msra.mxu0 %v5059
    %5757 = vmatprep.subr.bf16.mxu0 %v5066
    %5758 = vmatpush1.bf16.msra.mxu0 %v5065
    %5759 = vmatprep.subr.bf16.mxu0 %v5072
    %5760 = vmatpush1.bf16.msra.mxu0 %v5071
    %5761 = vmatprep.subr.bf16.mxu0 %v5078
    %5762 = vmatpush1.bf16.msra.mxu0 %v5077
    %5763 = vmatprep.subr.bf16.mxu0 %v5084
    %5764 = vmatpush1.bf16.msra.mxu0 %v5083
    %5765 = vmatprep.subr.bf16.mxu0 %v5090
    %5766 = vmatpush1.bf16.msra.mxu0 %v5089
    %5767 = vmatprep.subr.bf16.mxu0 %v5096
    %5768 = vmatpush1.bf16.msra.mxu0 %v5095
    %5769 = vmatprep.subr.bf16.mxu0 %v5102
    %5770 = vmatpush1.bf16.msra.mxu0 %v5101
    %5771 = vmatprep.subr.bf16.mxu0 %v5108
    %5772 = vmatpush1.bf16.msra.mxu0 %v5107
    %5773 = vmatprep.subr.bf16.mxu0 %v5114
    %5774 = vmatpush1.bf16.msra.mxu0 %v5113
    %5775 = vmatprep.subr.bf16.mxu0 %v5120
    %5776 = vmatpush1.bf16.msra.mxu0 %v5119
    %5777 = vmatprep.subr.bf16.mxu0 %v5126
    %5778 = vmatpush1.bf16.msra.mxu0 %v5125
    %5779 = vmatprep.subr.bf16.mxu0 %v5132
    %5780 = vmatpush1.bf16.msra.mxu0 %v5131
    %5781 = vmatprep.mubr.bf16.mxu0 %v3660
    %5782 = vmatmul.mubr.bf16.gmra.mrb[0].mxu0 %v3659
    %v5783 = vpop.f32.mrb[0].mxu0
    %v5784 = vadd.f32 %v5743, %v5783
    %v5785 = vpop.f32.mrb[0].mxu0
    %v5786 = vadd.f32 %v5745, %v5785
    %v5787 = vpop.f32.mrb[0].mxu0
    %v5788 = vpop.f32.mrb[0].mxu0
    %5789 = vdwg.mxu0
    %v5790 = vmax.f32 %v5538, 0.0
    %v5791 = vmax.f32 %v5540, 0.0
    %v5792 = vmax.f32 %v5661, 0.0
    %v5793 = vmax.f32 %v5663, 0.0
    %v5794 = vmax.f32 %v5784, 0.0
    %v5795 = vmax.f32 %v5786, 0.0
    %v5796 = vpack.c.bf16 %v5790, %v5790
    %v5797 = vpack.c.bf16 %v5791, %v5791
    %v5798 = vpack.c.bf16 %v5792, %v5792
    %v5799 = vpack.c.bf16 %v5793, %v5793
    %v5800 = vpack.c.bf16 %v5794, %v5794
    %v5801 = vpack.c.bf16 %v5795, %v5795
    %v5802 = vld [vmem:[%s15] sm:$0xf]
    %v5803 = vld [vmem:[%s15 + $0x4] sm:$0xf]
    %v5804 = vld [vmem:[%s15 + $0x8] sm:$0xf]
    %v5805 = vld [vmem:[%s15 + $0xc] sm:$0xf]
    %v5806 = vld [vmem:[%s15 + $0x10] sm:$0xf]
    %v5807 = vld [vmem:[%s15 + $0x14] sm:$0xf]
    %v5808 = vld [vmem:[%s15 + $0x18] sm:$0xf]
    %v5809 = vld [vmem:[%s15 + $0x1c] sm:$0xf]
    %v5810 = vld [vmem:[%s15 + $0x20] sm:$0xf]
    %v5811 = vld [vmem:[%s15 + $0x24] sm:$0xf]
    %v5812 = vld [vmem:[%s15 + $0x28] sm:$0xf]
    %v5813 = vld [vmem:[%s15 + $0x2c] sm:$0xf]
    %v5814 = vld [vmem:[%s15 + $0x30] sm:$0xf]
    %v5815 = vld [vmem:[%s15 + $0x34] sm:$0xf]
    %v5816 = vld [vmem:[%s15 + $0x38] sm:$0xf]
    %v5817 = vld [vmem:[%s15 + $0x3c] sm:$0xf]
    %v5818 = vld [vmem:[%s15 + $0x40] sm:$0xf]
    %v5819 = vld [vmem:[%s15 + $0x44] sm:$0xf]
    %v5820 = vld [vmem:[%s15 + $0x48] sm:$0xf]
    %v5821 = vld [vmem:[%s15 + $0x4c] sm:$0xf]
    %v5822 = vld [vmem:[%s15 + $0x50] sm:$0xf]
    %v5823 = vld [vmem:[%s15 + $0x54] sm:$0xf]
    %v5824 = vld [vmem:[%s15 + $0x58] sm:$0xf]
    %v5825 = vld [vmem:[%s15 + $0x5c] sm:$0xf]
    %v5826 = vld [vmem:[%s15 + $0x60] sm:$0xf]
    %v5827 = vld [vmem:[%s15 + $0x64] sm:$0xf]
    %v5828 = vld [vmem:[%s15 + $0x68] sm:$0xf]
    %v5829 = vld [vmem:[%s15 + $0x6c] sm:$0xf]
    %v5830 = vld [vmem:[%s15 + $0x70] sm:$0xf]
    %v5831 = vld [vmem:[%s15 + $0x74] sm:$0xf]
    %v5832 = vld [vmem:[%s15 + $0x78] sm:$0xf]
    %v5833 = vld [vmem:[%s15 + $0x7c] sm:$0xf]
    %v5834 = vld [vmem:[%s15 + $0x80] sm:$0xf]
    %v5835 = vld [vmem:[%s15 + $0x84] sm:$0xf]
    %v5836 = vld [vmem:[%s15 + $0x88] sm:$0xf]
    %v5837 = vld [vmem:[%s15 + $0x8c] sm:$0xf]
    %v5838 = vld [vmem:[%s15 + $0x90] sm:$0xf]
    %v5839 = vld [vmem:[%s15 + $0x94] sm:$0xf]
    %v5840 = vld [vmem:[%s15 + $0x98] sm:$0xf]
    %v5841 = vld [vmem:[%s15 + $0x9c] sm:$0xf]
    %v5842 = vld [vmem:[%s15 + $0xa0] sm:$0xf]
    %v5843 = vld [vmem:[%s15 + $0xa4] sm:$0xf]
    %v5844 = vld [vmem:[%s15 + $0xa8] sm:$0xf]
    %v5845 = vld [vmem:[%s15 + $0xac] sm:$0xf]
    %v5846 = vld [vmem:[%s15 + $0xb0] sm:$0xf]
    %v5847 = vld [vmem:[%s15 + $0xb4] sm:$0xf]
    %v5848 = vld [vmem:[%s15 + $0xb8] sm:$0xf]
    %v5849 = vld [vmem:[%s15 + $0xbc] sm:$0xf]
    %v5850 = vld [vmem:[%s15 + $0xc0] sm:$0xf]
    %v5851 = vld [vmem:[%s15 + $0xc4] sm:$0xf]
    %v5852 = vld [vmem:[%s15 + $0xc8] sm:$0xf]
    %v5853 = vld [vmem:[%s15 + $0xcc] sm:$0xf]
    %v5854 = vld [vmem:[%s15 + $0xd0] sm:$0xf]
    %v5855 = vld [vmem:[%s15 + $0xd4] sm:$0xf]
    %v5856 = vld [vmem:[%s15 + $0xd8] sm:$0xf]
    %v5857 = vld [vmem:[%s15 + $0xdc] sm:$0xf]
    %v5858 = vld [vmem:[%s15 + $0xe0] sm:$0xf]
    %v5859 = vld [vmem:[%s15 + $0xe4] sm:$0xf]
    %v5860 = vld [vmem:[%s15 + $0xe8] sm:$0xf]
    %v5861 = vld [vmem:[%s15 + $0xec] sm:$0xf]
    %v5862 = vld [vmem:[%s15 + $0xf0] sm:$0xf]
    %v5863 = vld [vmem:[%s15 + $0xf4] sm:$0xf]
    %v5864 = vld [vmem:[%s15 + $0xf8] sm:$0xf]
    %v5865 = vld [vmem:[%s15 + $0xfc] sm:$0xf]
    %v5866 = vld [vmem:[%s15 + $0x100] sm:$0xf]
    %v5867 = vld [vmem:[%s15 + $0x104] sm:$0xf]
    %v5868 = vld [vmem:[%s15 + $0x108] sm:$0xf]
    %v5869 = vld [vmem:[%s15 + $0x10c] sm:$0xf]
    %v5870 = vld [vmem:[%s15 + $0x110] sm:$0xf]
    %v5871 = vld [vmem:[%s15 + $0x114] sm:$0xf]
    %v5872 = vld [vmem:[%s15 + $0x118] sm:$0xf]
    %v5873 = vld [vmem:[%s15 + $0x11c] sm:$0xf]
    %v5874 = vld [vmem:[%s15 + $0x120] sm:$0xf]
    %v5875 = vld [vmem:[%s15 + $0x124] sm:$0xf]
    %v5876 = vld [vmem:[%s15 + $0x128] sm:$0xf]
    %v5877 = vld [vmem:[%s15 + $0x12c] sm:$0xf]
    %v5878 = vld [vmem:[%s15 + $0x130] sm:$0xf]
    %v5879 = vld [vmem:[%s15 + $0x134] sm:$0xf]
    %v5880 = vld [vmem:[%s15 + $0x138] sm:$0xf]
    %v5881 = vld [vmem:[%s15 + $0x13c] sm:$0xf]
    %v5882 = vld [vmem:[%s15 + $0x140] sm:$0xf]
    %v5883 = vld [vmem:[%s15 + $0x144] sm:$0xf]
    %v5884 = vld [vmem:[%s15 + $0x148] sm:$0xf]
    %v5885 = vld [vmem:[%s15 + $0x14c] sm:$0xf]
    %v5886 = vld [vmem:[%s15 + $0x150] sm:$0xf]
    %v5887 = vld [vmem:[%s15 + $0x154] sm:$0xf]
    %v5888 = vld [vmem:[%s15 + $0x158] sm:$0xf]
    %v5889 = vld [vmem:[%s15 + $0x15c] sm:$0xf]
    %v5890 = vld [vmem:[%s15 + $0x160] sm:$0xf]
    %v5891 = vld [vmem:[%s15 + $0x164] sm:$0xf]
    %v5892 = vld [vmem:[%s15 + $0x168] sm:$0xf]
    %v5893 = vld [vmem:[%s15 + $0x16c] sm:$0xf]
    %v5894 = vld [vmem:[%s15 + $0x170] sm:$0xf]
    %v5895 = vld [vmem:[%s15 + $0x174] sm:$0xf]
    %v5896 = vld [vmem:[%s15 + $0x178] sm:$0xf]
    %v5897 = vld [vmem:[%s15 + $0x17c] sm:$0xf]
    %v5898 = vld [vmem:[#allocation23] sm:$0x1]
    %v5900 = vlaneseq
    %v5901 = vshrl.u32 %v5900, 7
    %v5902 = vsub.s32 0, %v5901
    %v5903 = vrot.slane %v5898, %v5902
    %v6001 = vunpack.c.l.b16 %v5802
    %v6002 = vunpack.c.l.b16 %v5803
    %v6003 = vunpack.c.l.b16 %v5804
    %v6004 = vunpack.c.l.b16 %v5805
    %v6005 = vunpack.c.l.b16 %v5806
    %v6006 = vunpack.c.l.b16 %v5807
    %v6007 = vunpack.c.l.b16 %v5808
    %v6008 = vunpack.c.l.b16 %v5809
    %v6009 = vunpack.c.l.b16 %v5810
    %v6010 = vunpack.c.l.b16 %v5811
    %v6011 = vunpack.c.l.b16 %v5812
    %v6012 = vunpack.c.l.b16 %v5813
    %v6013 = vunpack.c.l.b16 %v5814
    %v6014 = vunpack.c.l.b16 %v5815
    %v6015 = vunpack.c.l.b16 %v5816
    %v6016 = vunpack.c.l.b16 %v5817
    %v6017 = vunpack.c.l.b16 %v5818
    %v6018 = vunpack.c.l.b16 %v5819
    %v6019 = vunpack.c.l.b16 %v5820
    %v6020 = vunpack.c.l.b16 %v5821
    %v6021 = vunpack.c.l.b16 %v5822
    %v6022 = vunpack.c.l.b16 %v5823
    %v6023 = vunpack.c.l.b16 %v5824
    %v6024 = vunpack.c.l.b16 %v5825
    %v6025 = vunpack.c.l.b16 %v5826
    %v6026 = vunpack.c.l.b16 %v5827
    %v6027 = vunpack.c.l.b16 %v5828
    %v6028 = vunpack.c.l.b16 %v5829
    %v6029 = vunpack.c.l.b16 %v5830
    %v6030 = vunpack.c.l.b16 %v5831
    %v6031 = vunpack.c.l.b16 %v5832
    %v6032 = vunpack.c.l.b16 %v5833
    %v6033 = vunpack.c.l.b16 %v5834
    %v6034 = vunpack.c.l.b16 %v5835
    %v6035 = vunpack.c.l.b16 %v5836
    %v6036 = vunpack.c.l.b16 %v5837
    %v6037 = vunpack.c.l.b16 %v5838
    %v6038 = vunpack.c.l.b16 %v5839
    %v6039 = vunpack.c.l.b16 %v5840
    %v6040 = vunpack.c.l.b16 %v5841
    %v6041 = vunpack.c.l.b16 %v5842
    %v6042 = vunpack.c.l.b16 %v5843
    %v6043 = vunpack.c.l.b16 %v5844
    %v6044 = vunpack.c.l.b16 %v5845
    %v6045 = vunpack.c.l.b16 %v5846
    %v6046 = vunpack.c.l.b16 %v5847
    %v6047 = vunpack.c.l.b16 %v5848
    %v6048 = vunpack.c.l.b16 %v5849
    %v6049 = vunpack.c.l.b16 %v5850
    %v6050 = vunpack.c.l.b16 %v5851
    %v6051 = vunpack.c.l.b16 %v5852
    %v6052 = vunpack.c.l.b16 %v5853
    %v6053 = vunpack.c.l.b16 %v5854
    %v6054 = vunpack.c.l.b16 %v5855
    %v6055 = vunpack.c.l.b16 %v5856
    %v6056 = vunpack.c.l.b16 %v5857
    %v6057 = vunpack.c.l.b16 %v5858
    %v6058 = vunpack.c.l.b16 %v5859
    %v6059 = vunpack.c.l.b16 %v5860
    %v6060 = vunpack.c.l.b16 %v5861
    %v6061 = vunpack.c.l.b16 %v5862
    %v6062 = vunpack.c.l.b16 %v5863
    %v6063 = vunpack.c.l.b16 %v5864
    %v6064 = vunpack.c.l.b16 %v5865
    %v6065 = vunpack.c.l.b16 %v5866
    %v6066 = vunpack.c.l.b16 %v5867
    %v6067 = vunpack.c.l.b16 %v5868
    %v6068 = vunpack.c.l.b16 %v5869
    %v6069 = vunpack.c.l.b16 %v5870
    %v6070 = vunpack.c.l.b16 %v5871
    %v6071 = vunpack.c.l.b16 %v5872
    %v6072 = vunpack.c.l.b16 %v5873
    %v6073 = vunpack.c.l.b16 %v5874
    %v6074 = vunpack.c.l.b16 %v5875
    %v6075 = vunpack.c.l.b16 %v5876
    %v6076 = vunpack.c.l.b16 %v5877
    %v6077 = vunpack.c.l.b16 %v5878
    %v6078 = vunpack.c.l.b16 %v5879
    %v6079 = vunpack.c.l.b16 %v5880
    %v6080 = vunpack.c.l.b16 %v5881
    %v6081 = vunpack.c.l.b16 %v5882
    %v6082 = vunpack.c.l.b16 %v5883
    %v6083 = vunpack.c.l.b16 %v5884
    %v6084 = vunpack.c.l.b16 %v5885
    %v6085 = vunpack.c.l.b16 %v5886
    %v6086 = vunpack.c.l.b16 %v5887
    %v6087 = vunpack.c.l.b16 %v5888
    %v6088 = vunpack.c.l.b16 %v5889
    %v6089 = vunpack.c.l.b16 %v5890
    %v6090 = vunpack.c.l.b16 %v5891
    %v6091 = vunpack.c.l.b16 %v5892
    %v6092 = vunpack.c.l.b16 %v5893
    %v6093 = vunpack.c.l.b16 %v5894
    %v6094 = vunpack.c.l.b16 %v5895
    %v6095 = vunpack.c.l.b16 %v5896
    %v6096 = vunpack.c.l.b16 %v5897
    %v6097 = vpack.c.b16 %v6002, %v6001
    %v6098 = vpack.c.b16 %v6004, %v6003
    %v6099 = vpack.c.b16 %v6006, %v6005
    %v6100 = vpack.c.b16 %v6008, %v6007
    %v6101 = vpack.c.b16 %v6010, %v6009
    %v6102 = vpack.c.b16 %v6012, %v6011
    %v6103 = vpack.c.b16 %v6014, %v6013
    %v6104 = vpack.c.b16 %v6016, %v6015
    %v6105 = vpack.c.b16 %v6018, %v6017
    %v6106 = vpack.c.b16 %v6020, %v6019
    %v6107 = vpack.c.b16 %v6022, %v6021
    %v6108 = vpack.c.b16 %v6024, %v6023
    %v6109 = vpack.c.b16 %v6026, %v6025
    %v6110 = vpack.c.b16 %v6028, %v6027
    %v6111 = vpack.c.b16 %v6030, %v6029
    %v6112 = vpack.c.b16 %v6032, %v6031
    %v6113 = vpack.c.b16 %v6034, %v6033
    %v6114 = vpack.c.b16 %v6036, %v6035
    %v6115 = vpack.c.b16 %v6038, %v6037
    %v6116 = vpack.c.b16 %v6040, %v6039
    %v6117 = vpack.c.b16 %v6042, %v6041
    %v6118 = vpack.c.b16 %v6044, %v6043
    %v6119 = vpack.c.b16 %v6046, %v6045
    %v6120 = vpack.c.b16 %v6048, %v6047
    %v6121 = vpack.c.b16 %v6050, %v6049
    %v6122 = vpack.c.b16 %v6052, %v6051
    %v6123 = vpack.c.b16 %v6054, %v6053
    %v6124 = vpack.c.b16 %v6056, %v6055
    %v6125 = vpack.c.b16 %v6058, %v6057
    %v6126 = vpack.c.b16 %v6060, %v6059
    %v6127 = vpack.c.b16 %v6062, %v6061
    %v6128 = vpack.c.b16 %v6064, %v6063
    %v6129 = vpack.c.b16 %v6066, %v6065
    %v6130 = vpack.c.b16 %v6068, %v6067
    %v6131 = vpack.c.b16 %v6070, %v6069
    %v6132 = vpack.c.b16 %v6072, %v6071
    %v6133 = vpack.c.b16 %v6074, %v6073
    %v6134 = vpack.c.b16 %v6076, %v6075
    %v6135 = vpack.c.b16 %v6078, %v6077
    %v6136 = vpack.c.b16 %v6080, %v6079
    %v6137 = vpack.c.b16 %v6082, %v6081
    %v6138 = vpack.c.b16 %v6084, %v6083
    %v6139 = vpack.c.b16 %v6086, %v6085
    %v6140 = vpack.c.b16 %v6088, %v6087
    %v6141 = vpack.c.b16 %v6090, %v6089
    %v6142 = vpack.c.b16 %v6092, %v6091
    %v6143 = vpack.c.b16 %v6094, %v6093
    %v6144 = vpack.c.b16 %v6096, %v6095
    %6193 = vmatprep.subr.bf16.mxu0 0
    %6194 = vmatpush1.bf16.msra.mxu0 %v6097
    %6195 = vmatprep.subr.bf16.mxu0 0
    %6196 = vmatpush1.bf16.msra.mxu0 %v6098
    %6197 = vmatprep.subr.bf16.mxu0 0
    %6198 = vmatpush1.bf16.msra.mxu0 %v6099
    %6199 = vmatprep.subr.bf16.mxu0 0
    %6200 = vmatpush1.bf16.msra.mxu0 %v6100
    %6201 = vmatprep.subr.bf16.mxu0 0
    %6202 = vmatpush1.bf16.msra.mxu0 %v6101
    %6203 = vmatprep.subr.bf16.mxu0 0
    %6204 = vmatpush1.bf16.msra.mxu0 %v6102
    %6205 = vmatprep.subr.bf16.mxu0 0
    %6206 = vmatpush1.bf16.msra.mxu0 %v6103
    %6207 = vmatprep.subr.bf16.mxu0 0
    %6208 = vmatpush1.bf16.msra.mxu0 %v6104
    %6209 = vmatprep.subr.bf16.mxu0 0
    %6210 = vmatpush1.bf16.msra.mxu0 %v6105
    %6211 = vmatprep.subr.bf16.mxu0 0
    %6212 = vmatpush1.bf16.msra.mxu0 %v6106
    %6213 = vmatprep.subr.bf16.mxu0 0
    %6214 = vmatpush1.bf16.msra.mxu0 %v6107
    %6215 = vmatprep.subr.bf16.mxu0 0
    %6216 = vmatpush1.bf16.msra.mxu0 %v6108
    %6217 = vmatprep.subr.bf16.mxu0 0
    %6218 = vmatpush1.bf16.msra.mxu0 %v6109
    %6219 = vmatprep.subr.bf16.mxu0 0
    %6220 = vmatpush1.bf16.msra.mxu0 %v6110
    %6221 = vmatprep.subr.bf16.mxu0 0
    %6222 = vmatpush1.bf16.msra.mxu0 %v6111
    %6223 = vmatprep.subr.bf16.mxu0 0
    %6224 = vmatpush1.bf16.msra.mxu0 %v6112
    %6225 = vmatprep.mubr.bf16.mxu0 %v5797
    %6226 = vmatmul.mubr.bf16.gmra.mrb[0].mxu0 %v5796
    %v6227 = vpop.f32.mrb[0].mxu0
    %v6228 = vadd.f32 %v5903, %v6227
    %v6229 = vpop.f32.mrb[0].mxu0
    %v6230 = vpop.f32.mrb[0].mxu0
    %v6231 = vpop.f32.mrb[0].mxu0
    %6232 = vdwg.mxu0
    %6233 = vmatprep.subr.bf16.mxu0 0
    %6234 = vmatpush1.bf16.msra.mxu0 %v6113
    %6235 = vmatprep.subr.bf16.mxu0 0
    %6236 = vmatpush1.bf16.msra.mxu0 %v6114
    %6237 = vmatprep.subr.bf16.mxu0 0
    %6238 = vmatpush1.bf16.msra.mxu0 %v6115
    %6239 = vmatprep.subr.bf16.mxu0 0
    %6240 = vmatpush1.bf16.msra.mxu0 %v6116
    %6241 = vmatprep.subr.bf16.mxu0 0
    %6242 = vmatpush1.bf16.msra.mxu0 %v6117
    %6243 = vmatprep.subr.bf16.mxu0 0
    %6244 = vmatpush1.bf16.msra.mxu0 %v6118
    %6245 = vmatprep.subr.bf16.mxu0 0
    %6246 = vmatpush1.bf16.msra.mxu0 %v6119
    %6247 = vmatprep.subr.bf16.mxu0 0
    %6248 = vmatpush1.bf16.msra.mxu0 %v6120
    %6249 = vmatprep.subr.bf16.mxu0 0
    %6250 = vmatpush1.bf16.msra.mxu0 %v6121
    %6251 = vmatprep.subr.bf16.mxu0 0
    %6252 = vmatpush1.bf16.msra.mxu0 %v6122
    %6253 = vmatprep.subr.bf16.mxu0 0
    %6254 = vmatpush1.bf16.msra.mxu0 %v6123
    %6255 = vmatprep.subr.bf16.mxu0 0
    %6256 = vmatpush1.bf16.msra.mxu0 %v6124
    %6257 = vmatprep.subr.bf16.mxu0 0
    %6258 = vmatpush1.bf16.msra.mxu0 %v6125
    %6259 = vmatprep.subr.bf16.mxu0 0
    %6260 = vmatpush1.bf16.msra.mxu0 %v6126
    %6261 = vmatprep.subr.bf16.mxu0 0
    %6262 = vmatpush1.bf16.msra.mxu0 %v6127
    %6263 = vmatprep.subr.bf16.mxu0 0
    %6264 = vmatpush1.bf16.msra.mxu0 %v6128
    %6265 = vmatprep.mubr.bf16.mxu0 %v5799
    %6266 = vmatmul.mubr.bf16.gmra.mrb[0].mxu0 %v5798
    %v6267 = vpop.f32.mrb[0].mxu0
    %v6268 = vadd.f32 %v6228, %v6267
    %v6269 = vpop.f32.mrb[0].mxu0
    %v6270 = vpop.f32.mrb[0].mxu0
    %v6271 = vpop.f32.mrb[0].mxu0
    %6272 = vdwg.mxu0
    %6273 = vmatprep.subr.bf16.mxu0 0
    %6274 = vmatpush1.bf16.msra.mxu0 %v6129
    %6275 = vmatprep.subr.bf16.mxu0 0
    %6276 = vmatpush1.bf16.msra.mxu0 %v6130
    %6277 = vmatprep.subr.bf16.mxu0 0
    %6278 = vmatpush1.bf16.msra.mxu0 %v6131
    %6279 = vmatprep.subr.bf16.mxu0 0
    %6280 = vmatpush1.bf16.msra.mxu0 %v6132
    %6281 = vmatprep.subr.bf16.mxu0 0
    %6282 = vmatpush1.bf16.msra.mxu0 %v6133
    %6283 = vmatprep.subr.bf16.mxu0 0
    %6284 = vmatpush1.bf16.msra.mxu0 %v6134
    %6285 = vmatprep.subr.bf16.mxu0 0
    %6286 = vmatpush1.bf16.msra.mxu0 %v6135
    %6287 = vmatprep.subr.bf16.mxu0 0
    %6288 = vmatpush1.bf16.msra.mxu0 %v6136
    %6289 = vmatprep.subr.bf16.mxu0 0
    %6290 = vmatpush1.bf16.msra.mxu0 %v6137
    %6291 = vmatprep.subr.bf16.mxu0 0
    %6292 = vmatpush1.bf16.msra.mxu0 %v6138
    %6293 = vmatprep.subr.bf16.mxu0 0
    %6294 = vmatpush1.bf16.msra.mxu0 %v6139
    %6295 = vmatprep.subr.bf16.mxu0 0
    %6296 = vmatpush1.bf16.msra.mxu0 %v6140
    %6297 = vmatprep.subr.bf16.mxu0 0
    %6298 = vmatpush1.bf16.msra.mxu0 %v6141
    %6299 = vmatprep.subr.bf16.mxu0 0
    %6300 = vmatpush1.bf16.msra.mxu0 %v6142
    %6301 = vmatprep.subr.bf16.mxu0 0
    %6302 = vmatpush1.bf16.msra.mxu0 %v6143
    %6303 = vmatprep.subr.bf16.mxu0 0
    %6304 = vmatpush1.bf16.msra.mxu0 %v6144
    %6305 = vmatprep.mubr.bf16.mxu0 %v5801
    %6306 = vmatmul.mubr.bf16.gmra.mrb[0].mxu0 %v5800
    %v6307 = vpop.f32.mrb[0].mxu0
    %v6308 = vadd.f32 %v6268, %v6307
    %v6309 = vpop.f32.mrb[0].mxu0
    %v6310 = vpop.f32.mrb[0].mxu0
    %v6311 = vpop.f32.mrb[0].mxu0
    %6312 = vdwg.mxu0
    %v6313 = vtanh.pop %v6308
    %6315 = vrot.lane.b32.xlu0 %v3257, 8
    %v6316 = vpop.permute.xlu0 %6315
    %6319 = vrot.lane.b32.xlu0 %v3265, 8
    %v6320 = vpop.permute.xlu0 %6319
    %v6322 = vsel %vm257, %v6313, %v6316
    %vm6323 = vcmask 97280
    %v6324 = vsel %vm6323, %v6322, %v6320
    %6325 = vst.msk [vmem:[#allocation25] sm:$0xff] %vm433, %v6324
    // Predicated region
    $region126: #{tpu_custom_call.1} parent=1 // pred_check
      _
    $region127: #{tpu_custom_call.1} parent=1 // pred_check_branch
      %6327 = sbr.rel (0) target = $region129
    $region128: #{tpu_custom_call.1} parent=1 // pred_region
      %s6329 = ssub.s32 128, 128
      %6330 = vsyncadd [#allocation4], %s6329
      %s6332 = sshll.u32 [#allocation25], 4
      %s6333 = int_to_ptr.vmem [resolvable:$true] %s6332
      %6335 = dma.vmem_to_hbm [thread:$0]  %s6333, 128, %s17, [#allocation4]
    $region129: #{tpu_custom_call.1} parent=1 // pred_fallthru
      _
    // Predicated region
    $region130: #{tpu_custom_call.1} parent=1 // pred_check
      _
    $region131: #{tpu_custom_call.1} parent=1 // pred_check_branch
      %6337 = sbr.rel (0) target = $region133
    $region132: #{tpu_custom_call.1} parent=1 // pred_region
      %6338 = dma.done [#allocation4], 128
    $region133: #{tpu_custom_call.1} parent=1 // pred_fallthru
      _
    %6339 = vsyncpa [#allocation3], 1
    %6340 = vsyncpa [#allocation6], 1
    %6341 = vsyncpa [#allocation9], 1
    %6342 = vsyncpa [#allocation12], 1
    %6343 = vsyncpa [#allocation15], 1
    %6344 = vsyncpa [#allocation18], 1
    %6345 = vsyncpa [#allocation21], 1
    %6346 = vsyncpa [#allocation24], 1
    %6347 = vsyncpa [#allocation4], 1

</llo_original>
